<compile_context>
chip_gen: v5e
topology: v5e:2x2
jax: 0.10.0
libtpu: 0.0.40
codegen_flags: <defaults>
</compile_context>

<pallas_src>
import jax
import jax.numpy as jnp
from jax import lax
from jax.experimental import pallas as pl
from jax.experimental.pallas import tpu as pltpu

SQRT2 = 1.4142135623730951
SQRT_2_OVER_PI = 0.7978845608028654

# Row indices into the stacked per-layer vector-parameter slab (lvecs).
_R_LN1G, _R_LN1B, _R_LN2G, _R_LN2B = 0, 1, 2, 3
_R_BQ, _R_BK, _R_BV, _R_BO, _R_B2 = 4, 5, 6, 7, 8
_LVEC_ROWS = 16


# --------------------------------------------------------------------------
# in-kernel helpers (traced inside the Pallas body)
# --------------------------------------------------------------------------

def _gelu_tanh(y):                    # SigLIP MLP: gelu_pytorch_tanh
    return 0.5 * y * (1.0 + jnp.tanh(SQRT_2_OVER_PI * (y + 0.044715 * y * y * y)))


def _gelu_erf(y):                     # nn.GELU() default (erf form)
    return 0.5 * y * (1.0 + lax.erf(y * (1.0 / SQRT2)))


def _layernorm(x, g, b, eps):         # statistics in f32
    mu = jnp.mean(x, axis=-1, keepdims=True)
    var = jnp.mean(jnp.square(x - mu), axis=-1, keepdims=True)
    return (x - mu) * lax.rsqrt(var + eps) * g + b


# --------------------------------------------------------------------------
# Single fused kernel: patch-embed -> L encoder layers -> hash head
# --------------------------------------------------------------------------

def _fused_kernel_factory(B, S, D, num_heads, n_bits, max_bit, ln_eps, nested_eps):
    Hh = num_heads
    hd = D // num_heads
    scale = hd ** -0.5
    M = B * S

    def kernel(patches_ref, pw_ref, pb_ref, pos_ref,
               lvecs_ref, lb1_ref, wqkv_ref, wo_ref, w1_ref, w2_ref,
               postg_ref, postb_ref, hw1_ref, hb1_ref, hw2_ref, hb2_ref,
               lng_ref, lnb_ref, mask_ref,
               out_ref, x_ref):
        layer = pl.program_id(0)
        n_layers = pl.num_programs(0)

        # ---- layer 0 only: patch embedding (im2col matmul) + pos embed ----
        @pl.when(layer == 0)
        def _():
            y = jnp.dot(patches_ref[...], pw_ref[...],
                        preferred_element_type=jnp.float32) + pb_ref[...]
            y = y.reshape(B, S, D) + pos_ref[...][None]
            x_ref[...] = y.reshape(M, D)

        # ---- encoder layer `layer` (pre-LN), batch folded into M ----------
        x = x_ref[...]                                            # (M, D) f32
        vec = lvecs_ref[...]                                      # (16, D) f32

        h = _layernorm(x, vec[_R_LN1G:_R_LN1G + 1], vec[_R_LN1B:_R_LN1B + 1],
                       ln_eps)
        qkv = jnp.dot(h.astype(jnp.bfloat16), wqkv_ref[...],
                      preferred_element_type=jnp.float32)         # (M, 3D)
        q = (qkv[:, :D] + vec[_R_BQ:_R_BQ + 1]) * scale           # scale folded
        k = qkv[:, D:2 * D] + vec[_R_BK:_R_BK + 1]
        v = qkv[:, 2 * D:] + vec[_R_BV:_R_BV + 1]

        # Masked-head attention: per-head lane masks -> one batched score
        # matmul over all (batch, head) pairs, one softmax pass, one batched
        # PV matmul, masked sum to reassemble (no lane-unaligned slices).
        lane = lax.broadcasted_iota(jnp.int32, (Hh, 1, D), 2)
        hidx = lax.broadcasted_iota(jnp.int32, (Hh, 1, D), 0)
        hmask = jnp.logical_and(lane >= hidx * hd,
                                lane < (hidx + 1) * hd).astype(jnp.float32)

        qh = (q.reshape(B, 1, S, D) * hmask[None]).reshape(B * Hh, S, D)
        qh = qh.astype(jnp.bfloat16)
        kh = jnp.broadcast_to(k.reshape(B, 1, S, D),
                              (B, Hh, S, D)).reshape(B * Hh, S, D).astype(jnp.bfloat16)
        vh = jnp.broadcast_to(v.reshape(B, 1, S, D),
                              (B, Hh, S, D)).reshape(B * Hh, S, D).astype(jnp.bfloat16)

        s = jnp.einsum('bqd,bkd->bqk', qh, kh,
                       preferred_element_type=jnp.float32)        # (B*H, S, S)
        mx = jnp.max(s, axis=-1, keepdims=True)
        p = jnp.exp(s - mx)
        inv = pl.reciprocal(jnp.sum(p, axis=-1, keepdims=True), approx=True)
        p = (p * inv).astype(jnp.bfloat16)
        o = jnp.einsum('bqk,bkd->bqd', p, vh,
                       preferred_element_type=jnp.float32)        # (B*H, S, D)
        attn = jnp.sum(o.reshape(B, Hh, S, D) * hmask[None], axis=1)
        attn = attn.reshape(M, D)

        attn = jnp.dot(attn.astype(jnp.bfloat16), wo_ref[...],
                       preferred_element_type=jnp.float32) + vec[_R_BO:_R_BO + 1]
        x = x + attn                                              # residual

        h2 = _layernorm(x, vec[_R_LN2G:_R_LN2G + 1], vec[_R_LN2B:_R_LN2B + 1],
                        ln_eps)
        m1 = jnp.dot(h2.astype(jnp.bfloat16), w1_ref[...],
                     preferred_element_type=jnp.float32) + lb1_ref[...]
        m1 = _gelu_tanh(m1)
        m2 = jnp.dot(m1.astype(jnp.bfloat16), w2_ref[...],
                     preferred_element_type=jnp.float32) + vec[_R_B2:_R_B2 + 1]
        x = x + m2                                                # residual
        x_ref[...] = x

        # ---- last layer only: post-LN -> mean-pool -> hash head -----------
        @pl.when(layer == n_layers - 1)
        def _():
            xh = _layernorm(x, postg_ref[...], postb_ref[...], ln_eps)
            feat = jnp.mean(xh.reshape(B, S, D), axis=1)          # (B, D)

            hh = jnp.dot(feat.astype(jnp.bfloat16), hw1_ref[...],
                         preferred_element_type=jnp.float32) + hb1_ref[...]
            hh = _gelu_erf(hh)                                    # nn.GELU()
            code = jnp.dot(hh.astype(jnp.bfloat16), hw2_ref[...],
                           preferred_element_type=jnp.float32) + hb2_ref[...]

            # Vectorized nested LayerNorm + L2-normalize over all bit widths.
            mask = mask_ref[...]                                  # (n_bits, max_bit)
            cnt = jnp.sum(mask, axis=-1, keepdims=True)           # (n_bits, 1)
            y = code.reshape(B, 1, max_bit) * mask[None]          # (B, n_bits, max_bit)
            mu = jnp.sum(y, axis=-1, keepdims=True) / cnt[None]
            var = jnp.sum(jnp.square(y - mu) * mask[None],
                          axis=-1, keepdims=True) / cnt[None]
            y = ((y - mu) * lax.rsqrt(var + nested_eps)
                 * lng_ref[...][None] + lnb_ref[...][None]) * mask[None]
            nrm2 = jnp.sum(y * y, axis=-1, keepdims=True)
            # F.normalize with exact rsqrt (approx reciprocal only in softmax).
            out_ref[...] = y * lax.rsqrt(jnp.maximum(nrm2, 1e-24))

    return kernel


def fused_forward(patches, params, cfg, B, S):
    D = cfg["hidden_size"]
    I = cfg["intermediate_size"]
    L = cfg["num_layers"]
    Hd = cfg["hash_hidden_dim"]
    bit_list = tuple(sorted(cfg["bit_list"]))
    max_bit = bit_list[-1]
    n_bits = len(bit_list)
    M, K = patches.shape

    kernel = _fused_kernel_factory(B, S, D, cfg["num_heads"], n_bits, max_bit,
                                   cfg["ln_eps"], 1e-5)

    c2 = lambda l: (0, 0)                    # resident across the whole grid
    c3 = lambda l: (0, 0, 0)
    per_layer = lambda l: (l, 0, 0)          # stream layer l's weights

    grid_spec = pltpu.PrefetchScalarGridSpec(
        num_scalar_prefetch=0,
        grid=(L,),
        in_specs=[
            pl.BlockSpec((M, K), c2),                    # patches (bf16)
            pl.BlockSpec((K, D), c2),                    # patch_w
            pl.BlockSpec((1, D), c2),                    # patch_b
            pl.BlockSpec((S, D), c2),                    # pos embed
            pl.BlockSpec((None, _LVEC_ROWS, D), per_layer),  # stacked vec params
            pl.BlockSpec((None, 1, I), per_layer),       # fc1 bias
            pl.BlockSpec((None, D, 3 * D), per_layer),   # wqkv
            pl.BlockSpec((None, D, D), per_layer),       # wo
            pl.BlockSpec((None, D, I), per_layer),       # w1
            pl.BlockSpec((None, I, D), per_layer),       # w2
            pl.BlockSpec((1, D), c2),                    # post_layernorm g
            pl.BlockSpec((1, D), c2),                    # post_layernorm b
            pl.BlockSpec((D, Hd), c2),                   # hash head fc1 w
            pl.BlockSpec((1, Hd), c2),                   # hash head fc1 b
            pl.BlockSpec((Hd, max_bit), c2),             # hash head fc2 w
            pl.BlockSpec((1, max_bit), c2),              # hash head fc2 b
            pl.BlockSpec((n_bits, max_bit), c2),         # nested LN gamma
            pl.BlockSpec((n_bits, max_bit), c2),         # nested LN beta
            pl.BlockSpec((n_bits, max_bit), c2),         # nested bit mask
        ],
        out_specs=pl.BlockSpec((B, n_bits, max_bit), c3),
        scratch_shapes=[pltpu.VMEM((M, D), jnp.float32)],   # resident activation
    )
    return pl.pallas_call(
        kernel,
        out_shape=jax.ShapeDtypeStruct((B, n_bits, max_bit), jnp.float32),
        grid_spec=grid_spec,
        compiler_params=pltpu.CompilerParams(dimension_semantics=("arbitrary",)),
    )(patches, params["patch_w"], params["patch_b"], params["pos"],
      params["lvecs"], params["lb1"], params["wqkv"], params["wo"],
      params["w1"], params["w2"],
      params["post_g"], params["post_b"],
      params["nhl_w1"], params["nhl_b1"], params["nhl_w2"], params["nhl_b2"],
      params["nhl_ln_g"], params["nhl_ln_b"], params["nhl_mask"])


# --------------------------------------------------------------------------
# Deterministic parameter initialization (synthetic; no checkpoint load)
# --------------------------------------------------------------------------

def init_params(key, cfg):
    C, P, D = cfg["channels"], cfg["patch_size"], cfg["hidden_size"]
    S = (cfg["image_size"] // P) ** 2
    I = cfg["intermediate_size"]
    L = cfg["num_layers"]
    Hd = cfg["hash_hidden_dim"]
    bit_list = sorted(cfg["bit_list"])
    max_bit = bit_list[-1]
    n_bits = len(bit_list)

    def lin(k, m, n, scale=0.02):
        kw, kb = jax.random.split(k)
        return (jax.random.normal(kw, (m, n), jnp.float32) * scale,
                jax.random.normal(kb, (n,), jnp.float32) * scale)

    keys = jax.random.split(key, 4 + L)
    pw, pb = lin(keys[0], C * P * P, D)

    wqkv_l, wo_l, w1_l, w2_l, lvecs_l, lb1_l = [], [], [], [], [], []
    for li in range(L):
        lk = jax.random.split(keys[2 + li], 6)
        wq, bq = lin(lk[0], D, D)
        wk, bk = lin(lk[1], D, D)
        wv, bv = lin(lk[2], D, D)
        wo, bo = lin(lk[3], D, D)
        w1, b1 = lin(lk[4], D, I)
        w2, b2 = lin(lk[5], I, D)
        wqkv_l.append(jnp.concatenate([wq, wk, wv], axis=1))
        wo_l.append(wo)
        w1_l.append(w1)
        w2_l.append(w2)
        vec = jnp.zeros((_LVEC_ROWS, D), jnp.float32)
        vec = vec.at[_R_LN1G].set(1.0)          # ln1 gamma
        vec = vec.at[_R_LN2G].set(1.0)          # ln2 gamma (betas stay 0)
        vec = vec.at[_R_BQ].set(bq)
        vec = vec.at[_R_BK].set(bk)
        vec = vec.at[_R_BV].set(bv)
        vec = vec.at[_R_BO].set(bo)
        vec = vec.at[_R_B2].set(b2)
        lvecs_l.append(vec)
        lb1_l.append(b1.reshape(1, I))

    nk = jax.random.split(keys[2 + L], 2)
    hw1, hb1 = lin(nk[0], D, Hd)
    hw2, hb2 = lin(nk[1], Hd, max_bit)

    lane = jnp.arange(max_bit)[None, :]
    bits = jnp.array(bit_list)[:, None]
    nhl_mask = (lane < bits).astype(jnp.float32)        # (n_bits, max_bit)

    return {
        "patch_w": pw.astype(jnp.bfloat16),
        "patch_b": pb.reshape(1, D),
        "pos": jax.random.normal(keys[1], (S, D), jnp.float32) * 0.02,
        "lvecs": jnp.stack(lvecs_l),                     # (L, 16, D) f32
        "lb1": jnp.stack(lb1_l),                         # (L, 1, I)  f32
        "wqkv": jnp.stack(wqkv_l).astype(jnp.bfloat16),  # (L, D, 3D)
        "wo": jnp.stack(wo_l).astype(jnp.bfloat16),      # (L, D, D)
        "w1": jnp.stack(w1_l).astype(jnp.bfloat16),      # (L, D, I)
        "w2": jnp.stack(w2_l).astype(jnp.bfloat16),      # (L, I, D)
        "post_g": jnp.ones((1, D), jnp.float32),
        "post_b": jnp.zeros((1, D), jnp.float32),
        "nhl_w1": hw1.astype(jnp.bfloat16), "nhl_b1": hb1.reshape(1, Hd),
        "nhl_w2": hw2.astype(jnp.bfloat16), "nhl_b2": hb2.reshape(1, max_bit),
        "nhl_ln_g": nhl_mask,                            # gamma=1 inside bit
        "nhl_ln_b": jnp.zeros((n_bits, max_bit), jnp.float32),
        "nhl_mask": nhl_mask,
    }


# --------------------------------------------------------------------------
# Forward pass: im2col in the wrapper, everything else in ONE Pallas kernel
# --------------------------------------------------------------------------

def deep_hashing_forward(params, images, cfg):
    B, C, H, W = images.shape
    P = cfg["patch_size"]
    Hp, Wp = H // P, W // P
    S = Hp * Wp
    # Patch embedding (Conv2d k=stride=P, valid) == im2col + matmul; patches
    # pre-cast to bf16 to halve the HBM hop into the kernel.
    patches = images.reshape(B, C, Hp, P, Wp, P)
    patches = patches.transpose(0, 2, 4, 1, 3, 5).reshape(B * S, C * P * P)
    patches = patches.astype(jnp.bfloat16)
    # TODO(synk): pretrained SigLIP checkpoint loading (AutoModel.from_pretrained)
    # has no Pallas equivalent; synthetic weights are used instead.
    out = fused_forward(patches, params, cfg, B, S)      # (B, n_bits, max_bit)
    bit_list = sorted(cfg["bit_list"])
    return tuple(out[:, i, :bit] for i, bit in enumerate(bit_list))


# --------------------------------------------------------------------------

if __name__ == "__main__":
    # Small synthetic config consistent with the module structure but
    # lane-dense (last dims multiples of 128) so the kernel exercises the
    # same code paths as SigLIP-base sizes.
    cfg = {
        "channels": 3,
        "image_size": 64,
        "patch_size": 16,          # -> 4x4 = 16 patches (seq len 16)
        "hidden_size": 128,
        "num_heads": 4,            # head_dim = 32
        "intermediate_size": 256,
        "num_layers": 2,
        "ln_eps": 1e-6,
        "hash_hidden_dim": 128,
        "bit_list": [8, 16, 32, 48, 64, 128],
    }
    key = jax.random.PRNGKey(0)
    k_params, k_img = jax.random.split(key)
    params = init_params(k_params, cfg)
    images = jax.random.normal(
        k_img, (2, cfg["channels"], cfg["image_size"], cfg["image_size"]),
        jnp.float32)

    fwd = jax.jit(lambda p, im: deep_hashing_forward(p, im, cfg))
    outputs = jax.block_until_ready(fwd(params, images))

    # Sanity: tuple of per-bit L2-normalized codes, shapes (B, bit), unit norm.
    bit_list = sorted(cfg["bit_list"])
    assert len(outputs) == len(bit_list)
    for bit, o in zip(bit_list, outputs):
        assert o.shape == (2, bit)
        assert bool(jnp.all(jnp.isfinite(o)))
        nrm = jnp.sqrt(jnp.sum(o * o, axis=1))
        assert bool(jnp.all(jnp.abs(nrm - 1.0) < 1e-2))
    print("KERNEL_OK")
</pallas_src>

<mosaic_0001>
module attributes {stable_mosaic.version = 11 : i64} {
  func.func @kernel(%arg0: i32, %arg1: memref<32x768xbf16, #tpu.memory_space<vmem>>, %arg2: memref<768x128xbf16, #tpu.memory_space<vmem>>, %arg3: memref<1x128xf32, #tpu.memory_space<vmem>>, %arg4: memref<16x128xf32, #tpu.memory_space<vmem>>, %arg5: memref<1x16x128xf32, #tpu.memory_space<vmem>>, %arg6: memref<1x1x256xf32, #tpu.memory_space<vmem>>, %arg7: memref<1x128x384xbf16, #tpu.memory_space<vmem>>, %arg8: memref<1x128x128xbf16, #tpu.memory_space<vmem>>, %arg9: memref<1x128x256xbf16, #tpu.memory_space<vmem>>, %arg10: memref<1x256x128xbf16, #tpu.memory_space<vmem>>, %arg11: memref<1x128xf32, #tpu.memory_space<vmem>>, %arg12: memref<1x128xf32, #tpu.memory_space<vmem>>, %arg13: memref<128x128xbf16, #tpu.memory_space<vmem>>, %arg14: memref<1x128xf32, #tpu.memory_space<vmem>>, %arg15: memref<128x128xbf16, #tpu.memory_space<vmem>>, %arg16: memref<1x128xf32, #tpu.memory_space<vmem>>, %arg17: memref<6x128xf32, #tpu.memory_space<vmem>>, %arg18: memref<6x128xf32, #tpu.memory_space<vmem>>, %arg19: memref<6x128xf32, #tpu.memory_space<vmem>>, %arg20: memref<2x6x128xf32, #tpu.memory_space<vmem>>, %arg21: memref<32x128xf32, #tpu.memory_space<vmem>>) attributes {dimension_semantics = [#tpu.dimension_semantics<arbitrary>], iteration_bounds = array<i64: 2>, scalar_prefetch = 0 : i64, scratch_operands = 1 : i64, tpu.core_type = #tpu.core_type<tc>, window_params = [{pipeline_mode = #tpu.pipeline_mode<synchronous>, transform_indices = @transform_0, window_bounds = array<i64: 32, 768>}, {pipeline_mode = #tpu.pipeline_mode<synchronous>, transform_indices = @transform_1, window_bounds = array<i64: 768, 128>}, {pipeline_mode = #tpu.pipeline_mode<synchronous>, transform_indices = @transform_2, window_bounds = array<i64: 1, 128>}, {pipeline_mode = #tpu.pipeline_mode<synchronous>, transform_indices = @transform_3, window_bounds = array<i64: 16, 128>}, {transform_indices = @transform_4, window_bounds = array<i64: 1, 16, 128>}, {transform_indices = @transform_5, window_bounds = array<i64: 1, 1, 256>}, {transform_indices = @transform_6, window_bounds = array<i64: 1, 128, 384>}, {transform_indices = @transform_7, window_bounds = array<i64: 1, 128, 128>}, {transform_indices = @transform_8, window_bounds = array<i64: 1, 128, 256>}, {transform_indices = @transform_9, window_bounds = array<i64: 1, 256, 128>}, {pipeline_mode = #tpu.pipeline_mode<synchronous>, transform_indices = @transform_10, window_bounds = array<i64: 1, 128>}, {pipeline_mode = #tpu.pipeline_mode<synchronous>, transform_indices = @transform_11, window_bounds = array<i64: 1, 128>}, {pipeline_mode = #tpu.pipeline_mode<synchronous>, transform_indices = @transform_12, window_bounds = array<i64: 128, 128>}, {pipeline_mode = #tpu.pipeline_mode<synchronous>, transform_indices = @transform_13, window_bounds = array<i64: 1, 128>}, {pipeline_mode = #tpu.pipeline_mode<synchronous>, transform_indices = @transform_14, window_bounds = array<i64: 128, 128>}, {pipeline_mode = #tpu.pipeline_mode<synchronous>, transform_indices = @transform_15, window_bounds = array<i64: 1, 128>}, {pipeline_mode = #tpu.pipeline_mode<synchronous>, transform_indices = @transform_16, window_bounds = array<i64: 6, 128>}, {pipeline_mode = #tpu.pipeline_mode<synchronous>, transform_indices = @transform_17, window_bounds = array<i64: 6, 128>}, {pipeline_mode = #tpu.pipeline_mode<synchronous>, transform_indices = @transform_18, window_bounds = array<i64: 6, 128>}, {pipeline_mode = #tpu.pipeline_mode<synchronous>, transform_indices = @transform_19, window_bounds = array<i64: 2, 6, 128>}]} {
    %c0_i32 = arith.constant 0 : i32
    %0 = arith.cmpi eq, %arg0, %c0_i32 : i32
    %1 = arith.extui %0 : i1 to i32
    %c0_i32_0 = arith.constant 0 : i32
    %2 = arith.cmpi ne, %1, %c0_i32_0 : i32
    scf.if %2 {
      %c0_48 = arith.constant 0 : index
      %c0_49 = arith.constant 0 : index
      %162 = vector.load %arg1[%c0_48, %c0_49] : memref<32x768xbf16, #tpu.memory_space<vmem>>, vector<32x768xbf16>
      %c0_50 = arith.constant 0 : index
      %c0_51 = arith.constant 0 : index
      %163 = vector.load %arg2[%c0_50, %c0_51] : memref<768x128xbf16, #tpu.memory_space<vmem>>, vector<768x128xbf16>
      %cst_52 = arith.constant dense<0.000000e+00> : vector<32x128xf32>
      %164 = tpu.matmul %162, %163, %cst_52 {dimension_numbers = #tpu.dot_dimension_numbers<[1], [0], [0], [1], [0, 0, 1, 1], [], []>} : vector<32x768xbf16>, vector<768x128xbf16>, vector<32x128xf32> -> vector<32x128xf32>
      %c0_53 = arith.constant 0 : index
      %c0_54 = arith.constant 0 : index
      %165 = vector.load %arg3[%c0_53, %c0_54] : memref<1x128xf32, #tpu.memory_space<vmem>>, vector<1x128xf32>
      %166 = vector.broadcast %165 : vector<1x128xf32> to vector<32x128xf32>
      %167 = arith.addf %164, %166 : vector<32x128xf32>
      %168 = vector.shape_cast %167 : vector<32x128xf32> to vector<2x16x128xf32>
      %c0_55 = arith.constant 0 : index
      %c0_56 = arith.constant 0 : index
      %169 = vector.load %arg4[%c0_55, %c0_56] : memref<16x128xf32, #tpu.memory_space<vmem>>, vector<16x128xf32>
      %170 = vector.shape_cast %169 : vector<16x128xf32> to vector<1x16x128xf32>
      %171 = vector.broadcast %170 : vector<1x16x128xf32> to vector<2x16x128xf32>
      %172 = arith.addf %168, %171 : vector<2x16x128xf32>
      %173 = vector.shape_cast %172 : vector<2x16x128xf32> to vector<32x128xf32>
      %c0_57 = arith.constant 0 : index
      %c0_58 = arith.constant 0 : index
      %174 = vector.load %arg21[%c0_57, %c0_58] : memref<32x128xf32, #tpu.memory_space<vmem>>, vector<32x128xf32>
      tpu.vector_store %arg21[%c0_57, %c0_58], %173 {strides = array<i32>} : memref<32x128xf32, #tpu.memory_space<vmem>>, vector<32x128xf32>,
    } else {
    }
    %c0 = arith.constant 0 : index
    %c0_1 = arith.constant 0 : index
    %3 = vector.load %arg21[%c0, %c0_1] : memref<32x128xf32, #tpu.memory_space<vmem>>, vector<32x128xf32>
    %c0_2 = arith.constant 0 : index
    %c0_3 = arith.constant 0 : index
    %c0_4 = arith.constant 0 : index
    %4 = vector.load %arg5[%c0_2, %c0_3, %c0_4] : memref<1x16x128xf32, #tpu.memory_space<vmem>>, vector<1x16x128xf32>
    %5 = vector.shape_cast %4 : vector<1x16x128xf32> to vector<16x128xf32>
    %6 = vector.extract_strided_slice %5 {offsets = [0, 0], sizes = [1, 128], strides = [1, 1]} : vector<16x128xf32> to vector<1x128xf32>
    %7 = vector.extract_strided_slice %5 {offsets = [1, 0], sizes = [1, 128], strides = [1, 1]} : vector<16x128xf32> to vector<1x128xf32>
    %cst = arith.constant dense<0.000000e+00> : vector<32xf32>
    %8 = vector.multi_reduction <add>, %3, %cst [1] : vector<32x128xf32> to vector<32xf32>
    %9 = vector.shape_cast %8 : vector<32xf32> to vector<32x1xf32>
    %cst_5 = arith.constant 1.280000e+02 : f32
    %10 = vector.broadcast %cst_5 : f32 to vector<32x1xf32>
    %11 = arith.divf %9, %10 : vector<32x1xf32>
    %12 = vector.broadcast %11 : vector<32x1xf32> to vector<32x128xf32>
    %13 = arith.subf %3, %12 : vector<32x128xf32>
    %14 = arith.mulf %13, %13 : vector<32x128xf32>
    %cst_6 = arith.constant dense<0.000000e+00> : vector<32xf32>
    %15 = vector.multi_reduction <add>, %14, %cst_6 [1] : vector<32x128xf32> to vector<32xf32>
    %16 = vector.shape_cast %15 : vector<32xf32> to vector<32x1xf32>
    %cst_7 = arith.constant 1.280000e+02 : f32
    %17 = vector.broadcast %cst_7 : f32 to vector<32x1xf32>
    %18 = arith.divf %16, %17 : vector<32x1xf32>
    %19 = vector.broadcast %11 : vector<32x1xf32> to vector<32x128xf32>
    %20 = arith.subf %3, %19 : vector<32x128xf32>
    %cst_8 = arith.constant 9.99999997E-7 : f32
    %21 = vector.broadcast %cst_8 : f32 to vector<32x1xf32>
    %22 = arith.addf %18, %21 : vector<32x1xf32>
    %23 = math.rsqrt %22 : vector<32x1xf32>
    %24 = vector.broadcast %23 : vector<32x1xf32> to vector<32x128xf32>
    %25 = arith.mulf %20, %24 : vector<32x128xf32>
    %26 = vector.broadcast %6 : vector<1x128xf32> to vector<32x128xf32>
    %27 = arith.mulf %25, %26 : vector<32x128xf32>
    %28 = vector.broadcast %7 : vector<1x128xf32> to vector<32x128xf32>
    %29 = arith.addf %27, %28 : vector<32x128xf32>
    %30 = arith.truncf %29 : vector<32x128xf32> to vector<32x128xbf16>
    %c0_9 = arith.constant 0 : index
    %c0_10 = arith.constant 0 : index
    %c0_11 = arith.constant 0 : index
    %31 = vector.load %arg7[%c0_9, %c0_10, %c0_11] : memref<1x128x384xbf16, #tpu.memory_space<vmem>>, vector<1x128x384xbf16>
    %32 = vector.shape_cast %31 : vector<1x128x384xbf16> to vector<128x384xbf16>
    %cst_12 = arith.constant dense<0.000000e+00> : vector<32x384xf32>
    %33 = tpu.matmul %30, %32, %cst_12 {dimension_numbers = #tpu.dot_dimension_numbers<[1], [0], [0], [1], [0, 0, 1, 1], [], []>} : vector<32x128xbf16>, vector<128x384xbf16>, vector<32x384xf32> -> vector<32x384xf32>
    %34 = vector.extract_strided_slice %33 {offsets = [0, 0], sizes = [32, 128], strides = [1, 1]} : vector<32x384xf32> to vector<32x128xf32>
    %35 = vector.extract_strided_slice %5 {offsets = [4, 0], sizes = [1, 128], strides = [1, 1]} : vector<16x128xf32> to vector<1x128xf32>
    %36 = vector.broadcast %35 : vector<1x128xf32> to vector<32x128xf32>
    %37 = arith.addf %34, %36 : vector<32x128xf32>
    %cst_13 = arith.constant 0.176776692 : f32
    %38 = vector.broadcast %cst_13 : f32 to vector<32x128xf32>
    %39 = arith.mulf %37, %38 : vector<32x128xf32>
    %40 = vector.extract_strided_slice %33 {offsets = [0, 128], sizes = [32, 128], strides = [1, 1]} : vector<32x384xf32> to vector<32x128xf32>
    %41 = vector.extract_strided_slice %5 {offsets = [5, 0], sizes = [1, 128], strides = [1, 1]} : vector<16x128xf32> to vector<1x128xf32>
    %42 = vector.broadcast %41 : vector<1x128xf32> to vector<32x128xf32>
    %43 = arith.addf %40, %42 : vector<32x128xf32>
    %44 = vector.extract_strided_slice %33 {offsets = [0, 256], sizes = [32, 128], strides = [1, 1]} : vector<32x384xf32> to vector<32x128xf32>
    %45 = vector.extract_strided_slice %5 {offsets = [6, 0], sizes = [1, 128], strides = [1, 1]} : vector<16x128xf32> to vector<1x128xf32>
    %46 = vector.broadcast %45 : vector<1x128xf32> to vector<32x128xf32>
    %47 = arith.addf %44, %46 : vector<32x128xf32>
    %48 = tpu.iota {dimensions = array<i32: 2>} : vector<4x1x128xi32>
    %49 = tpu.iota {dimensions = array<i32: 0>} : vector<4x1x128xi32>
    %c32_i32 = arith.constant 32 : i32
    %50 = vector.broadcast %c32_i32 : i32 to vector<4x1x128xi32>
    %51 = arith.muli %49, %50 : vector<4x1x128xi32>
    %52 = arith.cmpi sge, %48, %51 : vector<4x1x128xi32>
    %c1_i32 = arith.constant 1 : i32
    %53 = vector.broadcast %c1_i32 : i32 to vector<4x1x128xi32>
    %54 = arith.addi %49, %53 : vector<4x1x128xi32>
    %c32_i32_14 = arith.constant 32 : i32
    %55 = vector.broadcast %c32_i32_14 : i32 to vector<4x1x128xi32>
    %56 = arith.muli %54, %55 : vector<4x1x128xi32>
    %57 = arith.cmpi slt, %48, %56 : vector<4x1x128xi32>
    %58 = arith.andi %52, %57 : vector<4x1x128xi1>
    %59 = arith.extui %58 : vector<4x1x128xi1> to vector<4x1x128xi32>
    %60 = arith.sitofp %59 : vector<4x1x128xi32> to vector<4x1x128xf32>
    %61 = vector.shape_cast %39 : vector<32x128xf32> to vector<2x1x16x128xf32>
    %62 = vector.shape_cast %60 : vector<4x1x128xf32> to vector<1x4x1x128xf32>
    %63 = vector.broadcast %61 : vector<2x1x16x128xf32> to vector<2x4x16x128xf32>
    %64 = vector.broadcast %62 : vector<1x4x1x128xf32> to vector<2x4x16x128xf32>
    %65 = arith.mulf %63, %64 : vector<2x4x16x128xf32>
    %66 = vector.shape_cast %65 : vector<2x4x16x128xf32> to vector<8x16x128xf32>
    %67 = arith.truncf %66 : vector<8x16x128xf32> to vector<8x16x128xbf16>
    %68 = vector.shape_cast %43 : vector<32x128xf32> to vector<2x1x16x128xf32>
    %69 = vector.shape_cast %68 : vector<2x1x16x128xf32> to vector<2x1x16x128xf32>
    %70 = vector.broadcast %69 : vector<2x1x16x128xf32> to vector<2x4x16x128xf32>
    %71 = vector.shape_cast %70 : vector<2x4x16x128xf32> to vector<8x16x128xf32>
    %72 = arith.truncf %71 : vector<8x16x128xf32> to vector<8x16x128xbf16>
    %73 = vector.shape_cast %47 : vector<32x128xf32> to vector<2x1x16x128xf32>
    %74 = vector.shape_cast %73 : vector<2x1x16x128xf32> to vector<2x1x16x128xf32>
    %75 = vector.broadcast %74 : vector<2x1x16x128xf32> to vector<2x4x16x128xf32>
    %76 = vector.shape_cast %75 : vector<2x4x16x128xf32> to vector<8x16x128xf32>
    %77 = arith.truncf %76 : vector<8x16x128xf32> to vector<8x16x128xbf16>
    "tpu.trace_start"() <{level = 10 : i32, message = "bqd,bkd->bqk"}> : () -> ()
    %cst_15 = arith.constant dense<0.000000e+00> : vector<8x16x16xf32>
    %78 = tpu.matmul %67, %72, %cst_15 {dimension_numbers = #tpu.dot_dimension_numbers<[2], [2], [1], [1], [0, 0, 0, 1, 1, 1], [0], [0]>} : vector<8x16x128xbf16>, vector<8x16x128xbf16>, vector<8x16x16xf32> -> vector<8x16x16xf32>
    "tpu.trace_stop"() : () -> ()
    %cst_16 = arith.constant dense<0xFF800000> : vector<8x16xf32>
    %79 = vector.multi_reduction <maximumf>, %78, %cst_16 [2] : vector<8x16x16xf32> to vector<8x16xf32>
    %80 = vector.shape_cast %79 : vector<8x16xf32> to vector<8x16x1xf32>
    %81 = vector.broadcast %80 : vector<8x16x1xf32> to vector<8x16x16xf32>
    %82 = arith.subf %78, %81 : vector<8x16x16xf32>
    %83 = math.exp %82 : vector<8x16x16xf32>
    %cst_17 = arith.constant dense<0.000000e+00> : vector<8x16xf32>
    %84 = vector.multi_reduction <add>, %83, %cst_17 [2] : vector<8x16x16xf32> to vector<8x16xf32>
    %85 = vector.shape_cast %84 : vector<8x16xf32> to vector<8x16x1xf32>
    %86 = tpu.reciprocal %85 {approx = true} : vector<8x16x1xf32> -> vector<8x16x1xf32>
    %87 = vector.broadcast %86 : vector<8x16x1xf32> to vector<8x16x16xf32>
    %88 = arith.mulf %83, %87 : vector<8x16x16xf32>
    %89 = arith.truncf %88 : vector<8x16x16xf32> to vector<8x16x16xbf16>
    "tpu.trace_start"() <{level = 10 : i32, message = "bqk,bkd->bqd"}> : () -> ()
    %cst_18 = arith.constant dense<0.000000e+00> : vector<8x16x128xf32>
    %90 = tpu.matmul %89, %77, %cst_18 {dimension_numbers = #tpu.dot_dimension_numbers<[2], [1], [1], [2], [0, 0, 0, 1, 1, 2], [0], [0]>} : vector<8x16x16xbf16>, vector<8x16x128xbf16>, vector<8x16x128xf32> -> vector<8x16x128xf32>
    "tpu.trace_stop"() : () -> ()
    %91 = vector.shape_cast %90 : vector<8x16x128xf32> to vector<2x4x16x128xf32>
    %92 = vector.shape_cast %60 : vector<4x1x128xf32> to vector<1x4x1x128xf32>
    %93 = vector.broadcast %92 : vector<1x4x1x128xf32> to vector<2x4x16x128xf32>
    %94 = arith.mulf %91, %93 : vector<2x4x16x128xf32>
    %cst_19 = arith.constant dense<0.000000e+00> : vector<2x16x128xf32>
    %95 = vector.multi_reduction <add>, %94, %cst_19 [1] : vector<2x4x16x128xf32> to vector<2x16x128xf32>
    %96 = vector.shape_cast %95 : vector<2x16x128xf32> to vector<32x128xf32>
    %97 = arith.truncf %96 : vector<32x128xf32> to vector<32x128xbf16>
    %c0_20 = arith.constant 0 : index
    %c0_21 = arith.constant 0 : index
    %c0_22 = arith.constant 0 : index
    %98 = vector.load %arg8[%c0_20, %c0_21, %c0_22] : memref<1x128x128xbf16, #tpu.memory_space<vmem>>, vector<1x128x128xbf16>
    %99 = vector.shape_cast %98 : vector<1x128x128xbf16> to vector<128x128xbf16>
    %cst_23 = arith.constant dense<0.000000e+00> : vector<32x128xf32>
    %100 = tpu.matmul %97, %99, %cst_23 {dimension_numbers = #tpu.dot_dimension_numbers<[1], [0], [0], [1], [0, 0, 1, 1], [], []>} : vector<32x128xbf16>, vector<128x128xbf16>, vector<32x128xf32> -> vector<32x128xf32>
    %101 = vector.extract_strided_slice %5 {offsets = [7, 0], sizes = [1, 128], strides = [1, 1]} : vector<16x128xf32> to vector<1x128xf32>
    %102 = vector.broadcast %101 : vector<1x128xf32> to vector<32x128xf32>
    %103 = arith.addf %100, %102 : vector<32x128xf32>
    %104 = arith.addf %3, %103 : vector<32x128xf32>
    %105 = vector.extract_strided_slice %5 {offsets = [2, 0], sizes = [1, 128], strides = [1, 1]} : vector<16x128xf32> to vector<1x128xf32>
    %106 = vector.extract_strided_slice %5 {offsets = [3, 0], sizes = [1, 128], strides = [1, 1]} : vector<16x128xf32> to vector<1x128xf32>
    %cst_24 = arith.constant dense<0.000000e+00> : vector<32xf32>
    %107 = vector.multi_reduction <add>, %104, %cst_24 [1] : vector<32x128xf32> to vector<32xf32>
    %108 = vector.shape_cast %107 : vector<32xf32> to vector<32x1xf32>
    %cst_25 = arith.constant 1.280000e+02 : f32
    %109 = vector.broadcast %cst_25 : f32 to vector<32x1xf32>
    %110 = arith.divf %108, %109 : vector<32x1xf32>
    %111 = vector.broadcast %110 : vector<32x1xf32> to vector<32x128xf32>
    %112 = arith.subf %104, %111 : vector<32x128xf32>
    %113 = arith.mulf %112, %112 : vector<32x128xf32>
    %cst_26 = arith.constant dense<0.000000e+00> : vector<32xf32>
    %114 = vector.multi_reduction <add>, %113, %cst_26 [1] : vector<32x128xf32> to vector<32xf32>
    %115 = vector.shape_cast %114 : vector<32xf32> to vector<32x1xf32>
    %cst_27 = arith.constant 1.280000e+02 : f32
    %116 = vector.broadcast %cst_27 : f32 to vector<32x1xf32>
    %117 = arith.divf %115, %116 : vector<32x1xf32>
    %118 = vector.broadcast %110 : vector<32x1xf32> to vector<32x128xf32>
    %119 = arith.subf %104, %118 : vector<32x128xf32>
    %cst_28 = arith.constant 9.99999997E-7 : f32
    %120 = vector.broadcast %cst_28 : f32 to vector<32x1xf32>
    %121 = arith.addf %117, %120 : vector<32x1xf32>
    %122 = math.rsqrt %121 : vector<32x1xf32>
    %123 = vector.broadcast %122 : vector<32x1xf32> to vector<32x128xf32>
    %124 = arith.mulf %119, %123 : vector<32x128xf32>
    %125 = vector.broadcast %105 : vector<1x128xf32> to vector<32x128xf32>
    %126 = arith.mulf %124, %125 : vector<32x128xf32>
    %127 = vector.broadcast %106 : vector<1x128xf32> to vector<32x128xf32>
    %128 = arith.addf %126, %127 : vector<32x128xf32>
    %129 = arith.truncf %128 : vector<32x128xf32> to vector<32x128xbf16>
    %c0_29 = arith.constant 0 : index
    %c0_30 = arith.constant 0 : index
    %c0_31 = arith.constant 0 : index
    %130 = vector.load %arg9[%c0_29, %c0_30, %c0_31] : memref<1x128x256xbf16, #tpu.memory_space<vmem>>, vector<1x128x256xbf16>
    %131 = vector.shape_cast %130 : vector<1x128x256xbf16> to vector<128x256xbf16>
    %cst_32 = arith.constant dense<0.000000e+00> : vector<32x256xf32>
    %132 = tpu.matmul %129, %131, %cst_32 {dimension_numbers = #tpu.dot_dimension_numbers<[1], [0], [0], [1], [0, 0, 1, 1], [], []>} : vector<32x128xbf16>, vector<128x256xbf16>, vector<32x256xf32> -> vector<32x256xf32>
    %c0_33 = arith.constant 0 : index
    %c0_34 = arith.constant 0 : index
    %c0_35 = arith.constant 0 : index
    %133 = vector.load %arg6[%c0_33, %c0_34, %c0_35] : memref<1x1x256xf32, #tpu.memory_space<vmem>>, vector<1x1x256xf32>
    %134 = vector.shape_cast %133 : vector<1x1x256xf32> to vector<1x256xf32>
    %135 = vector.broadcast %134 : vector<1x256xf32> to vector<32x256xf32>
    %136 = arith.addf %132, %135 : vector<32x256xf32>
    %cst_36 = arith.constant 5.000000e-01 : f32
    %137 = vector.broadcast %cst_36 : f32 to vector<32x256xf32>
    %138 = arith.mulf %137, %136 : vector<32x256xf32>
    %cst_37 = arith.constant 4.471500e-02 : f32
    %139 = vector.broadcast %cst_37 : f32 to vector<32x256xf32>
    %140 = arith.mulf %139, %136 : vector<32x256xf32>
    %141 = arith.mulf %140, %136 : vector<32x256xf32>
    %142 = arith.mulf %141, %136 : vector<32x256xf32>
    %143 = arith.addf %136, %142 : vector<32x256xf32>
    %cst_38 = arith.constant 0.797884583 : f32
    %144 = vector.broadcast %cst_38 : f32 to vector<32x256xf32>
    %145 = arith.mulf %144, %143 : vector<32x256xf32>
    %146 = math.tanh %145 : vector<32x256xf32>
    %cst_39 = arith.constant 1.000000e+00 : f32
    %147 = vector.broadcast %cst_39 : f32 to vector<32x256xf32>
    %148 = arith.addf %147, %146 : vector<32x256xf32>
    %149 = arith.mulf %138, %148 : vector<32x256xf32>
    %150 = arith.truncf %149 : vector<32x256xf32> to vector<32x256xbf16>
    %c0_40 = arith.constant 0 : index
    %c0_41 = arith.constant 0 : index
    %c0_42 = arith.constant 0 : index
    %151 = vector.load %arg10[%c0_40, %c0_41, %c0_42] : memref<1x256x128xbf16, #tpu.memory_space<vmem>>, vector<1x256x128xbf16>
    %152 = vector.shape_cast %151 : vector<1x256x128xbf16> to vector<256x128xbf16>
    %cst_43 = arith.constant dense<0.000000e+00> : vector<32x128xf32>
    %153 = tpu.matmul %150, %152, %cst_43 {dimension_numbers = #tpu.dot_dimension_numbers<[1], [0], [0], [1], [0, 0, 1, 1], [], []>} : vector<32x256xbf16>, vector<256x128xbf16>, vector<32x128xf32> -> vector<32x128xf32>
    %154 = vector.extract_strided_slice %5 {offsets = [8, 0], sizes = [1, 128], strides = [1, 1]} : vector<16x128xf32> to vector<1x128xf32>
    %155 = vector.broadcast %154 : vector<1x128xf32> to vector<32x128xf32>
    %156 = arith.addf %153, %155 : vector<32x128xf32>
    %157 = arith.addf %104, %156 : vector<32x128xf32>
    %c0_44 = arith.constant 0 : index
    %c0_45 = arith.constant 0 : index
    %158 = vector.load %arg21[%c0_44, %c0_45] : memref<32x128xf32, #tpu.memory_space<vmem>>, vector<32x128xf32>
    tpu.vector_store %arg21[%c0_44, %c0_45], %157 {strides = array<i32>} : memref<32x128xf32, #tpu.memory_space<vmem>>, vector<32x128xf32>,
    %c1_i32_46 = arith.constant 1 : i32
    %159 = arith.cmpi eq, %arg0, %c1_i32_46 : i32
    %160 = arith.extui %159 : i1 to i32
    %c0_i32_47 = arith.constant 0 : i32
    %161 = arith.cmpi ne, %160, %c0_i32_47 : i32
    scf.if %161 {
      %c0_48 = arith.constant 0 : index
      %c0_49 = arith.constant 0 : index
      %162 = vector.load %arg11[%c0_48, %c0_49] : memref<1x128xf32, #tpu.memory_space<vmem>>, vector<1x128xf32>
      %c0_50 = arith.constant 0 : index
      %c0_51 = arith.constant 0 : index
      %163 = vector.load %arg12[%c0_50, %c0_51] : memref<1x128xf32, #tpu.memory_space<vmem>>, vector<1x128xf32>
      %cst_52 = arith.constant dense<0.000000e+00> : vector<32xf32>
      %164 = vector.multi_reduction <add>, %157, %cst_52 [1] : vector<32x128xf32> to vector<32xf32>
      %165 = vector.shape_cast %164 : vector<32xf32> to vector<32x1xf32>
      %cst_53 = arith.constant 1.280000e+02 : f32
      %166 = vector.broadcast %cst_53 : f32 to vector<32x1xf32>
      %167 = arith.divf %165, %166 : vector<32x1xf32>
      %168 = vector.broadcast %167 : vector<32x1xf32> to vector<32x128xf32>
      %169 = arith.subf %157, %168 : vector<32x128xf32>
      %170 = arith.mulf %169, %169 : vector<32x128xf32>
      %cst_54 = arith.constant dense<0.000000e+00> : vector<32xf32>
      %171 = vector.multi_reduction <add>, %170, %cst_54 [1] : vector<32x128xf32> to vector<32xf32>
      %172 = vector.shape_cast %171 : vector<32xf32> to vector<32x1xf32>
      %cst_55 = arith.constant 1.280000e+02 : f32
      %173 = vector.broadcast %cst_55 : f32 to vector<32x1xf32>
      %174 = arith.divf %172, %173 : vector<32x1xf32>
      %175 = vector.broadcast %167 : vector<32x1xf32> to vector<32x128xf32>
      %176 = arith.subf %157, %175 : vector<32x128xf32>
      %cst_56 = arith.constant 9.99999997E-7 : f32
      %177 = vector.broadcast %cst_56 : f32 to vector<32x1xf32>
      %178 = arith.addf %174, %177 : vector<32x1xf32>
      %179 = math.rsqrt %178 : vector<32x1xf32>
      %180 = vector.broadcast %179 : vector<32x1xf32> to vector<32x128xf32>
      %181 = arith.mulf %176, %180 : vector<32x128xf32>
      %182 = vector.broadcast %162 : vector<1x128xf32> to vector<32x128xf32>
      %183 = arith.mulf %181, %182 : vector<32x128xf32>
      %184 = vector.broadcast %163 : vector<1x128xf32> to vector<32x128xf32>
      %185 = arith.addf %183, %184 : vector<32x128xf32>
      %186 = vector.shape_cast %185 : vector<32x128xf32> to vector<2x16x128xf32>
      %cst_57 = arith.constant dense<0.000000e+00> : vector<2x128xf32>
      %187 = vector.multi_reduction <add>, %186, %cst_57 [1] : vector<2x16x128xf32> to vector<2x128xf32>
      %cst_58 = arith.constant 1.600000e+01 : f32
      %188 = vector.broadcast %cst_58 : f32 to vector<2x128xf32>
      %189 = arith.divf %187, %188 : vector<2x128xf32>
      %190 = arith.truncf %189 : vector<2x128xf32> to vector<2x128xbf16>
      %c0_59 = arith.constant 0 : index
      %c0_60 = arith.constant 0 : index
      %191 = vector.load %arg13[%c0_59, %c0_60] : memref<128x128xbf16, #tpu.memory_space<vmem>>, vector<128x128xbf16>
      %cst_61 = arith.constant dense<0.000000e+00> : vector<2x128xf32>
      %192 = tpu.matmul %190, %191, %cst_61 {dimension_numbers = #tpu.dot_dimension_numbers<[1], [0], [0], [1], [0, 0, 1, 1], [], []>} : vector<2x128xbf16>, vector<128x128xbf16>, vector<2x128xf32> -> vector<2x128xf32>
      %c0_62 = arith.constant 0 : index
      %c0_63 = arith.constant 0 : index
      %193 = vector.load %arg14[%c0_62, %c0_63] : memref<1x128xf32, #tpu.memory_space<vmem>>, vector<1x128xf32>
      %194 = vector.broadcast %193 : vector<1x128xf32> to vector<2x128xf32>
      %195 = arith.addf %192, %194 : vector<2x128xf32>
      %cst_64 = arith.constant 5.000000e-01 : f32
      %196 = vector.broadcast %cst_64 : f32 to vector<2x128xf32>
      %197 = arith.mulf %196, %195 : vector<2x128xf32>
      %cst_65 = arith.constant 0.707106769 : f32
      %198 = vector.broadcast %cst_65 : f32 to vector<2x128xf32>
      %199 = arith.mulf %195, %198 : vector<2x128xf32>
      %200 = math.erf %199 : vector<2x128xf32>
      %cst_66 = arith.constant 1.000000e+00 : f32
      %201 = vector.broadcast %cst_66 : f32 to vector<2x128xf32>
      %202 = arith.addf %201, %200 : vector<2x128xf32>
      %203 = arith.mulf %197, %202 : vector<2x128xf32>
      %204 = arith.truncf %203 : vector<2x128xf32> to vector<2x128xbf16>
      %c0_67 = arith.constant 0 : index
      %c0_68 = arith.constant 0 : index
      %205 = vector.load %arg15[%c0_67, %c0_68] : memref<128x128xbf16, #tpu.memory_space<vmem>>, vector<128x128xbf16>
      %cst_69 = arith.constant dense<0.000000e+00> : vector<2x128xf32>
      %206 = tpu.matmul %204, %205, %cst_69 {dimension_numbers = #tpu.dot_dimension_numbers<[1], [0], [0], [1], [0, 0, 1, 1], [], []>} : vector<2x128xbf16>, vector<128x128xbf16>, vector<2x128xf32> -> vector<2x128xf32>
      %c0_70 = arith.constant 0 : index
      %c0_71 = arith.constant 0 : index
      %207 = vector.load %arg16[%c0_70, %c0_71] : memref<1x128xf32, #tpu.memory_space<vmem>>, vector<1x128xf32>
      %208 = vector.broadcast %207 : vector<1x128xf32> to vector<2x128xf32>
      %209 = arith.addf %206, %208 : vector<2x128xf32>
      %c0_72 = arith.constant 0 : index
      %c0_73 = arith.constant 0 : index
      %210 = vector.load %arg19[%c0_72, %c0_73] : memref<6x128xf32, #tpu.memory_space<vmem>>, vector<6x128xf32>
      %cst_74 = arith.constant dense<0.000000e+00> : vector<6xf32>
      %211 = vector.multi_reduction <add>, %210, %cst_74 [1] : vector<6x128xf32> to vector<6xf32>
      %212 = vector.shape_cast %211 : vector<6xf32> to vector<6x1xf32>
      %213 = vector.shape_cast %209 : vector<2x128xf32> to vector<2x1x128xf32>
      %214 = vector.shape_cast %210 : vector<6x128xf32> to vector<1x6x128xf32>
      %215 = vector.broadcast %213 : vector<2x1x128xf32> to vector<2x6x128xf32>
      %216 = vector.broadcast %214 : vector<1x6x128xf32> to vector<2x6x128xf32>
      %217 = arith.mulf %215, %216 : vector<2x6x128xf32>
      %cst_75 = arith.constant dense<0.000000e+00> : vector<2x6xf32>
      %218 = vector.multi_reduction <add>, %217, %cst_75 [2] : vector<2x6x128xf32> to vector<2x6xf32>
      %219 = vector.shape_cast %218 : vector<2x6xf32> to vector<2x6x1xf32>
      %220 = vector.shape_cast %212 : vector<6x1xf32> to vector<1x6x1xf32>
      %221 = vector.broadcast %220 : vector<1x6x1xf32> to vector<2x6x1xf32>
      %222 = arith.divf %219, %221 : vector<2x6x1xf32>
      %223 = vector.broadcast %222 : vector<2x6x1xf32> to vector<2x6x128xf32>
      %224 = arith.subf %217, %223 : vector<2x6x128xf32>
      %225 = arith.mulf %224, %224 : vector<2x6x128xf32>
      %226 = vector.shape_cast %210 : vector<6x128xf32> to vector<1x6x128xf32>
      %227 = vector.broadcast %226 : vector<1x6x128xf32> to vector<2x6x128xf32>
      %228 = arith.mulf %225, %227 : vector<2x6x128xf32>
      %cst_76 = arith.constant dense<0.000000e+00> : vector<2x6xf32>
      %229 = vector.multi_reduction <add>, %228, %cst_76 [2] : vector<2x6x128xf32> to vector<2x6xf32>
      %230 = vector.shape_cast %229 : vector<2x6xf32> to vector<2x6x1xf32>
      %231 = vector.shape_cast %212 : vector<6x1xf32> to vector<1x6x1xf32>
      %232 = vector.broadcast %231 : vector<1x6x1xf32> to vector<2x6x1xf32>
      %233 = arith.divf %230, %232 : vector<2x6x1xf32>
      %234 = vector.broadcast %222 : vector<2x6x1xf32> to vector<2x6x128xf32>
      %235 = arith.subf %217, %234 : vector<2x6x128xf32>
      %cst_77 = arith.constant 9.99999974E-6 : f32
      %236 = vector.broadcast %cst_77 : f32 to vector<2x6x1xf32>
      %237 = arith.addf %233, %236 : vector<2x6x1xf32>
      %238 = math.rsqrt %237 : vector<2x6x1xf32>
      %239 = vector.broadcast %238 : vector<2x6x1xf32> to vector<2x6x128xf32>
      %240 = arith.mulf %235, %239 : vector<2x6x128xf32>
      %c0_78 = arith.constant 0 : index
      %c0_79 = arith.constant 0 : index
      %241 = vector.load %arg17[%c0_78, %c0_79] : memref<6x128xf32, #tpu.memory_space<vmem>>, vector<6x128xf32>
      %242 = vector.shape_cast %241 : vector<6x128xf32> to vector<1x6x128xf32>
      %243 = vector.broadcast %242 : vector<1x6x128xf32> to vector<2x6x128xf32>
      %244 = arith.mulf %240, %243 : vector<2x6x128xf32>
      %c0_80 = arith.constant 0 : index
      %c0_81 = arith.constant 0 : index
      %245 = vector.load %arg18[%c0_80, %c0_81] : memref<6x128xf32, #tpu.memory_space<vmem>>, vector<6x128xf32>
      %246 = vector.shape_cast %245 : vector<6x128xf32> to vector<1x6x128xf32>
      %247 = vector.broadcast %246 : vector<1x6x128xf32> to vector<2x6x128xf32>
      %248 = arith.addf %244, %247 : vector<2x6x128xf32>
      %249 = vector.shape_cast %210 : vector<6x128xf32> to vector<1x6x128xf32>
      %250 = vector.broadcast %249 : vector<1x6x128xf32> to vector<2x6x128xf32>
      %251 = arith.mulf %248, %250 : vector<2x6x128xf32>
      %252 = arith.mulf %251, %251 : vector<2x6x128xf32>
      %cst_82 = arith.constant dense<0.000000e+00> : vector<2x6xf32>
      %253 = vector.multi_reduction <add>, %252, %cst_82 [2] : vector<2x6x128xf32> to vector<2x6xf32>
      %254 = vector.shape_cast %253 : vector<2x6xf32> to vector<2x6x1xf32>
      %cst_83 = arith.constant 1.000000e-24 : f32
      %255 = vector.broadcast %cst_83 : f32 to vector<2x6x1xf32>
      %256 = arith.maximumf %254, %255 : vector<2x6x1xf32>
      %257 = math.rsqrt %256 : vector<2x6x1xf32>
      %258 = vector.broadcast %257 : vector<2x6x1xf32> to vector<2x6x128xf32>
      %259 = arith.mulf %251, %258 : vector<2x6x128xf32>
      %c0_84 = arith.constant 0 : index
      %c0_85 = arith.constant 0 : index
      %c0_86 = arith.constant 0 : index
      %260 = vector.load %arg20[%c0_84, %c0_85, %c0_86] : memref<2x6x128xf32, #tpu.memory_space<vmem>>, vector<2x6x128xf32>
      tpu.vector_store %arg20[%c0_84, %c0_85, %c0_86], %259 {strides = array<i32>} : memref<2x6x128xf32, #tpu.memory_space<vmem>>, vector<2x6x128xf32>,
    } else {
    }
    return
  }
  func.func @transform_0(%arg0: i32) -> (i32, i32) {
    %c0_i32 = arith.constant 0 : i32
    %c0_i32_0 = arith.constant 0 : i32
    %c0_i32_1 = arith.constant 0 : i32
    return %c0_i32, %c0_i32_0 : i32, i32
  }
  func.func @transform_1(%arg0: i32) -> (i32, i32) {
    %c0_i32 = arith.constant 0 : i32
    %c0_i32_0 = arith.constant 0 : i32
    %c0_i32_1 = arith.constant 0 : i32
    return %c0_i32, %c0_i32_0 : i32, i32
  }
  func.func @transform_2(%arg0: i32) -> (i32, i32) {
    %c0_i32 = arith.constant 0 : i32
    %c0_i32_0 = arith.constant 0 : i32
    %c0_i32_1 = arith.constant 0 : i32
    return %c0_i32, %c0_i32_0 : i32, i32
  }
  func.func @transform_3(%arg0: i32) -> (i32, i32) {
    %c0_i32 = arith.constant 0 : i32
    %c0_i32_0 = arith.constant 0 : i32
    %c0_i32_1 = arith.constant 0 : i32
    return %c0_i32, %c0_i32_0 : i32, i32
  }
  func.func @transform_4(%arg0: i32) -> (i32, i32, i32) {
    %c0_i32 = arith.constant 0 : i32
    %c0_i32_0 = arith.constant 0 : i32
    %c0_i32_1 = arith.constant 0 : i32
    return %arg0, %c0_i32, %c0_i32_0 : i32, i32, i32
  }
  func.func @transform_5(%arg0: i32) -> (i32, i32, i32) {
    %c0_i32 = arith.constant 0 : i32
    %c0_i32_0 = arith.constant 0 : i32
    %c0_i32_1 = arith.constant 0 : i32
    return %arg0, %c0_i32, %c0_i32_0 : i32, i32, i32
  }
  func.func @transform_6(%arg0: i32) -> (i32, i32, i32) {
    %c0_i32 = arith.constant 0 : i32
    %c0_i32_0 = arith.constant 0 : i32
    %c0_i32_1 = arith.constant 0 : i32
    return %arg0, %c0_i32, %c0_i32_0 : i32, i32, i32
  }
  func.func @transform_7(%arg0: i32) -> (i32, i32, i32) {
    %c0_i32 = arith.constant 0 : i32
    %c0_i32_0 = arith.constant 0 : i32
    %c0_i32_1 = arith.constant 0 : i32
    return %arg0, %c0_i32, %c0_i32_0 : i32, i32, i32
  }
  func.func @transform_8(%arg0: i32) -> (i32, i32, i32) {
    %c0_i32 = arith.constant 0 : i32
    %c0_i32_0 = arith.constant 0 : i32
    %c0_i32_1 = arith.constant 0 : i32
    return %arg0, %c0_i32, %c0_i32_0 : i32, i32, i32
  }
  func.func @transform_9(%arg0: i32) -> (i32, i32, i32) {
    %c0_i32 = arith.constant 0 : i32
    %c0_i32_0 = arith.constant 0 : i32
    %c0_i32_1 = arith.constant 0 : i32
    return %arg0, %c0_i32, %c0_i32_0 : i32, i32, i32
  }
  func.func @transform_10(%arg0: i32) -> (i32, i32) {
    %c0_i32 = arith.constant 0 : i32
    %c0_i32_0 = arith.constant 0 : i32
    %c0_i32_1 = arith.constant 0 : i32
    return %c0_i32, %c0_i32_0 : i32, i32
  }
  func.func @transform_11(%arg0: i32) -> (i32, i32) {
    %c0_i32 = arith.constant 0 : i32
    %c0_i32_0 = arith.constant 0 : i32
    %c0_i32_1 = arith.constant 0 : i32
    return %c0_i32, %c0_i32_0 : i32, i32
  }
  func.func @transform_12(%arg0: i32) -> (i32, i32) {
    %c0_i32 = arith.constant 0 : i32
    %c0_i32_0 = arith.constant 0 : i32
    %c0_i32_1 = arith.constant 0 : i32
    return %c0_i32, %c0_i32_0 : i32, i32
  }
  func.func @transform_13(%arg0: i32) -> (i32, i32) {
    %c0_i32 = arith.constant 0 : i32
    %c0_i32_0 = arith.constant 0 : i32
    %c0_i32_1 = arith.constant 0 : i32
    return %c0_i32, %c0_i32_0 : i32, i32
  }
  func.func @transform_14(%arg0: i32) -> (i32, i32) {
    %c0_i32 = arith.constant 0 : i32
    %c0_i32_0 = arith.constant 0 : i32
    %c0_i32_1 = arith.constant 0 : i32
    return %c0_i32, %c0_i32_0 : i32, i32
  }
  func.func @transform_15(%arg0: i32) -> (i32, i32) {
    %c0_i32 = arith.constant 0 : i32
    %c0_i32_0 = arith.constant 0 : i32
    %c0_i32_1 = arith.constant 0 : i32
    return %c0_i32, %c0_i32_0 : i32, i32
  }
  func.func @transform_16(%arg0: i32) -> (i32, i32) {
    %c0_i32 = arith.constant 0 : i32
    %c0_i32_0 = arith.constant 0 : i32
    %c0_i32_1 = arith.constant 0 : i32
    return %c0_i32, %c0_i32_0 : i32, i32
  }
  func.func @transform_17(%arg0: i32) -> (i32, i32) {
    %c0_i32 = arith.constant 0 : i32
    %c0_i32_0 = arith.constant 0 : i32
    %c0_i32_1 = arith.constant 0 : i32
    return %c0_i32, %c0_i32_0 : i32, i32
  }
  func.func @transform_18(%arg0: i32) -> (i32, i32) {
    %c0_i32 = arith.constant 0 : i32
    %c0_i32_0 = arith.constant 0 : i32
    %c0_i32_1 = arith.constant 0 : i32
    return %c0_i32, %c0_i32_0 : i32, i32
  }
  func.func @transform_19(%arg0: i32) -> (i32, i32, i32) {
    %c0_i32 = arith.constant 0 : i32
    %c0_i32_0 = arith.constant 0 : i32
    %c0_i32_1 = arith.constant 0 : i32
    %c0_i32_2 = arith.constant 0 : i32
    return %c0_i32, %c0_i32_0, %c0_i32_1 : i32, i32, i32
  }
}

</mosaic_0001>

<llo_original>
// kernel: _lambda_.1
$region0: #{_lambda_.1}
  #allocation0 [shape = 'u32[]', space=smem, size = 0x4, offset = 0x4, fixed_abs, tag = 'smem constant byte address 0x4 - core index']
  #allocation1 [shape = 'u32[72,128]{1,0:T(1,128)}', space=vmem, size = 0x9000, scoped, tag = 'internal scratch']
  #allocation2 [shape = 'f32[32,128]{1,0:T(8,128)}', space=vmem, size = 0x4000, scoped, tag = 'scratch operand']
  %s0 = inlined_call_operand.vmem [shape: bf16[32,768], index: 0, kind: input, shape index: {}]
  %s1 = inlined_call_operand.vmem [shape: bf16[768,128], index: 1, kind: input, shape index: {}]
  %s2 = inlined_call_operand.vmem [shape: f32[1,128], index: 2, kind: input, shape index: {}]
  %s3 = inlined_call_operand.vmem [shape: f32[16,128], index: 3, kind: input, shape index: {}]
  %s4 = inlined_call_operand.vmem [shape: f32[2,16,128], index: 4, kind: input, shape index: {}]
  %s5 = inlined_call_operand.vmem [shape: f32[2,1,256], index: 5, kind: input, shape index: {}]
  %s6 = inlined_call_operand.vmem [shape: bf16[2,128,384], index: 6, kind: input, shape index: {}]
  %s7 = inlined_call_operand.vmem [shape: bf16[2,128,128], index: 7, kind: input, shape index: {}]
  %s8 = inlined_call_operand.vmem [shape: bf16[2,128,256], index: 8, kind: input, shape index: {}]
  %s9 = inlined_call_operand.vmem [shape: bf16[2,256,128], index: 9, kind: input, shape index: {}]
  %s10 = inlined_call_operand.vmem [shape: f32[1,128], index: 10, kind: input, shape index: {}]
  %s11 = inlined_call_operand.vmem [shape: f32[1,128], index: 11, kind: input, shape index: {}]
  %s12 = inlined_call_operand.vmem [shape: bf16[128,128], index: 12, kind: input, shape index: {}]
  %s13 = inlined_call_operand.vmem [shape: f32[1,128], index: 13, kind: input, shape index: {}]
  %s14 = inlined_call_operand.vmem [shape: bf16[128,128], index: 14, kind: input, shape index: {}]
  %s15 = inlined_call_operand.vmem [shape: f32[1,128], index: 15, kind: input, shape index: {}]
  %s16 = inlined_call_operand.vmem [shape: f32[6,128], index: 16, kind: input, shape index: {}]
  %s17 = inlined_call_operand.vmem [shape: f32[6,128], index: 17, kind: input, shape index: {}]
  %s18 = inlined_call_operand.vmem [shape: f32[6,128], index: 18, kind: input, shape index: {}]
  %s19 = inlined_call_operand.vmem [shape: f32[2,6,128], index: 19, kind: output, shape index: {}]
  %s20 = sld [smem:[#allocation0]]
  $region117: #{_lambda_.1} parent=0
    _
  %s22 = ssub.s32 1, %s20
  %s23 = scalar_select 0, %s22, %s20
  loop: start=0, step=1, limit=4
  $region2: #{_lambda_.1} parent=0 // loop_pre_header
    _
  $region3: #{_lambda_.1} parent=0 // loop_header
    %s25 = sphi 0, %s29
    %p26 = scmp.ge.s32.totalorder %s25, 4
    %s33 = sphi 0, %s33
    %s35 = sphi 0, %s33
    %s36 = sphi 0, %s35
    %s50 = sphi 0, %s36
    %s54 = sphi 0, %s54
    %s56 = sphi 0, %s54
    %s57 = sphi 0, %s56
    %s71 = sphi 0, %s57
    %s75 = sphi 0, %s75
    %s77 = sphi 0, %s75
    %s78 = sphi 0, %s77
    %s92 = sphi 0, %s78
    %s96 = sphi 0, %s96
    %s98 = sphi 0, %s96
    %s99 = sphi 0, %s98
    %s113 = sphi 0, %s99
    %s119 = sphi 0, %s121
    %s122 = sphi 0, %s119
    %s123 = sphi 0, %s122
    %s139 = sphi 0, %s123
    %s145 = sphi 0, %s147
    %s148 = sphi 0, %s145
    %s149 = sphi 0, %s148
    %s165 = sphi 0, %s149
    %s171 = sphi 0, %s173
    %s174 = sphi 0, %s171
    %s175 = sphi 0, %s174
    %s191 = sphi 0, %s175
    %s197 = sphi 0, %s199
    %s200 = sphi 0, %s197
    %s201 = sphi 0, %s200
    %s217 = sphi 0, %s201
    %s223 = sphi 0, %s225
    %s226 = sphi 0, %s223
    %s227 = sphi 0, %s226
    %s243 = sphi 0, %s227
    %s249 = sphi 0, %s251
    %s252 = sphi 0, %s249
    %s253 = sphi 0, %s252
    %s269 = sphi 0, %s253
    %s273 = sphi 0, %s273
    %s275 = sphi 0, %s273
    %s276 = sphi 0, %s275
    %s290 = sphi 0, %s276
    %s294 = sphi 0, %s294
    %s296 = sphi 0, %s294
    %s297 = sphi 0, %s296
    %s311 = sphi 0, %s297
    %s315 = sphi 0, %s315
    %s317 = sphi 0, %s315
    %s318 = sphi 0, %s317
    %s332 = sphi 0, %s318
    %s336 = sphi 0, %s336
    %s338 = sphi 0, %s336
    %s339 = sphi 0, %s338
    %s353 = sphi 0, %s339
    %s357 = sphi 0, %s357
    %s359 = sphi 0, %s357
    %s360 = sphi 0, %s359
    %s374 = sphi 0, %s360
    %s378 = sphi 0, %s378
    %s380 = sphi 0, %s378
    %s381 = sphi 0, %s380
    %s395 = sphi 0, %s381
    %s399 = sphi 0, %s399
    %s401 = sphi 0, %s399
    %s402 = sphi 0, %s401
    %s416 = sphi 0, %s402
    %s420 = sphi 0, %s420
    %s422 = sphi 0, %s420
    %s423 = sphi 0, %s422
    %s437 = sphi 0, %s423
    %s441 = sphi 0, %s441
    %s443 = sphi 0, %s441
    %s444 = sphi 0, %s443
    %s458 = sphi 0, %s444
    %s462 = sphi 0, %s462
    %s464 = sphi 0, %s462
    %s465 = sphi 0, %s464
    %s479 = sphi 0, %s465
  $region4: #{_lambda_.1} parent=0 // loop_header_branch
    %28 = sbr.rel (%p26) target = $region8
  $region5: #{_lambda_.1} parent=0 // loop_body
    %s30 = ssub.s32 %s25, 1
    %s31 = ssub.s32 %s25, 2
    %s32 = sadd.s32 %s25, 1
    %s34 = sadd.s32 %s33, 1
    %p37 = scmp.eq.s32.totalorder %s25, 1
    %p38 = scmp.ne.s32.totalorder %s33, %s35
    %p39 = scmp.eq.s32.totalorder %s25, 0
    %p40 = por %p38, %p39
    %p41 = scmp.ne.s32.totalorder %s33, %s35
    %p42 = scmp.eq.s32.totalorder %s30, 1
    %p43 = por %p41, %p42
    %p44 = scmp.ne.s32.totalorder %s35, %s36
    %p45 = scmp.eq.s32.totalorder %s30, 0
    %p46 = por %p44, %p45
    %p47 = scmp.ne.s32.totalorder %s35, %s36
    %p48 = scmp.eq.s32.totalorder %s31, 1
    %p49 = por %p47, %p48
    %p51 = scmp.ne.s32.totalorder %s36, %s50
    %p52 = scmp.eq.s32.totalorder %s31, 0
    %p53 = por %p51, %p52
    %s55 = sadd.s32 %s54, 1
    %p58 = scmp.eq.s32.totalorder %s25, 1
    %p59 = scmp.ne.s32.totalorder %s54, %s56
    %p60 = scmp.eq.s32.totalorder %s25, 0
    %p61 = por %p59, %p60
    %p62 = scmp.ne.s32.totalorder %s54, %s56
    %p63 = scmp.eq.s32.totalorder %s30, 1
    %p64 = por %p62, %p63
    %p65 = scmp.ne.s32.totalorder %s56, %s57
    %p66 = scmp.eq.s32.totalorder %s30, 0
    %p67 = por %p65, %p66
    %p68 = scmp.ne.s32.totalorder %s56, %s57
    %p69 = scmp.eq.s32.totalorder %s31, 1
    %p70 = por %p68, %p69
    %p72 = scmp.ne.s32.totalorder %s57, %s71
    %p73 = scmp.eq.s32.totalorder %s31, 0
    %p74 = por %p72, %p73
    %s76 = sadd.s32 %s75, 1
    %p79 = scmp.eq.s32.totalorder %s25, 1
    %p80 = scmp.ne.s32.totalorder %s75, %s77
    %p81 = scmp.eq.s32.totalorder %s25, 0
    %p82 = por %p80, %p81
    %p83 = scmp.ne.s32.totalorder %s75, %s77
    %p84 = scmp.eq.s32.totalorder %s30, 1
    %p85 = por %p83, %p84
    %p86 = scmp.ne.s32.totalorder %s77, %s78
    %p87 = scmp.eq.s32.totalorder %s30, 0
    %p88 = por %p86, %p87
    %p89 = scmp.ne.s32.totalorder %s77, %s78
    %p90 = scmp.eq.s32.totalorder %s31, 1
    %p91 = por %p89, %p90
    %p93 = scmp.ne.s32.totalorder %s78, %s92
    %p94 = scmp.eq.s32.totalorder %s31, 0
    %p95 = por %p93, %p94
    %s97 = sadd.s32 %s96, 1
    %p100 = scmp.eq.s32.totalorder %s25, 1
    %p101 = scmp.ne.s32.totalorder %s96, %s98
    %p102 = scmp.eq.s32.totalorder %s25, 0
    %p103 = por %p101, %p102
    %p104 = scmp.ne.s32.totalorder %s96, %s98
    %p105 = scmp.eq.s32.totalorder %s30, 1
    %p106 = por %p104, %p105
    %p107 = scmp.ne.s32.totalorder %s98, %s99
    %p108 = scmp.eq.s32.totalorder %s30, 0
    %p109 = por %p107, %p108
    %p110 = scmp.ne.s32.totalorder %s98, %s99
    %p111 = scmp.eq.s32.totalorder %s31, 1
    %p112 = por %p110, %p111
    %p114 = scmp.ne.s32.totalorder %s99, %s113
    %p115 = scmp.eq.s32.totalorder %s31, 0
    %p116 = por %p114, %p115
    %s117 = ssub.s32 %s25, %s32
    %p118 = scmp.eq.s32.totalorder %s117, 0
    %s120 = sadd.s32 %s119, 1
    %s121 = scalar_select %p118, %s119, %s120
    %p124 = pneg %p118
    %p125 = scmp.eq.s32.totalorder %s25, 1
    %p126 = por %p124, %p125
    %p127 = scmp.ne.s32.totalorder %s119, %s122
    %p128 = scmp.eq.s32.totalorder %s25, 0
    %p129 = por %p127, %p128
    %p130 = scmp.ne.s32.totalorder %s119, %s122
    %p131 = scmp.eq.s32.totalorder %s30, 1
    %p132 = por %p130, %p131
    %p133 = scmp.ne.s32.totalorder %s122, %s123
    %p134 = scmp.eq.s32.totalorder %s30, 0
    %p135 = por %p133, %p134
    %p136 = scmp.ne.s32.totalorder %s122, %s123
    %p137 = scmp.eq.s32.totalorder %s31, 1
    %p138 = por %p136, %p137
    %p140 = scmp.ne.s32.totalorder %s123, %s139
    %p141 = scmp.eq.s32.totalorder %s31, 0
    %p142 = por %p140, %p141
    %s143 = ssub.s32 %s25, %s32
    %p144 = scmp.eq.s32.totalorder %s143, 0
    %s146 = sadd.s32 %s145, 1
    %s147 = scalar_select %p144, %s145, %s146
    %p150 = pneg %p144
    %p151 = scmp.eq.s32.totalorder %s25, 1
    %p152 = por %p150, %p151
    %p153 = scmp.ne.s32.totalorder %s145, %s148
    %p154 = scmp.eq.s32.totalorder %s25, 0
    %p155 = por %p153, %p154
    %p156 = scmp.ne.s32.totalorder %s145, %s148
    %p157 = scmp.eq.s32.totalorder %s30, 1
    %p158 = por %p156, %p157
    %p159 = scmp.ne.s32.totalorder %s148, %s149
    %p160 = scmp.eq.s32.totalorder %s30, 0
    %p161 = por %p159, %p160
    %p162 = scmp.ne.s32.totalorder %s148, %s149
    %p163 = scmp.eq.s32.totalorder %s31, 1
    %p164 = por %p162, %p163
    %p166 = scmp.ne.s32.totalorder %s149, %s165
    %p167 = scmp.eq.s32.totalorder %s31, 0
    %p168 = por %p166, %p167
    %s169 = ssub.s32 %s25, %s32
    %p170 = scmp.eq.s32.totalorder %s169, 0
    %s172 = sadd.s32 %s171, 1
    %s173 = scalar_select %p170, %s171, %s172
    %p176 = pneg %p170
    %p177 = scmp.eq.s32.totalorder %s25, 1
    %p178 = por %p176, %p177
    %p179 = scmp.ne.s32.totalorder %s171, %s174
    %p180 = scmp.eq.s32.totalorder %s25, 0
    %p181 = por %p179, %p180
    %p182 = scmp.ne.s32.totalorder %s171, %s174
    %p183 = scmp.eq.s32.totalorder %s30, 1
    %p184 = por %p182, %p183
    %p185 = scmp.ne.s32.totalorder %s174, %s175
    %p186 = scmp.eq.s32.totalorder %s30, 0
    %p187 = por %p185, %p186
    %p188 = scmp.ne.s32.totalorder %s174, %s175
    %p189 = scmp.eq.s32.totalorder %s31, 1
    %p190 = por %p188, %p189
    %p192 = scmp.ne.s32.totalorder %s175, %s191
    %p193 = scmp.eq.s32.totalorder %s31, 0
    %p194 = por %p192, %p193
    %s195 = ssub.s32 %s25, %s32
    %p196 = scmp.eq.s32.totalorder %s195, 0
    %s198 = sadd.s32 %s197, 1
    %s199 = scalar_select %p196, %s197, %s198
    %p202 = pneg %p196
    %p203 = scmp.eq.s32.totalorder %s25, 1
    %p204 = por %p202, %p203
    %p205 = scmp.ne.s32.totalorder %s197, %s200
    %p206 = scmp.eq.s32.totalorder %s25, 0
    %p207 = por %p205, %p206
    %p208 = scmp.ne.s32.totalorder %s197, %s200
    %p209 = scmp.eq.s32.totalorder %s30, 1
    %p210 = por %p208, %p209
    %p211 = scmp.ne.s32.totalorder %s200, %s201
    %p212 = scmp.eq.s32.totalorder %s30, 0
    %p213 = por %p211, %p212
    %p214 = scmp.ne.s32.totalorder %s200, %s201
    %p215 = scmp.eq.s32.totalorder %s31, 1
    %p216 = por %p214, %p215
    %p218 = scmp.ne.s32.totalorder %s201, %s217
    %p219 = scmp.eq.s32.totalorder %s31, 0
    %p220 = por %p218, %p219
    %s221 = ssub.s32 %s25, %s32
    %p222 = scmp.eq.s32.totalorder %s221, 0
    %s224 = sadd.s32 %s223, 1
    %s225 = scalar_select %p222, %s223, %s224
    %p228 = pneg %p222
    %p229 = scmp.eq.s32.totalorder %s25, 1
    %p230 = por %p228, %p229
    %p231 = scmp.ne.s32.totalorder %s223, %s226
    %p232 = scmp.eq.s32.totalorder %s25, 0
    %p233 = por %p231, %p232
    %p234 = scmp.ne.s32.totalorder %s223, %s226
    %p235 = scmp.eq.s32.totalorder %s30, 1
    %p236 = por %p234, %p235
    %p237 = scmp.ne.s32.totalorder %s226, %s227
    %p238 = scmp.eq.s32.totalorder %s30, 0
    %p239 = por %p237, %p238
    %p240 = scmp.ne.s32.totalorder %s226, %s227
    %p241 = scmp.eq.s32.totalorder %s31, 1
    %p242 = por %p240, %p241
    %p244 = scmp.ne.s32.totalorder %s227, %s243
    %p245 = scmp.eq.s32.totalorder %s31, 0
    %p246 = por %p244, %p245
    %s247 = ssub.s32 %s25, %s32
    %p248 = scmp.eq.s32.totalorder %s247, 0
    %s250 = sadd.s32 %s249, 1
    %s251 = scalar_select %p248, %s249, %s250
    %p254 = pneg %p248
    %p255 = scmp.eq.s32.totalorder %s25, 1
    %p256 = por %p254, %p255
    %p257 = scmp.ne.s32.totalorder %s249, %s252
    %p258 = scmp.eq.s32.totalorder %s25, 0
    %p259 = por %p257, %p258
    %p260 = scmp.ne.s32.totalorder %s249, %s252
    %p261 = scmp.eq.s32.totalorder %s30, 1
    %p262 = por %p260, %p261
    %p263 = scmp.ne.s32.totalorder %s252, %s253
    %p264 = scmp.eq.s32.totalorder %s30, 0
    %p265 = por %p263, %p264
    %p266 = scmp.ne.s32.totalorder %s252, %s253
    %p267 = scmp.eq.s32.totalorder %s31, 1
    %p268 = por %p266, %p267
    %p270 = scmp.ne.s32.totalorder %s253, %s269
    %p271 = scmp.eq.s32.totalorder %s31, 0
    %p272 = por %p270, %p271
    %s274 = sadd.s32 %s273, 1
    %p277 = scmp.eq.s32.totalorder %s25, 1
    %p278 = scmp.ne.s32.totalorder %s273, %s275
    %p279 = scmp.eq.s32.totalorder %s25, 0
    %p280 = por %p278, %p279
    %p281 = scmp.ne.s32.totalorder %s273, %s275
    %p282 = scmp.eq.s32.totalorder %s30, 1
    %p283 = por %p281, %p282
    %p284 = scmp.ne.s32.totalorder %s275, %s276
    %p285 = scmp.eq.s32.totalorder %s30, 0
    %p286 = por %p284, %p285
    %p287 = scmp.ne.s32.totalorder %s275, %s276
    %p288 = scmp.eq.s32.totalorder %s31, 1
    %p289 = por %p287, %p288
    %p291 = scmp.ne.s32.totalorder %s276, %s290
    %p292 = scmp.eq.s32.totalorder %s31, 0
    %p293 = por %p291, %p292
    %s295 = sadd.s32 %s294, 1
    %p298 = scmp.eq.s32.totalorder %s25, 1
    %p299 = scmp.ne.s32.totalorder %s294, %s296
    %p300 = scmp.eq.s32.totalorder %s25, 0
    %p301 = por %p299, %p300
    %p302 = scmp.ne.s32.totalorder %s294, %s296
    %p303 = scmp.eq.s32.totalorder %s30, 1
    %p304 = por %p302, %p303
    %p305 = scmp.ne.s32.totalorder %s296, %s297
    %p306 = scmp.eq.s32.totalorder %s30, 0
    %p307 = por %p305, %p306
    %p308 = scmp.ne.s32.totalorder %s296, %s297
    %p309 = scmp.eq.s32.totalorder %s31, 1
    %p310 = por %p308, %p309
    %p312 = scmp.ne.s32.totalorder %s297, %s311
    %p313 = scmp.eq.s32.totalorder %s31, 0
    %p314 = por %p312, %p313
    %s316 = sadd.s32 %s315, 1
    %p319 = scmp.eq.s32.totalorder %s25, 1
    %p320 = scmp.ne.s32.totalorder %s315, %s317
    %p321 = scmp.eq.s32.totalorder %s25, 0
    %p322 = por %p320, %p321
    %p323 = scmp.ne.s32.totalorder %s315, %s317
    %p324 = scmp.eq.s32.totalorder %s30, 1
    %p325 = por %p323, %p324
    %p326 = scmp.ne.s32.totalorder %s317, %s318
    %p327 = scmp.eq.s32.totalorder %s30, 0
    %p328 = por %p326, %p327
    %p329 = scmp.ne.s32.totalorder %s317, %s318
    %p330 = scmp.eq.s32.totalorder %s31, 1
    %p331 = por %p329, %p330
    %p333 = scmp.ne.s32.totalorder %s318, %s332
    %p334 = scmp.eq.s32.totalorder %s31, 0
    %p335 = por %p333, %p334
    %s337 = sadd.s32 %s336, 1
    %p340 = scmp.eq.s32.totalorder %s25, 1
    %p341 = scmp.ne.s32.totalorder %s336, %s338
    %p342 = scmp.eq.s32.totalorder %s25, 0
    %p343 = por %p341, %p342
    %p344 = scmp.ne.s32.totalorder %s336, %s338
    %p345 = scmp.eq.s32.totalorder %s30, 1
    %p346 = por %p344, %p345
    %p347 = scmp.ne.s32.totalorder %s338, %s339
    %p348 = scmp.eq.s32.totalorder %s30, 0
    %p349 = por %p347, %p348
    %p350 = scmp.ne.s32.totalorder %s338, %s339
    %p351 = scmp.eq.s32.totalorder %s31, 1
    %p352 = por %p350, %p351
    %p354 = scmp.ne.s32.totalorder %s339, %s353
    %p355 = scmp.eq.s32.totalorder %s31, 0
    %p356 = por %p354, %p355
    %s358 = sadd.s32 %s357, 1
    %p361 = scmp.eq.s32.totalorder %s25, 1
    %p362 = scmp.ne.s32.totalorder %s357, %s359
    %p363 = scmp.eq.s32.totalorder %s25, 0
    %p364 = por %p362, %p363
    %p365 = scmp.ne.s32.totalorder %s357, %s359
    %p366 = scmp.eq.s32.totalorder %s30, 1
    %p367 = por %p365, %p366
    %p368 = scmp.ne.s32.totalorder %s359, %s360
    %p369 = scmp.eq.s32.totalorder %s30, 0
    %p370 = por %p368, %p369
    %p371 = scmp.ne.s32.totalorder %s359, %s360
    %p372 = scmp.eq.s32.totalorder %s31, 1
    %p373 = por %p371, %p372
    %p375 = scmp.ne.s32.totalorder %s360, %s374
    %p376 = scmp.eq.s32.totalorder %s31, 0
    %p377 = por %p375, %p376
    %s379 = sadd.s32 %s378, 1
    %p382 = scmp.eq.s32.totalorder %s25, 1
    %p383 = scmp.ne.s32.totalorder %s378, %s380
    %p384 = scmp.eq.s32.totalorder %s25, 0
    %p385 = por %p383, %p384
    %p386 = scmp.ne.s32.totalorder %s378, %s380
    %p387 = scmp.eq.s32.totalorder %s30, 1
    %p388 = por %p386, %p387
    %p389 = scmp.ne.s32.totalorder %s380, %s381
    %p390 = scmp.eq.s32.totalorder %s30, 0
    %p391 = por %p389, %p390
    %p392 = scmp.ne.s32.totalorder %s380, %s381
    %p393 = scmp.eq.s32.totalorder %s31, 1
    %p394 = por %p392, %p393
    %p396 = scmp.ne.s32.totalorder %s381, %s395
    %p397 = scmp.eq.s32.totalorder %s31, 0
    %p398 = por %p396, %p397
    %s400 = sadd.s32 %s399, 1
    %p403 = scmp.eq.s32.totalorder %s25, 1
    %p404 = scmp.ne.s32.totalorder %s399, %s401
    %p405 = scmp.eq.s32.totalorder %s25, 0
    %p406 = por %p404, %p405
    %p407 = scmp.ne.s32.totalorder %s399, %s401
    %p408 = scmp.eq.s32.totalorder %s30, 1
    %p409 = por %p407, %p408
    %p410 = scmp.ne.s32.totalorder %s401, %s402
    %p411 = scmp.eq.s32.totalorder %s30, 0
    %p412 = por %p410, %p411
    %p413 = scmp.ne.s32.totalorder %s401, %s402
    %p414 = scmp.eq.s32.totalorder %s31, 1
    %p415 = por %p413, %p414
    %p417 = scmp.ne.s32.totalorder %s402, %s416
    %p418 = scmp.eq.s32.totalorder %s31, 0
    %p419 = por %p417, %p418
    %s421 = sadd.s32 %s420, 1
    %p424 = scmp.eq.s32.totalorder %s25, 1
    %p425 = scmp.ne.s32.totalorder %s420, %s422
    %p426 = scmp.eq.s32.totalorder %s25, 0
    %p427 = por %p425, %p426
    %p428 = scmp.ne.s32.totalorder %s420, %s422
    %p429 = scmp.eq.s32.totalorder %s30, 1
    %p430 = por %p428, %p429
    %p431 = scmp.ne.s32.totalorder %s422, %s423
    %p432 = scmp.eq.s32.totalorder %s30, 0
    %p433 = por %p431, %p432
    %p434 = scmp.ne.s32.totalorder %s422, %s423
    %p435 = scmp.eq.s32.totalorder %s31, 1
    %p436 = por %p434, %p435
    %p438 = scmp.ne.s32.totalorder %s423, %s437
    %p439 = scmp.eq.s32.totalorder %s31, 0
    %p440 = por %p438, %p439
    %s442 = sadd.s32 %s441, 1
    %p445 = scmp.eq.s32.totalorder %s25, 1
    %p446 = scmp.ne.s32.totalorder %s441, %s443
    %p447 = scmp.eq.s32.totalorder %s25, 0
    %p448 = por %p446, %p447
    %p449 = scmp.ne.s32.totalorder %s441, %s443
    %p450 = scmp.eq.s32.totalorder %s30, 1
    %p451 = por %p449, %p450
    %p452 = scmp.ne.s32.totalorder %s443, %s444
    %p453 = scmp.eq.s32.totalorder %s30, 0
    %p454 = por %p452, %p453
    %p455 = scmp.ne.s32.totalorder %s443, %s444
    %p456 = scmp.eq.s32.totalorder %s31, 1
    %p457 = por %p455, %p456
    %p459 = scmp.ne.s32.totalorder %s444, %s458
    %p460 = scmp.eq.s32.totalorder %s31, 0
    %p461 = por %p459, %p460
    %s463 = sadd.s32 %s462, 1
    %p466 = scmp.eq.s32.totalorder %s25, 1
    %p467 = scmp.ne.s32.totalorder %s462, %s464
    %p468 = scmp.eq.s32.totalorder %s25, 0
    %p469 = por %p467, %p468
    %p470 = scmp.ne.s32.totalorder %s462, %s464
    %p471 = scmp.eq.s32.totalorder %s30, 1
    %p472 = por %p470, %p471
    %p473 = scmp.ne.s32.totalorder %s464, %s465
    %p474 = scmp.eq.s32.totalorder %s30, 0
    %p475 = por %p473, %p474
    %p476 = scmp.ne.s32.totalorder %s464, %s465
    %p477 = scmp.eq.s32.totalorder %s31, 1
    %p478 = por %p476, %p477
    %p480 = scmp.ne.s32.totalorder %s465, %s479
    %p481 = scmp.eq.s32.totalorder %s31, 0
    %p482 = por %p480, %p481
    %p483 = scmp.le.s32.totalorder 1, %s25
    %p484 = scmp.lt.s32.totalorder %s25, 3
    %p485 = pnand %p483, %p484
    %p486 = pneg %p485
    // Predicated region
    $region9: #{_lambda_.1} parent=5 // pred_check
      _
    $region10: #{_lambda_.1} parent=5 // pred_check_branch
      %488 = sbr.rel (%p485) target = $region12
    $region11: #{_lambda_.1} parent=5 // pred_region
      %s489 = ssub.s32 %s25, 1
      // Predicated region
      $region13: #{_lambda_.1} parent=11 // pred_check
        %p490 = pneg %p46
      $region14: #{_lambda_.1} parent=11 // pred_check_branch
        %492 = sbr.rel (%p490) target = $region16
      $region15: #{_lambda_.1} parent=11 // pred_region
        _
      $region16: #{_lambda_.1} parent=11 // pred_fallthru
        _
      // Predicated region
      $region17: #{_lambda_.1} parent=11 // pred_check
        %p493 = pneg %p67
      $region18: #{_lambda_.1} parent=11 // pred_check_branch
        %495 = sbr.rel (%p493) target = $region20
      $region19: #{_lambda_.1} parent=11 // pred_region
        _
      $region20: #{_lambda_.1} parent=11 // pred_fallthru
        _
      // Predicated region
      $region21: #{_lambda_.1} parent=11 // pred_check
        %p496 = pneg %p88
      $region22: #{_lambda_.1} parent=11 // pred_check_branch
        %498 = sbr.rel (%p496) target = $region24
      $region23: #{_lambda_.1} parent=11 // pred_region
        _
      $region24: #{_lambda_.1} parent=11 // pred_fallthru
        _
      // Predicated region
      $region25: #{_lambda_.1} parent=11 // pred_check
        %p499 = pneg %p109
      $region26: #{_lambda_.1} parent=11 // pred_check_branch
        %501 = sbr.rel (%p499) target = $region28
      $region27: #{_lambda_.1} parent=11 // pred_region
        _
      $region28: #{_lambda_.1} parent=11 // pred_fallthru
        _
      // Predicated region
      $region29: #{_lambda_.1} parent=11 // pred_check
        %p502 = pneg %p286
      $region30: #{_lambda_.1} parent=11 // pred_check_branch
        %504 = sbr.rel (%p502) target = $region32
      $region31: #{_lambda_.1} parent=11 // pred_region
        _
      $region32: #{_lambda_.1} parent=11 // pred_fallthru
        _
      // Predicated region
      $region33: #{_lambda_.1} parent=11 // pred_check
        %p505 = pneg %p307
      $region34: #{_lambda_.1} parent=11 // pred_check_branch
        %507 = sbr.rel (%p505) target = $region36
      $region35: #{_lambda_.1} parent=11 // pred_region
        _
      $region36: #{_lambda_.1} parent=11 // pred_fallthru
        _
      // Predicated region
      $region37: #{_lambda_.1} parent=11 // pred_check
        %p508 = pneg %p328
      $region38: #{_lambda_.1} parent=11 // pred_check_branch
        %510 = sbr.rel (%p508) target = $region40
      $region39: #{_lambda_.1} parent=11 // pred_region
        _
      $region40: #{_lambda_.1} parent=11 // pred_fallthru
        _
      // Predicated region
      $region41: #{_lambda_.1} parent=11 // pred_check
        %p511 = pneg %p349
      $region42: #{_lambda_.1} parent=11 // pred_check_branch
        %513 = sbr.rel (%p511) target = $region44
      $region43: #{_lambda_.1} parent=11 // pred_region
        _
      $region44: #{_lambda_.1} parent=11 // pred_fallthru
        _
      // Predicated region
      $region45: #{_lambda_.1} parent=11 // pred_check
        %p514 = pneg %p370
      $region46: #{_lambda_.1} parent=11 // pred_check_branch
        %516 = sbr.rel (%p514) target = $region48
      $region47: #{_lambda_.1} parent=11 // pred_region
        _
      $region48: #{_lambda_.1} parent=11 // pred_fallthru
        _
      // Predicated region
      $region49: #{_lambda_.1} parent=11 // pred_check
        %p517 = pneg %p391
      $region50: #{_lambda_.1} parent=11 // pred_check_branch
        %519 = sbr.rel (%p517) target = $region52
      $region51: #{_lambda_.1} parent=11 // pred_region
        _
      $region52: #{_lambda_.1} parent=11 // pred_fallthru
        _
      // Predicated region
      $region53: #{_lambda_.1} parent=11 // pred_check
        %p520 = pneg %p412
      $region54: #{_lambda_.1} parent=11 // pred_check_branch
        %522 = sbr.rel (%p520) target = $region56
      $region55: #{_lambda_.1} parent=11 // pred_region
        _
      $region56: #{_lambda_.1} parent=11 // pred_fallthru
        _
      // Predicated region
      $region57: #{_lambda_.1} parent=11 // pred_check
        %p523 = pneg %p433
      $region58: #{_lambda_.1} parent=11 // pred_check_branch
        %525 = sbr.rel (%p523) target = $region60
      $region59: #{_lambda_.1} parent=11 // pred_region
        _
      $region60: #{_lambda_.1} parent=11 // pred_fallthru
        _
      // Predicated region
      $region61: #{_lambda_.1} parent=11 // pred_check
        %p526 = pneg %p454
      $region62: #{_lambda_.1} parent=11 // pred_check_branch
        %528 = sbr.rel (%p526) target = $region64
      $region63: #{_lambda_.1} parent=11 // pred_region
        _
      $region64: #{_lambda_.1} parent=11 // pred_fallthru
        _
    $region12: #{_lambda_.1} parent=5 // pred_fallthru
      _
    %p529 = scmp.lt.s32.totalorder %s25, 2
    // Predicated region
    $region65: #{_lambda_.1} parent=5 // pred_check
      %p530 = pneg %p529
    $region66: #{_lambda_.1} parent=5 // pred_check_branch
      %532 = sbr.rel (%p530) target = $region68
    $region67: #{_lambda_.1} parent=5 // pred_region
      // Predicated region
      $region69: #{_lambda_.1} parent=67 // pred_check
        %p533 = pneg %p129
      $region70: #{_lambda_.1} parent=67 // pred_check_branch
        %535 = sbr.rel (%p533) target = $region72
      $region71: #{_lambda_.1} parent=67 // pred_region
        %p536 = scmp.lt.s32.totalorder %s25, 1
        %s537 = scalar_select %p536, %s25, 1
        %s538 = smul.addr %s537, 2
        %s539 = smul.addr %s538, 8
        %s540 = scalar_lea.vmem %s4, %s539
      $region72: #{_lambda_.1} parent=67 // pred_fallthru
        _
      // Predicated region
      $region73: #{_lambda_.1} parent=67 // pred_check
        %p541 = pneg %p155
      $region74: #{_lambda_.1} parent=67 // pred_check_branch
        %543 = sbr.rel (%p541) target = $region76
      $region75: #{_lambda_.1} parent=67 // pred_region
        %p544 = scmp.lt.s32.totalorder %s25, 1
        %s545 = scalar_select %p544, %s25, 1
        %s546 = smul.addr %s545, 2
        %s547 = scalar_lea.vmem %s5, %s546
      $region76: #{_lambda_.1} parent=67 // pred_fallthru
        _
      // Predicated region
      $region77: #{_lambda_.1} parent=67 // pred_check
        %p548 = pneg %p181
      $region78: #{_lambda_.1} parent=67 // pred_check_branch
        %550 = sbr.rel (%p548) target = $region80
      $region79: #{_lambda_.1} parent=67 // pred_region
        %p551 = scmp.lt.s32.totalorder %s25, 1
        %s552 = scalar_select %p551, %s25, 1
        %s553 = smul.addr %s552, 48
        %s554 = smul.addr %s553, 4
        %s555 = scalar_lea.vmem %s6, %s554
      $region80: #{_lambda_.1} parent=67 // pred_fallthru
        _
      // Predicated region
      $region81: #{_lambda_.1} parent=67 // pred_check
        %p556 = pneg %p207
      $region82: #{_lambda_.1} parent=67 // pred_check_branch
        %558 = sbr.rel (%p556) target = $region84
      $region83: #{_lambda_.1} parent=67 // pred_region
        %p559 = scmp.lt.s32.totalorder %s25, 1
        %s560 = scalar_select %p559, %s25, 1
        %s561 = smul.addr %s560, 16
        %s562 = smul.addr %s561, 4
        %s563 = scalar_lea.vmem %s7, %s562
      $region84: #{_lambda_.1} parent=67 // pred_fallthru
        _
      // Predicated region
      $region85: #{_lambda_.1} parent=67 // pred_check
        %p564 = pneg %p233
      $region86: #{_lambda_.1} parent=67 // pred_check_branch
        %566 = sbr.rel (%p564) target = $region88
      $region87: #{_lambda_.1} parent=67 // pred_region
        %p567 = scmp.lt.s32.totalorder %s25, 1
        %s568 = scalar_select %p567, %s25, 1
        %s569 = smul.addr %s568, 32
        %s570 = smul.addr %s569, 4
        %s571 = scalar_lea.vmem %s8, %s570
      $region88: #{_lambda_.1} parent=67 // pred_fallthru
        _
      // Predicated region
      $region89: #{_lambda_.1} parent=67 // pred_check
        %p572 = pneg %p259
      $region90: #{_lambda_.1} parent=67 // pred_check_branch
        %574 = sbr.rel (%p572) target = $region92
      $region91: #{_lambda_.1} parent=67 // pred_region
        %p575 = scmp.lt.s32.totalorder %s25, 1
        %s576 = scalar_select %p575, %s25, 1
        %s577 = smul.addr %s576, 32
        %s578 = smul.addr %s577, 4
        %s579 = scalar_lea.vmem %s9, %s578
      $region92: #{_lambda_.1} parent=67 // pred_fallthru
        _
    $region68: #{_lambda_.1} parent=5 // pred_fallthru
      _
    %p580 = scmp.le.s32.totalorder 1, %s25
    %p581 = scmp.lt.s32.totalorder %s25, 3
    %p582 = pnand %p580, %p581
    %p583 = pneg %p582
    // Predicated region
    $region93: #{_lambda_.1} parent=5 // pred_check
      _
    $region94: #{_lambda_.1} parent=5 // pred_check_branch
      %585 = sbr.rel (%p582) target = $region96
    $region95: #{_lambda_.1} parent=5 // pred_region
      %s586 = ssub.s32 %s25, 1
      %p587 = pneg %p46
      %p588 = pneg %p43
      %p589 = pneg %p67
      %p590 = pneg %p64
      %p591 = pneg %p88
      %p592 = pneg %p85
      %p593 = pneg %p109
      %p594 = pneg %p106
      %p595 = scmp.lt.s32.totalorder %s30, 1
      %s596 = scalar_select %p595, %s30, 1
      %s597 = smul.addr %s596, 2
      %s598 = smul.addr %s597, 8
      %s599 = scalar_lea.vmem %s4, %s598
      %p600 = pneg %p135
      %p601 = pneg %p132
      %p602 = scmp.lt.s32.totalorder %s30, 1
      %s603 = scalar_select %p602, %s30, 1
      %s604 = smul.addr %s603, 2
      %s605 = scalar_lea.vmem %s5, %s604
      %p606 = pneg %p161
      %p607 = pneg %p158
      %p608 = scmp.lt.s32.totalorder %s30, 1
      %s609 = scalar_select %p608, %s30, 1
      %s610 = smul.addr %s609, 48
      %s611 = smul.addr %s610, 4
      %s612 = scalar_lea.vmem %s6, %s611
      %p613 = pneg %p187
      %p614 = pneg %p184
      %p615 = scmp.lt.s32.totalorder %s30, 1
      %s616 = scalar_select %p615, %s30, 1
      %s617 = smul.addr %s616, 16
      %s618 = smul.addr %s617, 4
      %s619 = scalar_lea.vmem %s7, %s618
      %p620 = pneg %p213
      %p621 = pneg %p210
      %p622 = scmp.lt.s32.totalorder %s30, 1
      %s623 = scalar_select %p622, %s30, 1
      %s624 = smul.addr %s623, 32
      %s625 = smul.addr %s624, 4
      %s626 = scalar_lea.vmem %s8, %s625
      %p627 = pneg %p239
      %p628 = pneg %p236
      %p629 = scmp.lt.s32.totalorder %s30, 1
      %s630 = scalar_select %p629, %s30, 1
      %s631 = smul.addr %s630, 32
      %s632 = smul.addr %s631, 4
      %s633 = scalar_lea.vmem %s9, %s632
      %p634 = pneg %p265
      %p635 = pneg %p262
      %p636 = pneg %p286
      %p637 = pneg %p283
      %p638 = pneg %p307
      %p639 = pneg %p304
      %p640 = pneg %p328
      %p641 = pneg %p325
      %p642 = pneg %p349
      %p643 = pneg %p346
      %p644 = pneg %p370
      %p645 = pneg %p367
      %p646 = pneg %p391
      %p647 = pneg %p388
      %p648 = pneg %p412
      %p649 = pneg %p409
      %p650 = pneg %p433
      %p651 = pneg %p430
      %p652 = pneg %p454
      %p653 = pneg %p451
      %p654 = pneg %p475
      %p655 = pneg %p472
      %p656 = scmp.lt.s32.totalorder %s30, 1
      %s657 = scalar_select %p656, %s30, 1
      %s658 = smul.addr %s657, 2
      %s659 = smul.addr %s658, 8
      %s660 = scalar_lea.vmem %s4, %s659
      %p661 = scmp.lt.s32.totalorder %s30, 1
      %s662 = scalar_select %p661, %s30, 1
      %s663 = smul.addr %s662, 2
      %s664 = scalar_lea.vmem %s5, %s663
      %p665 = scmp.lt.s32.totalorder %s30, 1
      %s666 = scalar_select %p665, %s30, 1
      %s667 = smul.addr %s666, 48
      %s668 = smul.addr %s667, 4
      %s669 = scalar_lea.vmem %s6, %s668
      %p670 = scmp.lt.s32.totalorder %s30, 1
      %s671 = scalar_select %p670, %s30, 1
      %s672 = smul.addr %s671, 16
      %s673 = smul.addr %s672, 4
      %s674 = scalar_lea.vmem %s7, %s673
      %p675 = scmp.lt.s32.totalorder %s30, 1
      %s676 = scalar_select %p675, %s30, 1
      %s677 = smul.addr %s676, 32
      %s678 = smul.addr %s677, 4
      %s679 = scalar_lea.vmem %s8, %s678
      %p680 = scmp.lt.s32.totalorder %s30, 1
      %s681 = scalar_select %p680, %s30, 1
      %s682 = smul.addr %s681, 32
      %s683 = smul.addr %s682, 4
      %s684 = scalar_lea.vmem %s9, %s683
      %p686 = scmp.eq.s32.totalorder %s30, 0
      // Predicated region
      $region97: #{_lambda_.1} parent=95 // pred_check
        %p687 = pneg %p686
      $region98: #{_lambda_.1} parent=95 // pred_check_branch
        %689 = sbr.rel (%p687) target = $region100
      $region99: #{_lambda_.1} parent=95 // pred_region
        %v690 = vld [vmem:[%s0] sm:$0xff]
        %v691 = vld [vmem:[%s0 + $0x8] sm:$0xff]
        %v692 = vld [vmem:[%s0 + $0x10] sm:$0xff]
        %v693 = vld [vmem:[%s0 + $0x18] sm:$0xff]
        %v694 = vld [vmem:[%s0 + $0x20] sm:$0xff]
        %v695 = vld [vmem:[%s0 + $0x28] sm:$0xff]
        %v696 = vld [vmem:[%s0 + $0x30] sm:$0xff]
        %v697 = vld [vmem:[%s0 + $0x38] sm:$0xff]
        %v698 = vld [vmem:[%s0 + $0x40] sm:$0xff]
        %v699 = vld [vmem:[%s0 + $0x48] sm:$0xff]
        %v700 = vld [vmem:[%s0 + $0x50] sm:$0xff]
        %v701 = vld [vmem:[%s0 + $0x58] sm:$0xff]
        %v702 = vld [vmem:[%s1] sm:$0xf]
        %v703 = vld [vmem:[%s1 + $0x4] sm:$0xf]
        %v704 = vld [vmem:[%s1 + $0x8] sm:$0xf]
        %v705 = vld [vmem:[%s1 + $0xc] sm:$0xf]
        %v706 = vld [vmem:[%s1 + $0x10] sm:$0xf]
        %v707 = vld [vmem:[%s1 + $0x14] sm:$0xf]
        %v708 = vld [vmem:[%s1 + $0x18] sm:$0xf]
        %v709 = vld [vmem:[%s1 + $0x1c] sm:$0xf]
        %v710 = vld [vmem:[%s1 + $0x20] sm:$0xf]
        %v711 = vld [vmem:[%s1 + $0x24] sm:$0xf]
        %v712 = vld [vmem:[%s1 + $0x28] sm:$0xf]
        %v713 = vld [vmem:[%s1 + $0x2c] sm:$0xf]
        %v714 = vld [vmem:[%s1 + $0x30] sm:$0xf]
        %v715 = vld [vmem:[%s1 + $0x34] sm:$0xf]
        %v716 = vld [vmem:[%s1 + $0x38] sm:$0xf]
        %v717 = vld [vmem:[%s1 + $0x3c] sm:$0xf]
        %v718 = vld [vmem:[%s1 + $0x40] sm:$0xf]
        %v719 = vld [vmem:[%s1 + $0x44] sm:$0xf]
        %v720 = vld [vmem:[%s1 + $0x48] sm:$0xf]
        %v721 = vld [vmem:[%s1 + $0x4c] sm:$0xf]
        %v722 = vld [vmem:[%s1 + $0x50] sm:$0xf]
        %v723 = vld [vmem:[%s1 + $0x54] sm:$0xf]
        %v724 = vld [vmem:[%s1 + $0x58] sm:$0xf]
        %v725 = vld [vmem:[%s1 + $0x5c] sm:$0xf]
        %v726 = vld [vmem:[%s1 + $0x60] sm:$0xf]
        %v727 = vld [vmem:[%s1 + $0x64] sm:$0xf]
        %v728 = vld [vmem:[%s1 + $0x68] sm:$0xf]
        %v729 = vld [vmem:[%s1 + $0x6c] sm:$0xf]
        %v730 = vld [vmem:[%s1 + $0x70] sm:$0xf]
        %v731 = vld [vmem:[%s1 + $0x74] sm:$0xf]
        %v732 = vld [vmem:[%s1 + $0x78] sm:$0xf]
        %v733 = vld [vmem:[%s1 + $0x7c] sm:$0xf]
        %v734 = vld [vmem:[%s1 + $0x80] sm:$0xf]
        %v735 = vld [vmem:[%s1 + $0x84] sm:$0xf]
        %v736 = vld [vmem:[%s1 + $0x88] sm:$0xf]
        %v737 = vld [vmem:[%s1 + $0x8c] sm:$0xf]
        %v738 = vld [vmem:[%s1 + $0x90] sm:$0xf]
        %v739 = vld [vmem:[%s1 + $0x94] sm:$0xf]
        %v740 = vld [vmem:[%s1 + $0x98] sm:$0xf]
        %v741 = vld [vmem:[%s1 + $0x9c] sm:$0xf]
        %v742 = vld [vmem:[%s1 + $0xa0] sm:$0xf]
        %v743 = vld [vmem:[%s1 + $0xa4] sm:$0xf]
        %v744 = vld [vmem:[%s1 + $0xa8] sm:$0xf]
        %v745 = vld [vmem:[%s1 + $0xac] sm:$0xf]
        %v746 = vld [vmem:[%s1 + $0xb0] sm:$0xf]
        %v747 = vld [vmem:[%s1 + $0xb4] sm:$0xf]
        %v748 = vld [vmem:[%s1 + $0xb8] sm:$0xf]
        %v749 = vld [vmem:[%s1 + $0xbc] sm:$0xf]
        %v750 = vld [vmem:[%s1 + $0xc0] sm:$0xf]
        %v751 = vld [vmem:[%s1 + $0xc4] sm:$0xf]
        %v752 = vld [vmem:[%s1 + $0xc8] sm:$0xf]
        %v753 = vld [vmem:[%s1 + $0xcc] sm:$0xf]
        %v754 = vld [vmem:[%s1 + $0xd0] sm:$0xf]
        %v755 = vld [vmem:[%s1 + $0xd4] sm:$0xf]
        %v756 = vld [vmem:[%s1 + $0xd8] sm:$0xf]
        %v757 = vld [vmem:[%s1 + $0xdc] sm:$0xf]
        %v758 = vld [vmem:[%s1 + $0xe0] sm:$0xf]
        %v759 = vld [vmem:[%s1 + $0xe4] sm:$0xf]
        %v760 = vld [vmem:[%s1 + $0xe8] sm:$0xf]
        %v761 = vld [vmem:[%s1 + $0xec] sm:$0xf]
        %v762 = vld [vmem:[%s1 + $0xf0] sm:$0xf]
        %v763 = vld [vmem:[%s1 + $0xf4] sm:$0xf]
        %v764 = vld [vmem:[%s1 + $0xf8] sm:$0xf]
        %v765 = vld [vmem:[%s1 + $0xfc] sm:$0xf]
        %v766 = vld [vmem:[%s1 + $0x100] sm:$0xf]
        %v767 = vld [vmem:[%s1 + $0x104] sm:$0xf]
        %v768 = vld [vmem:[%s1 + $0x108] sm:$0xf]
        %v769 = vld [vmem:[%s1 + $0x10c] sm:$0xf]
        %v770 = vld [vmem:[%s1 + $0x110] sm:$0xf]
        %v771 = vld [vmem:[%s1 + $0x114] sm:$0xf]
        %v772 = vld [vmem:[%s1 + $0x118] sm:$0xf]
        %v773 = vld [vmem:[%s1 + $0x11c] sm:$0xf]
        %v774 = vld [vmem:[%s1 + $0x120] sm:$0xf]
        %v775 = vld [vmem:[%s1 + $0x124] sm:$0xf]
        %v776 = vld [vmem:[%s1 + $0x128] sm:$0xf]
        %v777 = vld [vmem:[%s1 + $0x12c] sm:$0xf]
        %v778 = vld [vmem:[%s1 + $0x130] sm:$0xf]
        %v779 = vld [vmem:[%s1 + $0x134] sm:$0xf]
        %v780 = vld [vmem:[%s1 + $0x138] sm:$0xf]
        %v781 = vld [vmem:[%s1 + $0x13c] sm:$0xf]
        %v782 = vld [vmem:[%s1 + $0x140] sm:$0xf]
        %v783 = vld [vmem:[%s1 + $0x144] sm:$0xf]
        %v784 = vld [vmem:[%s1 + $0x148] sm:$0xf]
        %v785 = vld [vmem:[%s1 + $0x14c] sm:$0xf]
        %v786 = vld [vmem:[%s1 + $0x150] sm:$0xf]
        %v787 = vld [vmem:[%s1 + $0x154] sm:$0xf]
        %v788 = vld [vmem:[%s1 + $0x158] sm:$0xf]
        %v789 = vld [vmem:[%s1 + $0x15c] sm:$0xf]
        %v790 = vld [vmem:[%s1 + $0x160] sm:$0xf]
        %v791 = vld [vmem:[%s1 + $0x164] sm:$0xf]
        %v792 = vld [vmem:[%s1 + $0x168] sm:$0xf]
        %v793 = vld [vmem:[%s1 + $0x16c] sm:$0xf]
        %v794 = vld [vmem:[%s1 + $0x170] sm:$0xf]
        %v795 = vld [vmem:[%s1 + $0x174] sm:$0xf]
        %v796 = vld [vmem:[%s1 + $0x178] sm:$0xf]
        %v797 = vld [vmem:[%s1 + $0x17c] sm:$0xf]
        %v798 = vld [vmem:[%s2] sm:$0x1]
        %v800 = vperm.slane %v798, 0
        %v814 = vunpack.c.l.b16 %v690
        %v815 = vunpack.c.h.b16 %v690
        %v816 = vunpack.c.l.b16 %v691
        %v817 = vunpack.c.h.b16 %v691
        %v818 = vunpack.c.l.b16 %v692
        %v819 = vunpack.c.h.b16 %v692
        %v820 = vunpack.c.l.b16 %v693
        %v821 = vunpack.c.h.b16 %v693
        %v822 = vunpack.c.l.b16 %v694
        %v823 = vunpack.c.h.b16 %v694
        %v824 = vunpack.c.l.b16 %v695
        %v825 = vunpack.c.h.b16 %v695
        %v826 = vunpack.c.l.b16 %v696
        %v827 = vunpack.c.h.b16 %v696
        %v828 = vunpack.c.l.b16 %v697
        %v829 = vunpack.c.h.b16 %v697
        %v830 = vunpack.c.l.b16 %v698
        %v831 = vunpack.c.h.b16 %v698
        %v832 = vunpack.c.l.b16 %v699
        %v833 = vunpack.c.h.b16 %v699
        %v834 = vunpack.c.l.b16 %v700
        %v835 = vunpack.c.h.b16 %v700
        %v836 = vunpack.c.l.b16 %v701
        %v837 = vunpack.c.h.b16 %v701
        %v838 = vpack.c.b16 %v820, %v814
        %v839 = vpack.c.b16 %v821, %v815
        %v840 = vpack.c.b16 %v822, %v816
        %v841 = vpack.c.b16 %v823, %v817
        %v842 = vpack.c.b16 %v824, %v818
        %v843 = vpack.c.b16 %v825, %v819
        %v844 = vpack.c.b16 %v832, %v826
        %v845 = vpack.c.b16 %v833, %v827
        %v846 = vpack.c.b16 %v834, %v828
        %v847 = vpack.c.b16 %v835, %v829
        %v848 = vpack.c.b16 %v836, %v830
        %v849 = vpack.c.b16 %v837, %v831
        %v958 = vunpack.c.l.b16 %v702
        %v959 = vunpack.c.l.b16 %v703
        %v960 = vunpack.c.l.b16 %v704
        %v961 = vunpack.c.l.b16 %v705
        %v962 = vunpack.c.l.b16 %v706
        %v963 = vunpack.c.l.b16 %v707
        %v964 = vunpack.c.l.b16 %v708
        %v965 = vunpack.c.l.b16 %v709
        %v966 = vunpack.c.l.b16 %v710
        %v967 = vunpack.c.l.b16 %v711
        %v968 = vunpack.c.l.b16 %v712
        %v969 = vunpack.c.l.b16 %v713
        %v970 = vunpack.c.l.b16 %v714
        %v971 = vunpack.c.l.b16 %v715
        %v972 = vunpack.c.l.b16 %v716
        %v973 = vunpack.c.l.b16 %v717
        %v974 = vunpack.c.l.b16 %v718
        %v975 = vunpack.c.l.b16 %v719
        %v976 = vunpack.c.l.b16 %v720
        %v977 = vunpack.c.l.b16 %v721
        %v978 = vunpack.c.l.b16 %v722
        %v979 = vunpack.c.l.b16 %v723
        %v980 = vunpack.c.l.b16 %v724
        %v981 = vunpack.c.l.b16 %v725
        %v982 = vunpack.c.l.b16 %v726
        %v983 = vunpack.c.l.b16 %v727
        %v984 = vunpack.c.l.b16 %v728
        %v985 = vunpack.c.l.b16 %v729
        %v986 = vunpack.c.l.b16 %v730
        %v987 = vunpack.c.l.b16 %v731
        %v988 = vunpack.c.l.b16 %v732
        %v989 = vunpack.c.l.b16 %v733
        %v990 = vunpack.c.l.b16 %v734
        %v991 = vunpack.c.l.b16 %v735
        %v992 = vunpack.c.l.b16 %v736
        %v993 = vunpack.c.l.b16 %v737
        %v994 = vunpack.c.l.b16 %v738
        %v995 = vunpack.c.l.b16 %v739
        %v996 = vunpack.c.l.b16 %v740
        %v997 = vunpack.c.l.b16 %v741
        %v998 = vunpack.c.l.b16 %v742
        %v999 = vunpack.c.l.b16 %v743
        %v1000 = vunpack.c.l.b16 %v744
        %v1001 = vunpack.c.l.b16 %v745
        %v1002 = vunpack.c.l.b16 %v746
        %v1003 = vunpack.c.l.b16 %v747
        %v1004 = vunpack.c.l.b16 %v748
        %v1005 = vunpack.c.l.b16 %v749
        %v1006 = vunpack.c.l.b16 %v750
        %v1007 = vunpack.c.l.b16 %v751
        %v1008 = vunpack.c.l.b16 %v752
        %v1009 = vunpack.c.l.b16 %v753
        %v1010 = vunpack.c.l.b16 %v754
        %v1011 = vunpack.c.l.b16 %v755
        %v1012 = vunpack.c.l.b16 %v756
        %v1013 = vunpack.c.l.b16 %v757
        %v1014 = vunpack.c.l.b16 %v758
        %v1015 = vunpack.c.l.b16 %v759
        %v1016 = vunpack.c.l.b16 %v760
        %v1017 = vunpack.c.l.b16 %v761
        %v1018 = vunpack.c.l.b16 %v762
        %v1019 = vunpack.c.l.b16 %v763
        %v1020 = vunpack.c.l.b16 %v764
        %v1021 = vunpack.c.l.b16 %v765
        %v1022 = vunpack.c.l.b16 %v766
        %v1023 = vunpack.c.l.b16 %v767
        %v1024 = vunpack.c.l.b16 %v768
        %v1025 = vunpack.c.l.b16 %v769
        %v1026 = vunpack.c.l.b16 %v770
        %v1027 = vunpack.c.l.b16 %v771
        %v1028 = vunpack.c.l.b16 %v772
        %v1029 = vunpack.c.l.b16 %v773
        %v1030 = vunpack.c.l.b16 %v774
        %v1031 = vunpack.c.l.b16 %v775
        %v1032 = vunpack.c.l.b16 %v776
        %v1033 = vunpack.c.l.b16 %v777
        %v1034 = vunpack.c.l.b16 %v778
        %v1035 = vunpack.c.l.b16 %v779
        %v1036 = vunpack.c.l.b16 %v780
        %v1037 = vunpack.c.l.b16 %v781
        %v1038 = vunpack.c.l.b16 %v782
        %v1039 = vunpack.c.l.b16 %v783
        %v1040 = vunpack.c.l.b16 %v784
        %v1041 = vunpack.c.l.b16 %v785
        %v1042 = vunpack.c.l.b16 %v786
        %v1043 = vunpack.c.l.b16 %v787
        %v1044 = vunpack.c.l.b16 %v788
        %v1045 = vunpack.c.l.b16 %v789
        %v1046 = vunpack.c.l.b16 %v790
        %v1047 = vunpack.c.l.b16 %v791
        %v1048 = vunpack.c.l.b16 %v792
        %v1049 = vunpack.c.l.b16 %v793
        %v1050 = vunpack.c.l.b16 %v794
        %v1051 = vunpack.c.l.b16 %v795
        %v1052 = vunpack.c.l.b16 %v796
        %v1053 = vunpack.c.l.b16 %v797
        %v1054 = vpack.c.b16 %v959, %v958
        %v1055 = vpack.c.b16 %v961, %v960
        %v1056 = vpack.c.b16 %v963, %v962
        %v1057 = vpack.c.b16 %v965, %v964
        %v1058 = vpack.c.b16 %v967, %v966
        %v1059 = vpack.c.b16 %v969, %v968
        %v1060 = vpack.c.b16 %v971, %v970
        %v1061 = vpack.c.b16 %v973, %v972
        %v1062 = vpack.c.b16 %v975, %v974
        %v1063 = vpack.c.b16 %v977, %v976
        %v1064 = vpack.c.b16 %v979, %v978
        %v1065 = vpack.c.b16 %v981, %v980
        %v1066 = vpack.c.b16 %v983, %v982
        %v1067 = vpack.c.b16 %v985, %v984
        %v1068 = vpack.c.b16 %v987, %v986
        %v1069 = vpack.c.b16 %v989, %v988
        %v1070 = vpack.c.b16 %v991, %v990
        %v1071 = vpack.c.b16 %v993, %v992
        %v1072 = vpack.c.b16 %v995, %v994
        %v1073 = vpack.c.b16 %v997, %v996
        %v1074 = vpack.c.b16 %v999, %v998
        %v1075 = vpack.c.b16 %v1001, %v1000
        %v1076 = vpack.c.b16 %v1003, %v1002
        %v1077 = vpack.c.b16 %v1005, %v1004
        %v1078 = vpack.c.b16 %v1007, %v1006
        %v1079 = vpack.c.b16 %v1009, %v1008
        %v1080 = vpack.c.b16 %v1011, %v1010
        %v1081 = vpack.c.b16 %v1013, %v1012
        %v1082 = vpack.c.b16 %v1015, %v1014
        %v1083 = vpack.c.b16 %v1017, %v1016
        %v1084 = vpack.c.b16 %v1019, %v1018
        %v1085 = vpack.c.b16 %v1021, %v1020
        %v1086 = vpack.c.b16 %v1023, %v1022
        %v1087 = vpack.c.b16 %v1025, %v1024
        %v1088 = vpack.c.b16 %v1027, %v1026
        %v1089 = vpack.c.b16 %v1029, %v1028
        %v1090 = vpack.c.b16 %v1031, %v1030
        %v1091 = vpack.c.b16 %v1033, %v1032
        %v1092 = vpack.c.b16 %v1035, %v1034
        %v1093 = vpack.c.b16 %v1037, %v1036
        %v1094 = vpack.c.b16 %v1039, %v1038
        %v1095 = vpack.c.b16 %v1041, %v1040
        %v1096 = vpack.c.b16 %v1043, %v1042
        %v1097 = vpack.c.b16 %v1045, %v1044
        %v1098 = vpack.c.b16 %v1047, %v1046
        %v1099 = vpack.c.b16 %v1049, %v1048
        %v1100 = vpack.c.b16 %v1051, %v1050
        %v1101 = vpack.c.b16 %v1053, %v1052
        %1150 = vmatpush.bf16.msra.mxu0 %v1061
        %1151 = vmatpush.bf16.msra.mxu0 %v1060
        %1152 = vmatpush.bf16.msra.mxu0 %v1059
        %1153 = vmatpush.bf16.msra.mxu0 %v1058
        %1154 = vmatpush.bf16.msra.mxu0 %v1057
        %1155 = vmatpush.bf16.msra.mxu0 %v1056
        %1156 = vmatpush.bf16.msra.mxu0 %v1055
        %1157 = vmatpush.bf16.msra.mxu0 %v1054
        %1158 = vmatmul.bf16.gmra.mxu0 %v838
        %v1159 = vpop.f32.mrf.mxu0
        %v1160 = vadd.f32 %v800, %v1159
        %v1161 = vpop.f32.mrf.mxu0
        %v1162 = vadd.f32 %v800, %v1161
        %1163 = vmatmul.bf16.gmra.mxu0 %v844
        %v1164 = vpop.f32.mrf.mxu0
        %v1165 = vadd.f32 %v800, %v1164
        %v1166 = vpop.f32.mrf.mxu0
        %v1167 = vadd.f32 %v800, %v1166
        %1168 = vdwg.mxu0
        %1169 = vmatpush.bf16.msra.mxu0 %v1069
        %1170 = vmatpush.bf16.msra.mxu0 %v1068
        %1171 = vmatpush.bf16.msra.mxu0 %v1067
        %1172 = vmatpush.bf16.msra.mxu0 %v1066
        %1173 = vmatpush.bf16.msra.mxu0 %v1065
        %1174 = vmatpush.bf16.msra.mxu0 %v1064
        %1175 = vmatpush.bf16.msra.mxu0 %v1063
        %1176 = vmatpush.bf16.msra.mxu0 %v1062
        %1177 = vmatmul.bf16.gmra.mxu0 %v839
        %v1178 = vpop.f32.mrf.mxu0
        %v1179 = vadd.f32 %v1160, %v1178
        %v1180 = vpop.f32.mrf.mxu0
        %v1181 = vadd.f32 %v1162, %v1180
        %1182 = vmatmul.bf16.gmra.mxu0 %v845
        %v1183 = vpop.f32.mrf.mxu0
        %v1184 = vadd.f32 %v1165, %v1183
        %v1185 = vpop.f32.mrf.mxu0
        %v1186 = vadd.f32 %v1167, %v1185
        %1187 = vdwg.mxu0
        %1188 = vmatpush.bf16.msra.mxu0 %v1077
        %1189 = vmatpush.bf16.msra.mxu0 %v1076
        %1190 = vmatpush.bf16.msra.mxu0 %v1075
        %1191 = vmatpush.bf16.msra.mxu0 %v1074
        %1192 = vmatpush.bf16.msra.mxu0 %v1073
        %1193 = vmatpush.bf16.msra.mxu0 %v1072
        %1194 = vmatpush.bf16.msra.mxu0 %v1071
        %1195 = vmatpush.bf16.msra.mxu0 %v1070
        %1196 = vmatmul.bf16.gmra.mxu0 %v840
        %v1197 = vpop.f32.mrf.mxu0
        %v1198 = vadd.f32 %v1179, %v1197
        %v1199 = vpop.f32.mrf.mxu0
        %v1200 = vadd.f32 %v1181, %v1199
        %1201 = vmatmul.bf16.gmra.mxu0 %v846
        %v1202 = vpop.f32.mrf.mxu0
        %v1203 = vadd.f32 %v1184, %v1202
        %v1204 = vpop.f32.mrf.mxu0
        %v1205 = vadd.f32 %v1186, %v1204
        %1206 = vdwg.mxu0
        %1207 = vmatpush.bf16.msra.mxu0 %v1085
        %1208 = vmatpush.bf16.msra.mxu0 %v1084
        %1209 = vmatpush.bf16.msra.mxu0 %v1083
        %1210 = vmatpush.bf16.msra.mxu0 %v1082
        %1211 = vmatpush.bf16.msra.mxu0 %v1081
        %1212 = vmatpush.bf16.msra.mxu0 %v1080
        %1213 = vmatpush.bf16.msra.mxu0 %v1079
        %1214 = vmatpush.bf16.msra.mxu0 %v1078
        %1215 = vmatmul.bf16.gmra.mxu0 %v841
        %v1216 = vpop.f32.mrf.mxu0
        %v1217 = vadd.f32 %v1198, %v1216
        %v1218 = vpop.f32.mrf.mxu0
        %v1219 = vadd.f32 %v1200, %v1218
        %1220 = vmatmul.bf16.gmra.mxu0 %v847
        %v1221 = vpop.f32.mrf.mxu0
        %v1222 = vadd.f32 %v1203, %v1221
        %v1223 = vpop.f32.mrf.mxu0
        %v1224 = vadd.f32 %v1205, %v1223
        %1225 = vdwg.mxu0
        %1226 = vmatpush.bf16.msra.mxu0 %v1093
        %1227 = vmatpush.bf16.msra.mxu0 %v1092
        %1228 = vmatpush.bf16.msra.mxu0 %v1091
        %1229 = vmatpush.bf16.msra.mxu0 %v1090
        %1230 = vmatpush.bf16.msra.mxu0 %v1089
        %1231 = vmatpush.bf16.msra.mxu0 %v1088
        %1232 = vmatpush.bf16.msra.mxu0 %v1087
        %1233 = vmatpush.bf16.msra.mxu0 %v1086
        %1234 = vmatmul.bf16.gmra.mxu0 %v842
        %v1235 = vpop.f32.mrf.mxu0
        %v1236 = vadd.f32 %v1217, %v1235
        %v1237 = vpop.f32.mrf.mxu0
        %v1238 = vadd.f32 %v1219, %v1237
        %1239 = vmatmul.bf16.gmra.mxu0 %v848
        %v1240 = vpop.f32.mrf.mxu0
        %v1241 = vadd.f32 %v1222, %v1240
        %v1242 = vpop.f32.mrf.mxu0
        %v1243 = vadd.f32 %v1224, %v1242
        %1244 = vdwg.mxu0
        %1245 = vmatpush.bf16.msra.mxu0 %v1101
        %1246 = vmatpush.bf16.msra.mxu0 %v1100
        %1247 = vmatpush.bf16.msra.mxu0 %v1099
        %1248 = vmatpush.bf16.msra.mxu0 %v1098
        %1249 = vmatpush.bf16.msra.mxu0 %v1097
        %1250 = vmatpush.bf16.msra.mxu0 %v1096
        %1251 = vmatpush.bf16.msra.mxu0 %v1095
        %1252 = vmatpush.bf16.msra.mxu0 %v1094
        %1253 = vmatmul.bf16.gmra.mxu0 %v843
        %v1254 = vpop.f32.mrf.mxu0
        %v1255 = vadd.f32 %v1236, %v1254
        %v1256 = vpop.f32.mrf.mxu0
        %v1257 = vadd.f32 %v1238, %v1256
        %1258 = vmatmul.bf16.gmra.mxu0 %v849
        %v1259 = vpop.f32.mrf.mxu0
        %v1260 = vadd.f32 %v1241, %v1259
        %v1261 = vpop.f32.mrf.mxu0
        %v1262 = vadd.f32 %v1243, %v1261
        %1263 = vdwg.mxu0
        %v1264 = vld [vmem:[%s3] sm:$0xff]
        %v1265 = vld [vmem:[%s3 + $0x8] sm:$0xff]
        %v1266 = vadd.f32 %v1255, %v1264
        %v1267 = vadd.f32 %v1257, %v1265
        %v1268 = vadd.f32 %v1260, %v1264
        %v1269 = vadd.f32 %v1262, %v1265
        %1270 = vst [vmem:[#allocation2] sm:$0xff] %v1266
        %1271 = vst [vmem:[#allocation2 + $0x8] sm:$0xff] %v1267
        %1272 = vst [vmem:[#allocation2 + $0x10] sm:$0xff] %v1268
        %1273 = vst [vmem:[#allocation2 + $0x18] sm:$0xff] %v1269
      $region100: #{_lambda_.1} parent=95 // pred_fallthru
        _
      %v1274 = vld [vmem:[#allocation2] sm:$0xff]
      %v1275 = vld [vmem:[#allocation2 + $0x8] sm:$0xff]
      %v1276 = vld [vmem:[#allocation2 + $0x10] sm:$0xff]
      %v1277 = vld [vmem:[#allocation2 + $0x18] sm:$0xff]
      %v1278 = vld [vmem:[%s660] sm:$0xff]
      %v1279 = vld [vmem:[%s660 + $0x8] sm:$0xff]
      %1280 = vadd.xlane.f32.xlu0 %v1274
      %v1281 = vpop.xlane.xlu0 %1280
      %1282 = vadd.xlane.f32.xlu0 %v1275
      %v1283 = vpop.xlane.xlu0 %1282
      %1284 = vadd.xlane.f32.xlu0 %v1276
      %v1285 = vpop.xlane.xlu0 %1284
      %1286 = vadd.xlane.f32.xlu0 %v1277
      %v1287 = vpop.xlane.xlu0 %1286
      %v1288 = vrcp.pop 128.0
      %v1289 = vmul.f32 128.0, %v1288
      %v1290 = vsub.f32 1.0, %v1289
      %v1291 = vmul.f32 %v1288, %v1290
      %v1292 = vadd.f32 %v1288, %v1291
      %vm1293 = vweird.f32 %v1288
      %v1294 = vsel %vm1293, %v1288, %v1292
      %v1295 = vmul.f32 %v1281, %v1294
      %v1296 = vmul.f32 %v1283, %v1294
      %v1297 = vmul.f32 %v1285, %v1294
      %v1298 = vmul.f32 %v1287, %v1294
      %v1299 = vsub.f32 %v1274, %v1295
      %v1300 = vsub.f32 %v1275, %v1296
      %v1301 = vsub.f32 %v1276, %v1297
      %v1302 = vsub.f32 %v1277, %v1298
      %v1303 = vmul.f32 %v1299, %v1299
      %v1304 = vmul.f32 %v1300, %v1300
      %v1305 = vmul.f32 %v1301, %v1301
      %v1306 = vmul.f32 %v1302, %v1302
      %1307 = vadd.xlane.f32.xlu0 %v1303
      %v1308 = vpop.xlane.xlu0 %1307
      %1309 = vadd.xlane.f32.xlu0 %v1304
      %v1310 = vpop.xlane.xlu0 %1309
      %1311 = vadd.xlane.f32.xlu0 %v1305
      %v1312 = vpop.xlane.xlu0 %1311
      %1313 = vadd.xlane.f32.xlu0 %v1306
      %v1314 = vpop.xlane.xlu0 %1313
      %v1315 = vmul.f32 %v1308, %v1294
      %v1316 = vmul.f32 %v1310, %v1294
      %v1317 = vmul.f32 %v1312, %v1294
      %v1318 = vmul.f32 %v1314, %v1294
      %v1319 = vadd.f32 %v1315, 1e-06
      %v1320 = vadd.f32 %v1316, 1e-06
      %v1321 = vadd.f32 %v1317, 1e-06
      %v1322 = vadd.f32 %v1318, 1e-06
      %v1323 = vrsqrt.pop %v1319
      %v1324 = vmul.f32 %v1323, %v1319
      %v1325 = vmul.f32 %v1324, %v1323
      %v1326 = vmul.f32 0.5, %v1325
      %v1327 = vsub.f32 1.5, %v1326
      %v1328 = vmul.f32 %v1323, %v1327
      %vm1329 = vweird.f32 %v1319
      %vm1330 = vweird.f32 %v1323
      %vm1331 = vmor %vm1329, %vm1330
      %v1332 = vsel %vm1331, %v1323, %v1328
      %v1333 = vrsqrt.pop %v1320
      %v1334 = vmul.f32 %v1333, %v1320
      %v1335 = vmul.f32 %v1334, %v1333
      %v1336 = vmul.f32 0.5, %v1335
      %v1337 = vsub.f32 1.5, %v1336
      %v1338 = vmul.f32 %v1333, %v1337
      %vm1339 = vweird.f32 %v1320
      %vm1340 = vweird.f32 %v1333
      %vm1341 = vmor %vm1339, %vm1340
      %v1342 = vsel %vm1341, %v1333, %v1338
      %v1343 = vrsqrt.pop %v1321
      %v1344 = vmul.f32 %v1343, %v1321
      %v1345 = vmul.f32 %v1344, %v1343
      %v1346 = vmul.f32 0.5, %v1345
      %v1347 = vsub.f32 1.5, %v1346
      %v1348 = vmul.f32 %v1343, %v1347
      %vm1349 = vweird.f32 %v1321
      %vm1350 = vweird.f32 %v1343
      %vm1351 = vmor %vm1349, %vm1350
      %v1352 = vsel %vm1351, %v1343, %v1348
      %v1353 = vrsqrt.pop %v1322
      %v1354 = vmul.f32 %v1353, %v1322
      %v1355 = vmul.f32 %v1354, %v1353
      %v1356 = vmul.f32 0.5, %v1355
      %v1357 = vsub.f32 1.5, %v1356
      %v1358 = vmul.f32 %v1353, %v1357
      %vm1359 = vweird.f32 %v1322
      %vm1360 = vweird.f32 %v1353
      %vm1361 = vmor %vm1359, %vm1360
      %v1362 = vsel %vm1361, %v1353, %v1358
      %v1363 = vmul.f32 %v1299, %v1332
      %v1364 = vmul.f32 %v1300, %v1342
      %v1365 = vmul.f32 %v1301, %v1352
      %v1366 = vmul.f32 %v1302, %v1362
      %v1367 = vperm.slane %v1278, 0
      %v1368 = vmul.f32 %v1363, %v1367
      %v1369 = vmul.f32 %v1364, %v1367
      %v1370 = vmul.f32 %v1365, %v1367
      %v1371 = vmul.f32 %v1366, %v1367
      %v1372 = vperm.slane %v1278, 1
      %v1373 = vadd.f32 %v1368, %v1372
      %v1374 = vadd.f32 %v1369, %v1372
      %v1375 = vadd.f32 %v1370, %v1372
      %v1376 = vadd.f32 %v1371, %v1372
      %v1377 = vpack.c.bf16 %v1374, %v1373
      %v1378 = vpack.c.bf16 %v1376, %v1375
      %v1379 = vld [vmem:[%s669] sm:$0xff]
      %v1380 = vld [vmem:[%s669 + $0x8] sm:$0xf]
      %v1381 = vld [vmem:[%s669 + $0xc] sm:$0xff]
      %v1382 = vld [vmem:[%s669 + $0x14] sm:$0xf]
      %v1383 = vld [vmem:[%s669 + $0x18] sm:$0xff]
      %v1384 = vld [vmem:[%s669 + $0x20] sm:$0xf]
      %v1385 = vld [vmem:[%s669 + $0x24] sm:$0xff]
      %v1386 = vld [vmem:[%s669 + $0x2c] sm:$0xf]
      %v1387 = vld [vmem:[%s669 + $0x30] sm:$0xff]
      %v1388 = vld [vmem:[%s669 + $0x38] sm:$0xf]
      %v1389 = vld [vmem:[%s669 + $0x3c] sm:$0xff]
      %v1390 = vld [vmem:[%s669 + $0x44] sm:$0xf]
      %v1391 = vld [vmem:[%s669 + $0x48] sm:$0xff]
      %v1392 = vld [vmem:[%s669 + $0x50] sm:$0xf]
      %v1393 = vld [vmem:[%s669 + $0x54] sm:$0xff]
      %v1394 = vld [vmem:[%s669 + $0x5c] sm:$0xf]
      %v1395 = vld [vmem:[%s669 + $0x60] sm:$0xff]
      %v1396 = vld [vmem:[%s669 + $0x68] sm:$0xf]
      %v1397 = vld [vmem:[%s669 + $0x6c] sm:$0xff]
      %v1398 = vld [vmem:[%s669 + $0x74] sm:$0xf]
      %v1399 = vld [vmem:[%s669 + $0x78] sm:$0xff]
      %v1400 = vld [vmem:[%s669 + $0x80] sm:$0xf]
      %v1401 = vld [vmem:[%s669 + $0x84] sm:$0xff]
      %v1402 = vld [vmem:[%s669 + $0x8c] sm:$0xf]
      %v1403 = vld [vmem:[%s669 + $0x90] sm:$0xff]
      %v1404 = vld [vmem:[%s669 + $0x98] sm:$0xf]
      %v1405 = vld [vmem:[%s669 + $0x9c] sm:$0xff]
      %v1406 = vld [vmem:[%s669 + $0xa4] sm:$0xf]
      %v1407 = vld [vmem:[%s669 + $0xa8] sm:$0xff]
      %v1408 = vld [vmem:[%s669 + $0xb0] sm:$0xf]
      %v1409 = vld [vmem:[%s669 + $0xb4] sm:$0xff]
      %v1410 = vld [vmem:[%s669 + $0xbc] sm:$0xf]
      %v1443 = vunpack.c.l.b16 %v1379
      %v1444 = vunpack.c.h.b16 %v1379
      %v1445 = vunpack.c.l.b16 %v1380
      %v1446 = vunpack.c.l.b16 %v1381
      %v1447 = vunpack.c.h.b16 %v1381
      %v1448 = vunpack.c.l.b16 %v1382
      %v1449 = vunpack.c.l.b16 %v1383
      %v1450 = vunpack.c.h.b16 %v1383
      %v1451 = vunpack.c.l.b16 %v1384
      %v1452 = vunpack.c.l.b16 %v1385
      %v1453 = vunpack.c.h.b16 %v1385
      %v1454 = vunpack.c.l.b16 %v1386
      %v1455 = vunpack.c.l.b16 %v1387
      %v1456 = vunpack.c.h.b16 %v1387
      %v1457 = vunpack.c.l.b16 %v1388
      %v1458 = vunpack.c.l.b16 %v1389
      %v1459 = vunpack.c.h.b16 %v1389
      %v1460 = vunpack.c.l.b16 %v1390
      %v1461 = vunpack.c.l.b16 %v1391
      %v1462 = vunpack.c.h.b16 %v1391
      %v1463 = vunpack.c.l.b16 %v1392
      %v1464 = vunpack.c.l.b16 %v1393
      %v1465 = vunpack.c.h.b16 %v1393
      %v1466 = vunpack.c.l.b16 %v1394
      %v1467 = vunpack.c.l.b16 %v1395
      %v1468 = vunpack.c.h.b16 %v1395
      %v1469 = vunpack.c.l.b16 %v1396
      %v1470 = vunpack.c.l.b16 %v1397
      %v1471 = vunpack.c.h.b16 %v1397
      %v1472 = vunpack.c.l.b16 %v1398
      %v1473 = vunpack.c.l.b16 %v1399
      %v1474 = vunpack.c.h.b16 %v1399
      %v1475 = vunpack.c.l.b16 %v1400
      %v1476 = vunpack.c.l.b16 %v1401
      %v1477 = vunpack.c.h.b16 %v1401
      %v1478 = vunpack.c.l.b16 %v1402
      %v1479 = vunpack.c.l.b16 %v1403
      %v1480 = vunpack.c.h.b16 %v1403
      %v1481 = vunpack.c.l.b16 %v1404
      %v1482 = vunpack.c.l.b16 %v1405
      %v1483 = vunpack.c.h.b16 %v1405
      %v1484 = vunpack.c.l.b16 %v1406
      %v1485 = vunpack.c.l.b16 %v1407
      %v1486 = vunpack.c.h.b16 %v1407
      %v1487 = vunpack.c.l.b16 %v1408
      %v1488 = vunpack.c.l.b16 %v1409
      %v1489 = vunpack.c.h.b16 %v1409
      %v1490 = vunpack.c.l.b16 %v1410
      %v1491 = vpack.c.b16 %v1446, %v1443
      %v1492 = vpack.c.b16 %v1447, %v1444
      %v1493 = vpack.c.b16 %v1448, %v1445
      %v1494 = vpack.c.b16 %v1452, %v1449
      %v1495 = vpack.c.b16 %v1453, %v1450
      %v1496 = vpack.c.b16 %v1454, %v1451
      %v1497 = vpack.c.b16 %v1458, %v1455
      %v1498 = vpack.c.b16 %v1459, %v1456
      %v1499 = vpack.c.b16 %v1460, %v1457
      %v1500 = vpack.c.b16 %v1464, %v1461
      %v1501 = vpack.c.b16 %v1465, %v1462
      %v1502 = vpack.c.b16 %v1466, %v1463
      %v1503 = vpack.c.b16 %v1470, %v1467
      %v1504 = vpack.c.b16 %v1471, %v1468
      %v1505 = vpack.c.b16 %v1472, %v1469
      %v1506 = vpack.c.b16 %v1476, %v1473
      %v1507 = vpack.c.b16 %v1477, %v1474
      %v1508 = vpack.c.b16 %v1478, %v1475
      %v1509 = vpack.c.b16 %v1482, %v1479
      %v1510 = vpack.c.b16 %v1483, %v1480
      %v1511 = vpack.c.b16 %v1484, %v1481
      %v1512 = vpack.c.b16 %v1488, %v1485
      %v1513 = vpack.c.b16 %v1489, %v1486
      %v1514 = vpack.c.b16 %v1490, %v1487
      %1539 = vmatpush.bf16.msra.mxu0 %v1512
      %1540 = vmatpush.bf16.msra.mxu0 %v1509
      %1541 = vmatpush.bf16.msra.mxu0 %v1506
      %1542 = vmatpush.bf16.msra.mxu0 %v1503
      %1543 = vmatpush.bf16.msra.mxu0 %v1500
      %1544 = vmatpush.bf16.msra.mxu0 %v1497
      %1545 = vmatpush.bf16.msra.mxu0 %v1494
      %1546 = vmatpush.bf16.msra.mxu0 %v1491
      %1547 = vmatmul.bf16.gmra.mxu0 %v1377
      %v1548 = vpop.f32.mrf.mxu0
      %v1549 = vadd.f32 0.0, %v1548
      %v1550 = vpop.f32.mrf.mxu0
      %v1551 = vadd.f32 0.0, %v1550
      %1552 = vmatmul.bf16.gmra.mxu0 %v1378
      %v1553 = vpop.f32.mrf.mxu0
      %v1554 = vadd.f32 0.0, %v1553
      %v1555 = vpop.f32.mrf.mxu0
      %v1556 = vadd.f32 0.0, %v1555
      %1557 = vdwg.mxu0
      %1558 = vmatpush.bf16.msra.mxu0 %v1513
      %1559 = vmatpush.bf16.msra.mxu0 %v1510
      %1560 = vmatpush.bf16.msra.mxu0 %v1507
      %1561 = vmatpush.bf16.msra.mxu0 %v1504
      %1562 = vmatpush.bf16.msra.mxu0 %v1501
      %1563 = vmatpush.bf16.msra.mxu0 %v1498
      %1564 = vmatpush.bf16.msra.mxu0 %v1495
      %1565 = vmatpush.bf16.msra.mxu0 %v1492
      %1566 = vmatmul.bf16.gmra.mxu0 %v1377
      %v1567 = vpop.f32.mrf.mxu0
      %v1568 = vadd.f32 0.0, %v1567
      %v1569 = vpop.f32.mrf.mxu0
      %v1570 = vadd.f32 0.0, %v1569
      %1571 = vmatmul.bf16.gmra.mxu0 %v1378
      %v1572 = vpop.f32.mrf.mxu0
      %v1573 = vadd.f32 0.0, %v1572
      %v1574 = vpop.f32.mrf.mxu0
      %v1575 = vadd.f32 0.0, %v1574
      %1576 = vdwg.mxu0
      %1577 = vmatpush.bf16.msra.mxu0 %v1514
      %1578 = vmatpush.bf16.msra.mxu0 %v1511
      %1579 = vmatpush.bf16.msra.mxu0 %v1508
      %1580 = vmatpush.bf16.msra.mxu0 %v1505
      %1581 = vmatpush.bf16.msra.mxu0 %v1502
      %1582 = vmatpush.bf16.msra.mxu0 %v1499
      %1583 = vmatpush.bf16.msra.mxu0 %v1496
      %1584 = vmatpush.bf16.msra.mxu0 %v1493
      %1585 = vmatmul.bf16.gmra.mxu0 %v1377
      %v1586 = vpop.f32.mrf.mxu0
      %v1587 = vadd.f32 0.0, %v1586
      %v1588 = vpop.f32.mrf.mxu0
      %v1589 = vadd.f32 0.0, %v1588
      %1590 = vmatmul.bf16.gmra.mxu0 %v1378
      %v1591 = vpop.f32.mrf.mxu0
      %v1592 = vadd.f32 0.0, %v1591
      %v1593 = vpop.f32.mrf.mxu0
      %v1594 = vadd.f32 0.0, %v1593
      %1595 = vdwg.mxu0
      %v1596 = vperm.slane %v1278, 4
      %v1597 = vadd.f32 %v1549, %v1596
      %v1598 = vadd.f32 %v1551, %v1596
      %v1599 = vadd.f32 %v1554, %v1596
      %v1600 = vadd.f32 %v1556, %v1596
      %v1601 = vmul.f32 %v1597, 0.17677669
      %v1602 = vmul.f32 %v1598, 0.17677669
      %v1603 = vmul.f32 %v1599, 0.17677669
      %v1604 = vmul.f32 %v1600, 0.17677669
      %v1605 = vperm.slane %v1278, 5
      %v1606 = vadd.f32 %v1568, %v1605
      %v1607 = vadd.f32 %v1570, %v1605
      %v1608 = vadd.f32 %v1573, %v1605
      %v1609 = vadd.f32 %v1575, %v1605
      %v1610 = vperm.slane %v1278, 6
      %v1611 = vadd.f32 %v1587, %v1610
      %v1612 = vadd.f32 %v1589, %v1610
      %v1613 = vadd.f32 %v1592, %v1610
      %v1614 = vadd.f32 %v1594, %v1610
      %v1615 = vlaneseq
      %v1616 = vand.u32 %v1615, 127
      %vm1617 = vcmp.ge.s32.totalorder %v1616, 0
      %vm1618 = vcmp.ge.s32.totalorder %v1616, 32
      %vm1619 = vcmp.ge.s32.totalorder %v1616, 64
      %vm1620 = vcmp.ge.s32.totalorder %v1616, 96
      %vm1621 = vcmp.lt.s32.totalorder %v1616, 32
      %vm1622 = vcmp.lt.s32.totalorder %v1616, 64
      %vm1623 = vcmp.lt.s32.totalorder %v1616, 96
      %vm1624 = vcmp.lt.s32.totalorder %v1616, 128
      %vm1625 = vmand %vm1617, %vm1621
      %vm1626 = vmand %vm1618, %vm1622
      %vm1627 = vmand %vm1619, %vm1623
      %vm1628 = vmand %vm1620, %vm1624
      %v1629 = vsel %vm1625, 1, 0
      %v1630 = vsel %vm1626, 1, 0
      %v1631 = vsel %vm1627, 1, 0
      %v1632 = vsel %vm1628, 1, 0
      %v1633 = vcvt.s32.f32 %v1629
      %v1634 = vcvt.s32.f32 %v1630
      %v1635 = vcvt.s32.f32 %v1631
      %v1636 = vcvt.s32.f32 %v1632
      %v1637 = vmul.f32 %v1601, %v1633
      %v1638 = vmul.f32 %v1602, %v1633
      %v1639 = vmul.f32 %v1601, %v1634
      %v1640 = vmul.f32 %v1602, %v1634
      %v1641 = vmul.f32 %v1601, %v1635
      %v1642 = vmul.f32 %v1602, %v1635
      %v1643 = vmul.f32 %v1601, %v1636
      %v1644 = vmul.f32 %v1602, %v1636
      %v1645 = vmul.f32 %v1603, %v1633
      %v1646 = vmul.f32 %v1604, %v1633
      %v1647 = vmul.f32 %v1603, %v1634
      %v1648 = vmul.f32 %v1604, %v1634
      %v1649 = vmul.f32 %v1603, %v1635
      %v1650 = vmul.f32 %v1604, %v1635
      %v1651 = vmul.f32 %v1603, %v1636
      %v1652 = vmul.f32 %v1604, %v1636
      %v1653 = vpack.c.bf16 %v1637, %v1637
      %v1654 = vpack.c.bf16 %v1638, %v1638
      %v1655 = vpack.c.bf16 %v1639, %v1639
      %v1656 = vpack.c.bf16 %v1640, %v1640
      %v1657 = vpack.c.bf16 %v1641, %v1641
      %v1658 = vpack.c.bf16 %v1642, %v1642
      %v1659 = vpack.c.bf16 %v1643, %v1643
      %v1660 = vpack.c.bf16 %v1644, %v1644
      %v1661 = vpack.c.bf16 %v1645, %v1645
      %v1662 = vpack.c.bf16 %v1646, %v1646
      %v1663 = vpack.c.bf16 %v1647, %v1647
      %v1664 = vpack.c.bf16 %v1648, %v1648
      %v1665 = vpack.c.bf16 %v1649, %v1649
      %v1666 = vpack.c.bf16 %v1650, %v1650
      %v1667 = vpack.c.bf16 %v1651, %v1651
      %v1668 = vpack.c.bf16 %v1652, %v1652
      %v1669 = vpack.c.bf16 %v1606, %v1606
      %v1670 = vpack.c.bf16 %v1607, %v1607
      %v1671 = vpack.c.bf16 %v1608, %v1608
      %v1672 = vpack.c.bf16 %v1609, %v1609
      %v1673 = vpack.c.bf16 %v1611, %v1611
      %v1674 = vpack.c.bf16 %v1612, %v1612
      %v1675 = vpack.c.bf16 %v1613, %v1613
      %v1676 = vpack.c.bf16 %v1614, %v1614
      %v1679 = vunpack.c.l.b16 %v1653
      %v1680 = vunpack.c.l.b16 %v1654
      %v1681 = vpack.c.b16 %v1680, %v1679
      %v1685 = vunpack.c.l.b16 %v1669
      %v1686 = vunpack.c.l.b16 %v1670
      %v1687 = vpack.c.b16 %v1686, %v1685
      %1689 = vmatpush.bf16.xpose.msra.mxu0 0
      %1690 = vmatpush.bf16.xpose.msra.mxu0 0
      %1691 = vmatpush.bf16.xpose.msra.mxu0 0
      %1692 = vmatpush.bf16.xpose.msra.mxu0 0
      %1693 = vmatpush.bf16.xpose.msra.mxu0 0
      %1694 = vmatpush.bf16.xpose.msra.mxu0 0
      %1695 = vmatpush.bf16.xpose.msra.mxu0 0
      %1696 = vmatpush.bf16.xpose.msra.mxu0 %v1687
      %1697 = vmatmul.bf16.gmra.mxu0 %v1681
      %v1698 = vpop.f32.mrf.mxu0
      %v1699 = vadd.f32 0.0, %v1698
      %v1700 = vpop.f32.mrf.mxu0
      %v1701 = vadd.f32 0.0, %v1700
      %1702 = vdwg.mxu0
      %v1705 = vunpack.c.l.b16 %v1655
      %v1706 = vunpack.c.l.b16 %v1656
      %v1707 = vpack.c.b16 %v1706, %v1705
      %1709 = vmatpush.bf16.xpose.msra.mxu0 0
      %1710 = vmatpush.bf16.xpose.msra.mxu0 0
      %1711 = vmatpush.bf16.xpose.msra.mxu0 0
      %1712 = vmatpush.bf16.xpose.msra.mxu0 0
      %1713 = vmatpush.bf16.xpose.msra.mxu0 0
      %1714 = vmatpush.bf16.xpose.msra.mxu0 0
      %1715 = vmatpush.bf16.xpose.msra.mxu0 0
      %1716 = vmatpush.bf16.xpose.msra.mxu0 %v1687
      %1717 = vmatmul.bf16.gmra.mxu0 %v1707
      %v1718 = vpop.f32.mrf.mxu0
      %v1719 = vadd.f32 0.0, %v1718
      %v1720 = vpop.f32.mrf.mxu0
      %v1721 = vadd.f32 0.0, %v1720
      %1722 = vdwg.mxu0
      %v1725 = vunpack.c.l.b16 %v1657
      %v1726 = vunpack.c.l.b16 %v1658
      %v1727 = vpack.c.b16 %v1726, %v1725
      %1729 = vmatpush.bf16.xpose.msra.mxu0 0
      %1730 = vmatpush.bf16.xpose.msra.mxu0 0
      %1731 = vmatpush.bf16.xpose.msra.mxu0 0
      %1732 = vmatpush.bf16.xpose.msra.mxu0 0
      %1733 = vmatpush.bf16.xpose.msra.mxu0 0
      %1734 = vmatpush.bf16.xpose.msra.mxu0 0
      %1735 = vmatpush.bf16.xpose.msra.mxu0 0
      %1736 = vmatpush.bf16.xpose.msra.mxu0 %v1687
      %1737 = vmatmul.bf16.gmra.mxu0 %v1727
      %v1738 = vpop.f32.mrf.mxu0
      %v1739 = vadd.f32 0.0, %v1738
      %v1740 = vpop.f32.mrf.mxu0
      %v1741 = vadd.f32 0.0, %v1740
      %1742 = vdwg.mxu0
      %v1745 = vunpack.c.l.b16 %v1659
      %v1746 = vunpack.c.l.b16 %v1660
      %v1747 = vpack.c.b16 %v1746, %v1745
      %1749 = vmatpush.bf16.xpose.msra.mxu0 0
      %1750 = vmatpush.bf16.xpose.msra.mxu0 0
      %1751 = vmatpush.bf16.xpose.msra.mxu0 0
      %1752 = vmatpush.bf16.xpose.msra.mxu0 0
      %1753 = vmatpush.bf16.xpose.msra.mxu0 0
      %1754 = vmatpush.bf16.xpose.msra.mxu0 0
      %1755 = vmatpush.bf16.xpose.msra.mxu0 0
      %1756 = vmatpush.bf16.xpose.msra.mxu0 %v1687
      %1757 = vmatmul.bf16.gmra.mxu0 %v1747
      %v1758 = vpop.f32.mrf.mxu0
      %v1759 = vadd.f32 0.0, %v1758
      %v1760 = vpop.f32.mrf.mxu0
      %v1761 = vadd.f32 0.0, %v1760
      %1762 = vdwg.mxu0
      %v1765 = vunpack.c.l.b16 %v1661
      %v1766 = vunpack.c.l.b16 %v1662
      %v1767 = vpack.c.b16 %v1766, %v1765
      %v1771 = vunpack.c.l.b16 %v1671
      %v1772 = vunpack.c.l.b16 %v1672
      %v1773 = vpack.c.b16 %v1772, %v1771
      %1775 = vmatpush.bf16.xpose.msra.mxu0 0
      %1776 = vmatpush.bf16.xpose.msra.mxu0 0
      %1777 = vmatpush.bf16.xpose.msra.mxu0 0
      %1778 = vmatpush.bf16.xpose.msra.mxu0 0
      %1779 = vmatpush.bf16.xpose.msra.mxu0 0
      %1780 = vmatpush.bf16.xpose.msra.mxu0 0
      %1781 = vmatpush.bf16.xpose.msra.mxu0 0
      %1782 = vmatpush.bf16.xpose.msra.mxu0 %v1773
      %1783 = vmatmul.bf16.gmra.mxu0 %v1767
      %v1784 = vpop.f32.mrf.mxu0
      %v1785 = vadd.f32 0.0, %v1784
      %v1786 = vpop.f32.mrf.mxu0
      %v1787 = vadd.f32 0.0, %v1786
      %1788 = vdwg.mxu0
      %v1791 = vunpack.c.l.b16 %v1663
      %v1792 = vunpack.c.l.b16 %v1664
      %v1793 = vpack.c.b16 %v1792, %v1791
      %1795 = vmatpush.bf16.xpose.msra.mxu0 0
      %1796 = vmatpush.bf16.xpose.msra.mxu0 0
      %1797 = vmatpush.bf16.xpose.msra.mxu0 0
      %1798 = vmatpush.bf16.xpose.msra.mxu0 0
      %1799 = vmatpush.bf16.xpose.msra.mxu0 0
      %1800 = vmatpush.bf16.xpose.msra.mxu0 0
      %1801 = vmatpush.bf16.xpose.msra.mxu0 0
      %1802 = vmatpush.bf16.xpose.msra.mxu0 %v1773
      %1803 = vmatmul.bf16.gmra.mxu0 %v1793
      %v1804 = vpop.f32.mrf.mxu0
      %v1805 = vadd.f32 0.0, %v1804
      %v1806 = vpop.f32.mrf.mxu0
      %v1807 = vadd.f32 0.0, %v1806
      %1808 = vdwg.mxu0
      %v1811 = vunpack.c.l.b16 %v1665
      %v1812 = vunpack.c.l.b16 %v1666
      %v1813 = vpack.c.b16 %v1812, %v1811
      %1815 = vmatpush.bf16.xpose.msra.mxu0 0
      %1816 = vmatpush.bf16.xpose.msra.mxu0 0
      %1817 = vmatpush.bf16.xpose.msra.mxu0 0
      %1818 = vmatpush.bf16.xpose.msra.mxu0 0
      %1819 = vmatpush.bf16.xpose.msra.mxu0 0
      %1820 = vmatpush.bf16.xpose.msra.mxu0 0
      %1821 = vmatpush.bf16.xpose.msra.mxu0 0
      %1822 = vmatpush.bf16.xpose.msra.mxu0 %v1773
      %1823 = vmatmul.bf16.gmra.mxu0 %v1813
      %v1824 = vpop.f32.mrf.mxu0
      %v1825 = vadd.f32 0.0, %v1824
      %v1826 = vpop.f32.mrf.mxu0
      %v1827 = vadd.f32 0.0, %v1826
      %1828 = vdwg.mxu0
      %v1831 = vunpack.c.l.b16 %v1667
      %v1832 = vunpack.c.l.b16 %v1668
      %v1833 = vpack.c.b16 %v1832, %v1831
      %1835 = vmatpush.bf16.xpose.msra.mxu0 0
      %1836 = vmatpush.bf16.xpose.msra.mxu0 0
      %1837 = vmatpush.bf16.xpose.msra.mxu0 0
      %1838 = vmatpush.bf16.xpose.msra.mxu0 0
      %1839 = vmatpush.bf16.xpose.msra.mxu0 0
      %1840 = vmatpush.bf16.xpose.msra.mxu0 0
      %1841 = vmatpush.bf16.xpose.msra.mxu0 0
      %1842 = vmatpush.bf16.xpose.msra.mxu0 %v1773
      %1843 = vmatmul.bf16.gmra.mxu0 %v1833
      %v1844 = vpop.f32.mrf.mxu0
      %v1845 = vadd.f32 0.0, %v1844
      %v1846 = vpop.f32.mrf.mxu0
      %v1847 = vadd.f32 0.0, %v1846
      %1848 = vdwg.mxu0
      %vm1849 = vcmask 130048
      %v1850 = vsel %vm1849, %v1699, -inf
      %1851 = vmax.xlane.f32.xlu0 %v1850
      %v1852 = vpop.xlane.xlu0 %1851
      %v1853 = vsel %vm1849, %v1701, -inf
      %1854 = vmax.xlane.f32.xlu0 %v1853
      %v1855 = vpop.xlane.xlu0 %1854
      %v1856 = vsel %vm1849, %v1719, -inf
      %1857 = vmax.xlane.f32.xlu0 %v1856
      %v1858 = vpop.xlane.xlu0 %1857
      %v1859 = vsel %vm1849, %v1721, -inf
      %1860 = vmax.xlane.f32.xlu0 %v1859
      %v1861 = vpop.xlane.xlu0 %1860
      %v1862 = vsel %vm1849, %v1739, -inf
      %1863 = vmax.xlane.f32.xlu0 %v1862
      %v1864 = vpop.xlane.xlu0 %1863
      %v1865 = vsel %vm1849, %v1741, -inf
      %1866 = vmax.xlane.f32.xlu0 %v1865
      %v1867 = vpop.xlane.xlu0 %1866
      %v1868 = vsel %vm1849, %v1759, -inf
      %1869 = vmax.xlane.f32.xlu0 %v1868
      %v1870 = vpop.xlane.xlu0 %1869
      %v1871 = vsel %vm1849, %v1761, -inf
      %1872 = vmax.xlane.f32.xlu0 %v1871
      %v1873 = vpop.xlane.xlu0 %1872
      %v1874 = vsel %vm1849, %v1785, -inf
      %1875 = vmax.xlane.f32.xlu0 %v1874
      %v1876 = vpop.xlane.xlu0 %1875
      %v1877 = vsel %vm1849, %v1787, -inf
      %1878 = vmax.xlane.f32.xlu0 %v1877
      %v1879 = vpop.xlane.xlu0 %1878
      %v1880 = vsel %vm1849, %v1805, -inf
      %1881 = vmax.xlane.f32.xlu0 %v1880
      %v1882 = vpop.xlane.xlu0 %1881
      %v1883 = vsel %vm1849, %v1807, -inf
      %1884 = vmax.xlane.f32.xlu0 %v1883
      %v1885 = vpop.xlane.xlu0 %1884
      %v1886 = vsel %vm1849, %v1825, -inf
      %1887 = vmax.xlane.f32.xlu0 %v1886
      %v1888 = vpop.xlane.xlu0 %1887
      %v1889 = vsel %vm1849, %v1827, -inf
      %1890 = vmax.xlane.f32.xlu0 %v1889
      %v1891 = vpop.xlane.xlu0 %1890
      %v1892 = vsel %vm1849, %v1845, -inf
      %1893 = vmax.xlane.f32.xlu0 %v1892
      %v1894 = vpop.xlane.xlu0 %1893
      %v1895 = vsel %vm1849, %v1847, -inf
      %1896 = vmax.xlane.f32.xlu0 %v1895
      %v1897 = vpop.xlane.xlu0 %1896
      %v1898 = vsub.f32 %v1699, %v1852
      %v1899 = vsub.f32 %v1701, %v1855
      %v1900 = vsub.f32 %v1719, %v1858
      %v1901 = vsub.f32 %v1721, %v1861
      %v1902 = vsub.f32 %v1739, %v1864
      %v1903 = vsub.f32 %v1741, %v1867
      %v1904 = vsub.f32 %v1759, %v1870
      %v1905 = vsub.f32 %v1761, %v1873
      %v1906 = vsub.f32 %v1785, %v1876
      %v1907 = vsub.f32 %v1787, %v1879
      %v1908 = vsub.f32 %v1805, %v1882
      %v1909 = vsub.f32 %v1807, %v1885
      %v1910 = vsub.f32 %v1825, %v1888
      %v1911 = vsub.f32 %v1827, %v1891
      %v1912 = vsub.f32 %v1845, %v1894
      %v1913 = vsub.f32 %v1847, %v1897
      %v1914 = vmul.f32 %v1898, 1.442695
      %v1915 = vpow.pop %v1914
      %v1916 = vmul.f32 %v1899, 1.442695
      %v1917 = vpow.pop %v1916
      %v1918 = vmul.f32 %v1900, 1.442695
      %v1919 = vpow.pop %v1918
      %v1920 = vmul.f32 %v1901, 1.442695
      %v1921 = vpow.pop %v1920
      %v1922 = vmul.f32 %v1902, 1.442695
      %v1923 = vpow.pop %v1922
      %v1924 = vmul.f32 %v1903, 1.442695
      %v1925 = vpow.pop %v1924
      %v1926 = vmul.f32 %v1904, 1.442695
      %v1927 = vpow.pop %v1926
      %v1928 = vmul.f32 %v1905, 1.442695
      %v1929 = vpow.pop %v1928
      %v1930 = vmul.f32 %v1906, 1.442695
      %v1931 = vpow.pop %v1930
      %v1932 = vmul.f32 %v1907, 1.442695
      %v1933 = vpow.pop %v1932
      %v1934 = vmul.f32 %v1908, 1.442695
      %v1935 = vpow.pop %v1934
      %v1936 = vmul.f32 %v1909, 1.442695
      %v1937 = vpow.pop %v1936
      %v1938 = vmul.f32 %v1910, 1.442695
      %v1939 = vpow.pop %v1938
      %v1940 = vmul.f32 %v1911, 1.442695
      %v1941 = vpow.pop %v1940
      %v1942 = vmul.f32 %v1912, 1.442695
      %v1943 = vpow.pop %v1942
      %v1944 = vmul.f32 %v1913, 1.442695
      %v1945 = vpow.pop %v1944
      %v1946 = vsel %vm1849, %v1915, 0.0
      %1947 = vadd.xlane.f32.xlu0 %v1946
      %v1948 = vpop.xlane.xlu0 %1947
      %v1949 = vsel %vm1849, %v1917, 0.0
      %1950 = vadd.xlane.f32.xlu0 %v1949
      %v1951 = vpop.xlane.xlu0 %1950
      %v1952 = vsel %vm1849, %v1919, 0.0
      %1953 = vadd.xlane.f32.xlu0 %v1952
      %v1954 = vpop.xlane.xlu0 %1953
      %v1955 = vsel %vm1849, %v1921, 0.0
      %1956 = vadd.xlane.f32.xlu0 %v1955
      %v1957 = vpop.xlane.xlu0 %1956
      %v1958 = vsel %vm1849, %v1923, 0.0
      %1959 = vadd.xlane.f32.xlu0 %v1958
      %v1960 = vpop.xlane.xlu0 %1959
      %v1961 = vsel %vm1849, %v1925, 0.0
      %1962 = vadd.xlane.f32.xlu0 %v1961
      %v1963 = vpop.xlane.xlu0 %1962
      %v1964 = vsel %vm1849, %v1927, 0.0
      %1965 = vadd.xlane.f32.xlu0 %v1964
      %v1966 = vpop.xlane.xlu0 %1965
      %v1967 = vsel %vm1849, %v1929, 0.0
      %1968 = vadd.xlane.f32.xlu0 %v1967
      %v1969 = vpop.xlane.xlu0 %1968
      %v1970 = vsel %vm1849, %v1931, 0.0
      %1971 = vadd.xlane.f32.xlu0 %v1970
      %v1972 = vpop.xlane.xlu0 %1971
      %v1973 = vsel %vm1849, %v1933, 0.0
      %1974 = vadd.xlane.f32.xlu0 %v1973
      %v1975 = vpop.xlane.xlu0 %1974
      %v1976 = vsel %vm1849, %v1935, 0.0
      %1977 = vadd.xlane.f32.xlu0 %v1976
      %v1978 = vpop.xlane.xlu0 %1977
      %v1979 = vsel %vm1849, %v1937, 0.0
      %1980 = vadd.xlane.f32.xlu0 %v1979
      %v1981 = vpop.xlane.xlu0 %1980
      %v1982 = vsel %vm1849, %v1939, 0.0
      %1983 = vadd.xlane.f32.xlu0 %v1982
      %v1984 = vpop.xlane.xlu0 %1983
      %v1985 = vsel %vm1849, %v1941, 0.0
      %1986 = vadd.xlane.f32.xlu0 %v1985
      %v1987 = vpop.xlane.xlu0 %1986
      %v1988 = vsel %vm1849, %v1943, 0.0
      %1989 = vadd.xlane.f32.xlu0 %v1988
      %v1990 = vpop.xlane.xlu0 %1989
      %v1991 = vsel %vm1849, %v1945, 0.0
      %1992 = vadd.xlane.f32.xlu0 %v1991
      %v1993 = vpop.xlane.xlu0 %1992
      %v1994 = vrcp.pop %v1948
      %v1995 = vrcp.pop %v1951
      %v1996 = vrcp.pop %v1954
      %v1997 = vrcp.pop %v1957
      %v1998 = vrcp.pop %v1960
      %v1999 = vrcp.pop %v1963
      %v2000 = vrcp.pop %v1966
      %v2001 = vrcp.pop %v1969
      %v2002 = vrcp.pop %v1972
      %v2003 = vrcp.pop %v1975
      %v2004 = vrcp.pop %v1978
      %v2005 = vrcp.pop %v1981
      %v2006 = vrcp.pop %v1984
      %v2007 = vrcp.pop %v1987
      %v2008 = vrcp.pop %v1990
      %v2009 = vrcp.pop %v1993
      %v2010 = vmul.f32 %v1915, %v1994
      %v2011 = vmul.f32 %v1917, %v1995
      %v2012 = vmul.f32 %v1919, %v1996
      %v2013 = vmul.f32 %v1921, %v1997
      %v2014 = vmul.f32 %v1923, %v1998
      %v2015 = vmul.f32 %v1925, %v1999
      %v2016 = vmul.f32 %v1927, %v2000
      %v2017 = vmul.f32 %v1929, %v2001
      %v2018 = vmul.f32 %v1931, %v2002
      %v2019 = vmul.f32 %v1933, %v2003
      %v2020 = vmul.f32 %v1935, %v2004
      %v2021 = vmul.f32 %v1937, %v2005
      %v2022 = vmul.f32 %v1939, %v2006
      %v2023 = vmul.f32 %v1941, %v2007
      %v2024 = vmul.f32 %v1943, %v2008
      %v2025 = vmul.f32 %v1945, %v2009
      %v2026 = vpack.c.bf16 %v2010, %v2010
      %v2027 = vpack.c.bf16 %v2011, %v2011
      %v2028 = vpack.c.bf16 %v2012, %v2012
      %v2029 = vpack.c.bf16 %v2013, %v2013
      %v2030 = vpack.c.bf16 %v2014, %v2014
      %v2031 = vpack.c.bf16 %v2015, %v2015
      %v2032 = vpack.c.bf16 %v2016, %v2016
      %v2033 = vpack.c.bf16 %v2017, %v2017
      %v2034 = vpack.c.bf16 %v2018, %v2018
      %v2035 = vpack.c.bf16 %v2019, %v2019
      %v2036 = vpack.c.bf16 %v2020, %v2020
      %v2037 = vpack.c.bf16 %v2021, %v2021
      %v2038 = vpack.c.bf16 %v2022, %v2022
      %v2039 = vpack.c.bf16 %v2023, %v2023
      %v2040 = vpack.c.bf16 %v2024, %v2024
      %v2041 = vpack.c.bf16 %v2025, %v2025
      %v2044 = vunpack.c.l.b16 %v2026
      %v2045 = vunpack.c.l.b16 %v2027
      %v2046 = vpack.c.b16 %v2045, %v2044
      %v2049 = vunpack.c.l.b16 %v1673
      %v2050 = vunpack.c.l.b16 %v1674
      %v2051 = vpack.c.b16 %v2050, %v2049
      %v2054 = vsel %vm1849, %v2046, 0
      %2056 = vmatpush.bf16.msra.mxu0 0
      %2057 = vmatpush.bf16.msra.mxu0 0
      %2058 = vmatpush.bf16.msra.mxu0 0
      %2059 = vmatpush.bf16.msra.mxu0 0
      %2060 = vmatpush.bf16.msra.mxu0 0
      %2061 = vmatpush.bf16.msra.mxu0 0
      %2062 = vmatpush.bf16.msra.mxu0 0
      %2063 = vmatpush.bf16.msra.mxu0 %v2051
      %2064 = vmatmul.bf16.gmra.mxu0 %v2054
      %v2065 = vpop.f32.mrf.mxu0
      %v2066 = vadd.f32 0.0, %v2065
      %v2067 = vpop.f32.mrf.mxu0
      %v2068 = vadd.f32 0.0, %v2067
      %2069 = vdwg.mxu0
      %v2072 = vunpack.c.l.b16 %v2028
      %v2073 = vunpack.c.l.b16 %v2029
      %v2074 = vpack.c.b16 %v2073, %v2072
      %v2076 = vsel %vm1849, %v2074, 0
      %2078 = vmatpush.bf16.msra.mxu0 0
      %2079 = vmatpush.bf16.msra.mxu0 0
      %2080 = vmatpush.bf16.msra.mxu0 0
      %2081 = vmatpush.bf16.msra.mxu0 0
      %2082 = vmatpush.bf16.msra.mxu0 0
      %2083 = vmatpush.bf16.msra.mxu0 0
      %2084 = vmatpush.bf16.msra.mxu0 0
      %2085 = vmatpush.bf16.msra.mxu0 %v2051
      %2086 = vmatmul.bf16.gmra.mxu0 %v2076
      %v2087 = vpop.f32.mrf.mxu0
      %v2088 = vadd.f32 0.0, %v2087
      %v2089 = vpop.f32.mrf.mxu0
      %v2090 = vadd.f32 0.0, %v2089
      %2091 = vdwg.mxu0
      %v2094 = vunpack.c.l.b16 %v2030
      %v2095 = vunpack.c.l.b16 %v2031
      %v2096 = vpack.c.b16 %v2095, %v2094
      %v2098 = vsel %vm1849, %v2096, 0
      %2100 = vmatpush.bf16.msra.mxu0 0
      %2101 = vmatpush.bf16.msra.mxu0 0
      %2102 = vmatpush.bf16.msra.mxu0 0
      %2103 = vmatpush.bf16.msra.mxu0 0
      %2104 = vmatpush.bf16.msra.mxu0 0
      %2105 = vmatpush.bf16.msra.mxu0 0
      %2106 = vmatpush.bf16.msra.mxu0 0
      %2107 = vmatpush.bf16.msra.mxu0 %v2051
      %2108 = vmatmul.bf16.gmra.mxu0 %v2098
      %v2109 = vpop.f32.mrf.mxu0
      %v2110 = vadd.f32 0.0, %v2109
      %v2111 = vpop.f32.mrf.mxu0
      %v2112 = vadd.f32 0.0, %v2111
      %2113 = vdwg.mxu0
      %v2116 = vunpack.c.l.b16 %v2032
      %v2117 = vunpack.c.l.b16 %v2033
      %v2118 = vpack.c.b16 %v2117, %v2116
      %v2120 = vsel %vm1849, %v2118, 0
      %2122 = vmatpush.bf16.msra.mxu0 0
      %2123 = vmatpush.bf16.msra.mxu0 0
      %2124 = vmatpush.bf16.msra.mxu0 0
      %2125 = vmatpush.bf16.msra.mxu0 0
      %2126 = vmatpush.bf16.msra.mxu0 0
      %2127 = vmatpush.bf16.msra.mxu0 0
      %2128 = vmatpush.bf16.msra.mxu0 0
      %2129 = vmatpush.bf16.msra.mxu0 %v2051
      %2130 = vmatmul.bf16.gmra.mxu0 %v2120
      %v2131 = vpop.f32.mrf.mxu0
      %v2132 = vadd.f32 0.0, %v2131
      %v2133 = vpop.f32.mrf.mxu0
      %v2134 = vadd.f32 0.0, %v2133
      %2135 = vdwg.mxu0
      %v2138 = vunpack.c.l.b16 %v2034
      %v2139 = vunpack.c.l.b16 %v2035
      %v2140 = vpack.c.b16 %v2139, %v2138
      %v2143 = vunpack.c.l.b16 %v1675
      %v2144 = vunpack.c.l.b16 %v1676
      %v2145 = vpack.c.b16 %v2144, %v2143
      %v2148 = vsel %vm1849, %v2140, 0
      %2150 = vmatpush.bf16.msra.mxu0 0
      %2151 = vmatpush.bf16.msra.mxu0 0
      %2152 = vmatpush.bf16.msra.mxu0 0
      %2153 = vmatpush.bf16.msra.mxu0 0
      %2154 = vmatpush.bf16.msra.mxu0 0
      %2155 = vmatpush.bf16.msra.mxu0 0
      %2156 = vmatpush.bf16.msra.mxu0 0
      %2157 = vmatpush.bf16.msra.mxu0 %v2145
      %2158 = vmatmul.bf16.gmra.mxu0 %v2148
      %v2159 = vpop.f32.mrf.mxu0
      %v2160 = vadd.f32 0.0, %v2159
      %v2161 = vpop.f32.mrf.mxu0
      %v2162 = vadd.f32 0.0, %v2161
      %2163 = vdwg.mxu0
      %v2166 = vunpack.c.l.b16 %v2036
      %v2167 = vunpack.c.l.b16 %v2037
      %v2168 = vpack.c.b16 %v2167, %v2166
      %v2170 = vsel %vm1849, %v2168, 0
      %2172 = vmatpush.bf16.msra.mxu0 0
      %2173 = vmatpush.bf16.msra.mxu0 0
      %2174 = vmatpush.bf16.msra.mxu0 0
      %2175 = vmatpush.bf16.msra.mxu0 0
      %2176 = vmatpush.bf16.msra.mxu0 0
      %2177 = vmatpush.bf16.msra.mxu0 0
      %2178 = vmatpush.bf16.msra.mxu0 0
      %2179 = vmatpush.bf16.msra.mxu0 %v2145
      %2180 = vmatmul.bf16.gmra.mxu0 %v2170
      %v2181 = vpop.f32.mrf.mxu0
      %v2182 = vadd.f32 0.0, %v2181
      %v2183 = vpop.f32.mrf.mxu0
      %v2184 = vadd.f32 0.0, %v2183
      %2185 = vdwg.mxu0
      %v2188 = vunpack.c.l.b16 %v2038
      %v2189 = vunpack.c.l.b16 %v2039
      %v2190 = vpack.c.b16 %v2189, %v2188
      %v2192 = vsel %vm1849, %v2190, 0
      %2194 = vmatpush.bf16.msra.mxu0 0
      %2195 = vmatpush.bf16.msra.mxu0 0
      %2196 = vmatpush.bf16.msra.mxu0 0
      %2197 = vmatpush.bf16.msra.mxu0 0
      %2198 = vmatpush.bf16.msra.mxu0 0
      %2199 = vmatpush.bf16.msra.mxu0 0
      %2200 = vmatpush.bf16.msra.mxu0 0
      %2201 = vmatpush.bf16.msra.mxu0 %v2145
      %2202 = vmatmul.bf16.gmra.mxu0 %v2192
      %v2203 = vpop.f32.mrf.mxu0
      %v2204 = vadd.f32 0.0, %v2203
      %v2205 = vpop.f32.mrf.mxu0
      %v2206 = vadd.f32 0.0, %v2205
      %2207 = vdwg.mxu0
      %v2210 = vunpack.c.l.b16 %v2040
      %v2211 = vunpack.c.l.b16 %v2041
      %v2212 = vpack.c.b16 %v2211, %v2210
      %v2214 = vsel %vm1849, %v2212, 0
      %2216 = vmatpush.bf16.msra.mxu0 0
      %2217 = vmatpush.bf16.msra.mxu0 0
      %2218 = vmatpush.bf16.msra.mxu0 0
      %2219 = vmatpush.bf16.msra.mxu0 0
      %2220 = vmatpush.bf16.msra.mxu0 0
      %2221 = vmatpush.bf16.msra.mxu0 0
      %2222 = vmatpush.bf16.msra.mxu0 0
      %2223 = vmatpush.bf16.msra.mxu0 %v2145
      %2224 = vmatmul.bf16.gmra.mxu0 %v2214
      %v2225 = vpop.f32.mrf.mxu0
      %v2226 = vadd.f32 0.0, %v2225
      %v2227 = vpop.f32.mrf.mxu0
      %v2228 = vadd.f32 0.0, %v2227
      %2229 = vdwg.mxu0
      %v2230 = vmul.f32 %v2066, %v1633
      %v2231 = vmul.f32 %v2068, %v1633
      %v2232 = vmul.f32 %v2088, %v1634
      %v2233 = vmul.f32 %v2090, %v1634
      %v2234 = vmul.f32 %v2110, %v1635
      %v2235 = vmul.f32 %v2112, %v1635
      %v2236 = vmul.f32 %v2132, %v1636
      %v2237 = vmul.f32 %v2134, %v1636
      %v2238 = vmul.f32 %v2160, %v1633
      %v2239 = vmul.f32 %v2162, %v1633
      %v2240 = vmul.f32 %v2182, %v1634
      %v2241 = vmul.f32 %v2184, %v1634
      %v2242 = vmul.f32 %v2204, %v1635
      %v2243 = vmul.f32 %v2206, %v1635
      %v2244 = vmul.f32 %v2226, %v1636
      %v2245 = vmul.f32 %v2228, %v1636
      %v2246 = vadd.f32 %v2230, %v2232
      %v2247 = vadd.f32 %v2246, %v2234
      %v2248 = vadd.f32 %v2247, %v2236
      %v2249 = vadd.f32 %v2231, %v2233
      %v2250 = vadd.f32 %v2249, %v2235
      %v2251 = vadd.f32 %v2250, %v2237
      %v2252 = vadd.f32 %v2238, %v2240
      %v2253 = vadd.f32 %v2252, %v2242
      %v2254 = vadd.f32 %v2253, %v2244
      %v2255 = vadd.f32 %v2239, %v2241
      %v2256 = vadd.f32 %v2255, %v2243
      %v2257 = vadd.f32 %v2256, %v2245
      %v2258 = vpack.c.bf16 %v2251, %v2248
      %v2259 = vpack.c.bf16 %v2257, %v2254
      %v2260 = vld [vmem:[%s674] sm:$0xf]
      %v2261 = vld [vmem:[%s674 + $0x4] sm:$0xf]
      %v2262 = vld [vmem:[%s674 + $0x8] sm:$0xf]
      %v2263 = vld [vmem:[%s674 + $0xc] sm:$0xf]
      %v2264 = vld [vmem:[%s674 + $0x10] sm:$0xf]
      %v2265 = vld [vmem:[%s674 + $0x14] sm:$0xf]
      %v2266 = vld [vmem:[%s674 + $0x18] sm:$0xf]
      %v2267 = vld [vmem:[%s674 + $0x1c] sm:$0xf]
      %v2268 = vld [vmem:[%s674 + $0x20] sm:$0xf]
      %v2269 = vld [vmem:[%s674 + $0x24] sm:$0xf]
      %v2270 = vld [vmem:[%s674 + $0x28] sm:$0xf]
      %v2271 = vld [vmem:[%s674 + $0x2c] sm:$0xf]
      %v2272 = vld [vmem:[%s674 + $0x30] sm:$0xf]
      %v2273 = vld [vmem:[%s674 + $0x34] sm:$0xf]
      %v2274 = vld [vmem:[%s674 + $0x38] sm:$0xf]
      %v2275 = vld [vmem:[%s674 + $0x3c] sm:$0xf]
      %v2276 = vperm.slane %v1278, 7
      %v2293 = vunpack.c.l.b16 %v2260
      %v2294 = vunpack.c.l.b16 %v2261
      %v2295 = vunpack.c.l.b16 %v2262
      %v2296 = vunpack.c.l.b16 %v2263
      %v2297 = vunpack.c.l.b16 %v2264
      %v2298 = vunpack.c.l.b16 %v2265
      %v2299 = vunpack.c.l.b16 %v2266
      %v2300 = vunpack.c.l.b16 %v2267
      %v2301 = vunpack.c.l.b16 %v2268
      %v2302 = vunpack.c.l.b16 %v2269
      %v2303 = vunpack.c.l.b16 %v2270
      %v2304 = vunpack.c.l.b16 %v2271
      %v2305 = vunpack.c.l.b16 %v2272
      %v2306 = vunpack.c.l.b16 %v2273
      %v2307 = vunpack.c.l.b16 %v2274
      %v2308 = vunpack.c.l.b16 %v2275
      %v2309 = vpack.c.b16 %v2294, %v2293
      %v2310 = vpack.c.b16 %v2296, %v2295
      %v2311 = vpack.c.b16 %v2298, %v2297
      %v2312 = vpack.c.b16 %v2300, %v2299
      %v2313 = vpack.c.b16 %v2302, %v2301
      %v2314 = vpack.c.b16 %v2304, %v2303
      %v2315 = vpack.c.b16 %v2306, %v2305
      %v2316 = vpack.c.b16 %v2308, %v2307
      %2325 = vmatpush.bf16.msra.mxu0 %v2316
      %2326 = vmatpush.bf16.msra.mxu0 %v2315
      %2327 = vmatpush.bf16.msra.mxu0 %v2314
      %2328 = vmatpush.bf16.msra.mxu0 %v2313
      %2329 = vmatpush.bf16.msra.mxu0 %v2312
      %2330 = vmatpush.bf16.msra.mxu0 %v2311
      %2331 = vmatpush.bf16.msra.mxu0 %v2310
      %2332 = vmatpush.bf16.msra.mxu0 %v2309
      %2333 = vmatmul.bf16.gmra.mxu0 %v2258
      %v2334 = vpop.f32.mrf.mxu0
      %v2335 = vadd.f32 %v2276, %v2334
      %v2336 = vpop.f32.mrf.mxu0
      %v2337 = vadd.f32 %v2276, %v2336
      %2338 = vmatmul.bf16.gmra.mxu0 %v2259
      %v2339 = vpop.f32.mrf.mxu0
      %v2340 = vadd.f32 %v2276, %v2339
      %v2341 = vpop.f32.mrf.mxu0
      %v2342 = vadd.f32 %v2276, %v2341
      %2343 = vdwg.mxu0
      %v2344 = vadd.f32 %v1274, %v2335
      %v2345 = vadd.f32 %v1275, %v2337
      %v2346 = vadd.f32 %v1276, %v2340
      %v2347 = vadd.f32 %v1277, %v2342
      %2348 = vadd.xlane.f32.xlu0 %v2344
      %v2349 = vpop.xlane.xlu0 %2348
      %2350 = vadd.xlane.f32.xlu0 %v2345
      %v2351 = vpop.xlane.xlu0 %2350
      %2352 = vadd.xlane.f32.xlu0 %v2346
      %v2353 = vpop.xlane.xlu0 %2352
      %2354 = vadd.xlane.f32.xlu0 %v2347
      %v2355 = vpop.xlane.xlu0 %2354
      %v2356 = vmul.f32 %v2349, %v1294
      %v2357 = vmul.f32 %v2351, %v1294
      %v2358 = vmul.f32 %v2353, %v1294
      %v2359 = vmul.f32 %v2355, %v1294
      %v2360 = vsub.f32 %v2344, %v2356
      %v2361 = vsub.f32 %v2345, %v2357
      %v2362 = vsub.f32 %v2346, %v2358
      %v2363 = vsub.f32 %v2347, %v2359
      %v2364 = vmul.f32 %v2360, %v2360
      %v2365 = vmul.f32 %v2361, %v2361
      %v2366 = vmul.f32 %v2362, %v2362
      %v2367 = vmul.f32 %v2363, %v2363
      %2368 = vadd.xlane.f32.xlu0 %v2364
      %v2369 = vpop.xlane.xlu0 %2368
      %2370 = vadd.xlane.f32.xlu0 %v2365
      %v2371 = vpop.xlane.xlu0 %2370
      %2372 = vadd.xlane.f32.xlu0 %v2366
      %v2373 = vpop.xlane.xlu0 %2372
      %2374 = vadd.xlane.f32.xlu0 %v2367
      %v2375 = vpop.xlane.xlu0 %2374
      %v2376 = vmul.f32 %v2369, %v1294
      %v2377 = vmul.f32 %v2371, %v1294
      %v2378 = vmul.f32 %v2373, %v1294
      %v2379 = vmul.f32 %v2375, %v1294
      %v2380 = vadd.f32 %v2376, 1e-06
      %v2381 = vadd.f32 %v2377, 1e-06
      %v2382 = vadd.f32 %v2378, 1e-06
      %v2383 = vadd.f32 %v2379, 1e-06
      %v2384 = vrsqrt.pop %v2380
      %v2385 = vmul.f32 %v2384, %v2380
      %v2386 = vmul.f32 %v2385, %v2384
      %v2387 = vmul.f32 0.5, %v2386
      %v2388 = vsub.f32 1.5, %v2387
      %v2389 = vmul.f32 %v2384, %v2388
      %vm2390 = vweird.f32 %v2380
      %vm2391 = vweird.f32 %v2384
      %vm2392 = vmor %vm2390, %vm2391
      %v2393 = vsel %vm2392, %v2384, %v2389
      %v2394 = vrsqrt.pop %v2381
      %v2395 = vmul.f32 %v2394, %v2381
      %v2396 = vmul.f32 %v2395, %v2394
      %v2397 = vmul.f32 0.5, %v2396
      %v2398 = vsub.f32 1.5, %v2397
      %v2399 = vmul.f32 %v2394, %v2398
      %vm2400 = vweird.f32 %v2381
      %vm2401 = vweird.f32 %v2394
      %vm2402 = vmor %vm2400, %vm2401
      %v2403 = vsel %vm2402, %v2394, %v2399
      %v2404 = vrsqrt.pop %v2382
      %v2405 = vmul.f32 %v2404, %v2382
      %v2406 = vmul.f32 %v2405, %v2404
      %v2407 = vmul.f32 0.5, %v2406
      %v2408 = vsub.f32 1.5, %v2407
      %v2409 = vmul.f32 %v2404, %v2408
      %vm2410 = vweird.f32 %v2382
      %vm2411 = vweird.f32 %v2404
      %vm2412 = vmor %vm2410, %vm2411
      %v2413 = vsel %vm2412, %v2404, %v2409
      %v2414 = vrsqrt.pop %v2383
      %v2415 = vmul.f32 %v2414, %v2383
      %v2416 = vmul.f32 %v2415, %v2414
      %v2417 = vmul.f32 0.5, %v2416
      %v2418 = vsub.f32 1.5, %v2417
      %v2419 = vmul.f32 %v2414, %v2418
      %vm2420 = vweird.f32 %v2383
      %vm2421 = vweird.f32 %v2414
      %vm2422 = vmor %vm2420, %vm2421
      %v2423 = vsel %vm2422, %v2414, %v2419
      %v2424 = vmul.f32 %v2360, %v2393
      %v2425 = vmul.f32 %v2361, %v2403
      %v2426 = vmul.f32 %v2362, %v2413
      %v2427 = vmul.f32 %v2363, %v2423
      %v2428 = vperm.slane %v1278, 2
      %v2429 = vmul.f32 %v2424, %v2428
      %v2430 = vmul.f32 %v2425, %v2428
      %v2431 = vmul.f32 %v2426, %v2428
      %v2432 = vmul.f32 %v2427, %v2428
      %v2433 = vperm.slane %v1278, 3
      %v2434 = vadd.f32 %v2429, %v2433
      %v2435 = vadd.f32 %v2430, %v2433
      %v2436 = vadd.f32 %v2431, %v2433
      %v2437 = vadd.f32 %v2432, %v2433
      %v2438 = vpack.c.bf16 %v2435, %v2434
      %v2439 = vpack.c.bf16 %v2437, %v2436
      %v2440 = vld [vmem:[%s679] sm:$0xff]
      %v2441 = vld [vmem:[%s679 + $0x8] sm:$0xff]
      %v2442 = vld [vmem:[%s679 + $0x10] sm:$0xff]
      %v2443 = vld [vmem:[%s679 + $0x18] sm:$0xff]
      %v2444 = vld [vmem:[%s679 + $0x20] sm:$0xff]
      %v2445 = vld [vmem:[%s679 + $0x28] sm:$0xff]
      %v2446 = vld [vmem:[%s679 + $0x30] sm:$0xff]
      %v2447 = vld [vmem:[%s679 + $0x38] sm:$0xff]
      %v2448 = vld [vmem:[%s679 + $0x40] sm:$0xff]
      %v2449 = vld [vmem:[%s679 + $0x48] sm:$0xff]
      %v2450 = vld [vmem:[%s679 + $0x50] sm:$0xff]
      %v2451 = vld [vmem:[%s679 + $0x58] sm:$0xff]
      %v2452 = vld [vmem:[%s679 + $0x60] sm:$0xff]
      %v2453 = vld [vmem:[%s679 + $0x68] sm:$0xff]
      %v2454 = vld [vmem:[%s679 + $0x70] sm:$0xff]
      %v2455 = vld [vmem:[%s679 + $0x78] sm:$0xff]
      %v2456 = vld [vmem:[%s664] sm:$0x3]
      %v2458 = vperm.slane %v2456, 0
      %v2459 = vperm.slane %v2456, 1
      %v2478 = vunpack.c.l.b16 %v2440
      %v2479 = vunpack.c.h.b16 %v2440
      %v2480 = vunpack.c.l.b16 %v2441
      %v2481 = vunpack.c.h.b16 %v2441
      %v2482 = vunpack.c.l.b16 %v2442
      %v2483 = vunpack.c.h.b16 %v2442
      %v2484 = vunpack.c.l.b16 %v2443
      %v2485 = vunpack.c.h.b16 %v2443
      %v2486 = vunpack.c.l.b16 %v2444
      %v2487 = vunpack.c.h.b16 %v2444
      %v2488 = vunpack.c.l.b16 %v2445
      %v2489 = vunpack.c.h.b16 %v2445
      %v2490 = vunpack.c.l.b16 %v2446
      %v2491 = vunpack.c.h.b16 %v2446
      %v2492 = vunpack.c.l.b16 %v2447
      %v2493 = vunpack.c.h.b16 %v2447
      %v2494 = vunpack.c.l.b16 %v2448
      %v2495 = vunpack.c.h.b16 %v2448
      %v2496 = vunpack.c.l.b16 %v2449
      %v2497 = vunpack.c.h.b16 %v2449
      %v2498 = vunpack.c.l.b16 %v2450
      %v2499 = vunpack.c.h.b16 %v2450
      %v2500 = vunpack.c.l.b16 %v2451
      %v2501 = vunpack.c.h.b16 %v2451
      %v2502 = vunpack.c.l.b16 %v2452
      %v2503 = vunpack.c.h.b16 %v2452
      %v2504 = vunpack.c.l.b16 %v2453
      %v2505 = vunpack.c.h.b16 %v2453
      %v2506 = vunpack.c.l.b16 %v2454
      %v2507 = vunpack.c.h.b16 %v2454
      %v2508 = vunpack.c.l.b16 %v2455
      %v2509 = vunpack.c.h.b16 %v2455
      %v2510 = vpack.c.b16 %v2480, %v2478
      %v2511 = vpack.c.b16 %v2481, %v2479
      %v2512 = vpack.c.b16 %v2484, %v2482
      %v2513 = vpack.c.b16 %v2485, %v2483
      %v2514 = vpack.c.b16 %v2488, %v2486
      %v2515 = vpack.c.b16 %v2489, %v2487
      %v2516 = vpack.c.b16 %v2492, %v2490
      %v2517 = vpack.c.b16 %v2493, %v2491
      %v2518 = vpack.c.b16 %v2496, %v2494
      %v2519 = vpack.c.b16 %v2497, %v2495
      %v2520 = vpack.c.b16 %v2500, %v2498
      %v2521 = vpack.c.b16 %v2501, %v2499
      %v2522 = vpack.c.b16 %v2504, %v2502
      %v2523 = vpack.c.b16 %v2505, %v2503
      %v2524 = vpack.c.b16 %v2508, %v2506
      %v2525 = vpack.c.b16 %v2509, %v2507
      %2542 = vmatpush.bf16.msra.mxu0 %v2524
      %2543 = vmatpush.bf16.msra.mxu0 %v2522
      %2544 = vmatpush.bf16.msra.mxu0 %v2520
      %2545 = vmatpush.bf16.msra.mxu0 %v2518
      %2546 = vmatpush.bf16.msra.mxu0 %v2516
      %2547 = vmatpush.bf16.msra.mxu0 %v2514
      %2548 = vmatpush.bf16.msra.mxu0 %v2512
      %2549 = vmatpush.bf16.msra.mxu0 %v2510
      %2550 = vmatmul.bf16.gmra.mxu0 %v2438
      %v2551 = vpop.f32.mrf.mxu0
      %v2552 = vadd.f32 %v2458, %v2551
      %v2553 = vpop.f32.mrf.mxu0
      %v2554 = vadd.f32 %v2458, %v2553
      %2555 = vmatmul.bf16.gmra.mxu0 %v2439
      %v2556 = vpop.f32.mrf.mxu0
      %v2557 = vadd.f32 %v2458, %v2556
      %v2558 = vpop.f32.mrf.mxu0
      %v2559 = vadd.f32 %v2458, %v2558
      %2560 = vdwg.mxu0
      %2561 = vmatpush.bf16.msra.mxu0 %v2525
      %2562 = vmatpush.bf16.msra.mxu0 %v2523
      %2563 = vmatpush.bf16.msra.mxu0 %v2521
      %2564 = vmatpush.bf16.msra.mxu0 %v2519
      %2565 = vmatpush.bf16.msra.mxu0 %v2517
      %2566 = vmatpush.bf16.msra.mxu0 %v2515
      %2567 = vmatpush.bf16.msra.mxu0 %v2513
      %2568 = vmatpush.bf16.msra.mxu0 %v2511
      %2569 = vmatmul.bf16.gmra.mxu0 %v2438
      %v2570 = vpop.f32.mrf.mxu0
      %v2571 = vadd.f32 %v2459, %v2570
      %v2572 = vpop.f32.mrf.mxu0
      %v2573 = vadd.f32 %v2459, %v2572
      %2574 = vmatmul.bf16.gmra.mxu0 %v2439
      %v2575 = vpop.f32.mrf.mxu0
      %v2576 = vadd.f32 %v2459, %v2575
      %v2577 = vpop.f32.mrf.mxu0
      %v2578 = vadd.f32 %v2459, %v2577
      %2579 = vdwg.mxu0
      %v2580 = vmul.f32 %v2552, 0.5
      %v2581 = vmul.f32 %v2571, 0.5
      %v2582 = vmul.f32 %v2554, 0.5
      %v2583 = vmul.f32 %v2573, 0.5
      %v2584 = vmul.f32 %v2557, 0.5
      %v2585 = vmul.f32 %v2576, 0.5
      %v2586 = vmul.f32 %v2559, 0.5
      %v2587 = vmul.f32 %v2578, 0.5
      %v2588 = vmul.f32 %v2552, 0.044715
      %v2589 = vmul.f32 %v2571, 0.044715
      %v2590 = vmul.f32 %v2554, 0.044715
      %v2591 = vmul.f32 %v2573, 0.044715
      %v2592 = vmul.f32 %v2557, 0.044715
      %v2593 = vmul.f32 %v2576, 0.044715
      %v2594 = vmul.f32 %v2559, 0.044715
      %v2595 = vmul.f32 %v2578, 0.044715
      %v2596 = vmul.f32 %v2588, %v2552
      %v2597 = vmul.f32 %v2589, %v2571
      %v2598 = vmul.f32 %v2590, %v2554
      %v2599 = vmul.f32 %v2591, %v2573
      %v2600 = vmul.f32 %v2592, %v2557
      %v2601 = vmul.f32 %v2593, %v2576
      %v2602 = vmul.f32 %v2594, %v2559
      %v2603 = vmul.f32 %v2595, %v2578
      %v2604 = vmul.f32 %v2596, %v2552
      %v2605 = vmul.f32 %v2597, %v2571
      %v2606 = vmul.f32 %v2598, %v2554
      %v2607 = vmul.f32 %v2599, %v2573
      %v2608 = vmul.f32 %v2600, %v2557
      %v2609 = vmul.f32 %v2601, %v2576
      %v2610 = vmul.f32 %v2602, %v2559
      %v2611 = vmul.f32 %v2603, %v2578
      %v2612 = vadd.f32 %v2552, %v2604
      %v2613 = vadd.f32 %v2571, %v2605
      %v2614 = vadd.f32 %v2554, %v2606
      %v2615 = vadd.f32 %v2573, %v2607
      %v2616 = vadd.f32 %v2557, %v2608
      %v2617 = vadd.f32 %v2576, %v2609
      %v2618 = vadd.f32 %v2559, %v2610
      %v2619 = vadd.f32 %v2578, %v2611
      %v2620 = vmul.f32 %v2612, 0.7978846
      %v2621 = vmul.f32 %v2613, 0.7978846
      %v2622 = vmul.f32 %v2614, 0.7978846
      %v2623 = vmul.f32 %v2615, 0.7978846
      %v2624 = vmul.f32 %v2616, 0.7978846
      %v2625 = vmul.f32 %v2617, 0.7978846
      %v2626 = vmul.f32 %v2618, 0.7978846
      %v2627 = vmul.f32 %v2619, 0.7978846
      %v2628 = vtanh.pop %v2620
      %v2629 = vtanh.pop %v2621
      %v2630 = vtanh.pop %v2622
      %v2631 = vtanh.pop %v2623
      %v2632 = vtanh.pop %v2624
      %v2633 = vtanh.pop %v2625
      %v2634 = vtanh.pop %v2626
      %v2635 = vtanh.pop %v2627
      %v2636 = vadd.f32 %v2628, 1.0
      %v2637 = vadd.f32 %v2629, 1.0
      %v2638 = vadd.f32 %v2630, 1.0
      %v2639 = vadd.f32 %v2631, 1.0
      %v2640 = vadd.f32 %v2632, 1.0
      %v2641 = vadd.f32 %v2633, 1.0
      %v2642 = vadd.f32 %v2634, 1.0
      %v2643 = vadd.f32 %v2635, 1.0
      %v2644 = vmul.f32 %v2580, %v2636
      %v2645 = vmul.f32 %v2581, %v2637
      %v2646 = vmul.f32 %v2582, %v2638
      %v2647 = vmul.f32 %v2583, %v2639
      %v2648 = vmul.f32 %v2584, %v2640
      %v2649 = vmul.f32 %v2585, %v2641
      %v2650 = vmul.f32 %v2586, %v2642
      %v2651 = vmul.f32 %v2587, %v2643
      %v2652 = vpack.c.bf16 %v2646, %v2644
      %v2653 = vpack.c.bf16 %v2647, %v2645
      %v2654 = vpack.c.bf16 %v2650, %v2648
      %v2655 = vpack.c.bf16 %v2651, %v2649
      %v2656 = vld [vmem:[%s684] sm:$0xf]
      %v2657 = vld [vmem:[%s684 + $0x4] sm:$0xf]
      %v2658 = vld [vmem:[%s684 + $0x8] sm:$0xf]
      %v2659 = vld [vmem:[%s684 + $0xc] sm:$0xf]
      %v2660 = vld [vmem:[%s684 + $0x10] sm:$0xf]
      %v2661 = vld [vmem:[%s684 + $0x14] sm:$0xf]
      %v2662 = vld [vmem:[%s684 + $0x18] sm:$0xf]
      %v2663 = vld [vmem:[%s684 + $0x1c] sm:$0xf]
      %v2664 = vld [vmem:[%s684 + $0x20] sm:$0xf]
      %v2665 = vld [vmem:[%s684 + $0x24] sm:$0xf]
      %v2666 = vld [vmem:[%s684 + $0x28] sm:$0xf]
      %v2667 = vld [vmem:[%s684 + $0x2c] sm:$0xf]
      %v2668 = vld [vmem:[%s684 + $0x30] sm:$0xf]
      %v2669 = vld [vmem:[%s684 + $0x34] sm:$0xf]
      %v2670 = vld [vmem:[%s684 + $0x38] sm:$0xf]
      %v2671 = vld [vmem:[%s684 + $0x3c] sm:$0xf]
      %v2672 = vld [vmem:[%s684 + $0x40] sm:$0xf]
      %v2673 = vld [vmem:[%s684 + $0x44] sm:$0xf]
      %v2674 = vld [vmem:[%s684 + $0x48] sm:$0xf]
      %v2675 = vld [vmem:[%s684 + $0x4c] sm:$0xf]
      %v2676 = vld [vmem:[%s684 + $0x50] sm:$0xf]
      %v2677 = vld [vmem:[%s684 + $0x54] sm:$0xf]
      %v2678 = vld [vmem:[%s684 + $0x58] sm:$0xf]
      %v2679 = vld [vmem:[%s684 + $0x5c] sm:$0xf]
      %v2680 = vld [vmem:[%s684 + $0x60] sm:$0xf]
      %v2681 = vld [vmem:[%s684 + $0x64] sm:$0xf]
      %v2682 = vld [vmem:[%s684 + $0x68] sm:$0xf]
      %v2683 = vld [vmem:[%s684 + $0x6c] sm:$0xf]
      %v2684 = vld [vmem:[%s684 + $0x70] sm:$0xf]
      %v2685 = vld [vmem:[%s684 + $0x74] sm:$0xf]
      %v2686 = vld [vmem:[%s684 + $0x78] sm:$0xf]
      %v2687 = vld [vmem:[%s684 + $0x7c] sm:$0xf]
      %v2688 = vperm.slane %v1279, 0
      %v2721 = vunpack.c.l.b16 %v2656
      %v2722 = vunpack.c.l.b16 %v2657
      %v2723 = vunpack.c.l.b16 %v2658
      %v2724 = vunpack.c.l.b16 %v2659
      %v2725 = vunpack.c.l.b16 %v2660
      %v2726 = vunpack.c.l.b16 %v2661
      %v2727 = vunpack.c.l.b16 %v2662
      %v2728 = vunpack.c.l.b16 %v2663
      %v2729 = vunpack.c.l.b16 %v2664
      %v2730 = vunpack.c.l.b16 %v2665
      %v2731 = vunpack.c.l.b16 %v2666
      %v2732 = vunpack.c.l.b16 %v2667
      %v2733 = vunpack.c.l.b16 %v2668
      %v2734 = vunpack.c.l.b16 %v2669
      %v2735 = vunpack.c.l.b16 %v2670
      %v2736 = vunpack.c.l.b16 %v2671
      %v2737 = vunpack.c.l.b16 %v2672
      %v2738 = vunpack.c.l.b16 %v2673
      %v2739 = vunpack.c.l.b16 %v2674
      %v2740 = vunpack.c.l.b16 %v2675
      %v2741 = vunpack.c.l.b16 %v2676
      %v2742 = vunpack.c.l.b16 %v2677
      %v2743 = vunpack.c.l.b16 %v2678
      %v2744 = vunpack.c.l.b16 %v2679
      %v2745 = vunpack.c.l.b16 %v2680
      %v2746 = vunpack.c.l.b16 %v2681
      %v2747 = vunpack.c.l.b16 %v2682
      %v2748 = vunpack.c.l.b16 %v2683
      %v2749 = vunpack.c.l.b16 %v2684
      %v2750 = vunpack.c.l.b16 %v2685
      %v2751 = vunpack.c.l.b16 %v2686
      %v2752 = vunpack.c.l.b16 %v2687
      %v2753 = vpack.c.b16 %v2722, %v2721
      %v2754 = vpack.c.b16 %v2724, %v2723
      %v2755 = vpack.c.b16 %v2726, %v2725
      %v2756 = vpack.c.b16 %v2728, %v2727
      %v2757 = vpack.c.b16 %v2730, %v2729
      %v2758 = vpack.c.b16 %v2732, %v2731
      %v2759 = vpack.c.b16 %v2734, %v2733
      %v2760 = vpack.c.b16 %v2736, %v2735
      %v2761 = vpack.c.b16 %v2738, %v2737
      %v2762 = vpack.c.b16 %v2740, %v2739
      %v2763 = vpack.c.b16 %v2742, %v2741
      %v2764 = vpack.c.b16 %v2744, %v2743
      %v2765 = vpack.c.b16 %v2746, %v2745
      %v2766 = vpack.c.b16 %v2748, %v2747
      %v2767 = vpack.c.b16 %v2750, %v2749
      %v2768 = vpack.c.b16 %v2752, %v2751
      %2785 = vmatpush.bf16.msra.mxu0 %v2760
      %2786 = vmatpush.bf16.msra.mxu0 %v2759
      %2787 = vmatpush.bf16.msra.mxu0 %v2758
      %2788 = vmatpush.bf16.msra.mxu0 %v2757
      %2789 = vmatpush.bf16.msra.mxu0 %v2756
      %2790 = vmatpush.bf16.msra.mxu0 %v2755
      %2791 = vmatpush.bf16.msra.mxu0 %v2754
      %2792 = vmatpush.bf16.msra.mxu0 %v2753
      %2793 = vmatmul.bf16.gmra.mxu0 %v2652
      %v2794 = vpop.f32.mrf.mxu0
      %v2795 = vadd.f32 %v2688, %v2794
      %v2796 = vpop.f32.mrf.mxu0
      %v2797 = vadd.f32 %v2688, %v2796
      %2798 = vmatmul.bf16.gmra.mxu0 %v2654
      %v2799 = vpop.f32.mrf.mxu0
      %v2800 = vadd.f32 %v2688, %v2799
      %v2801 = vpop.f32.mrf.mxu0
      %v2802 = vadd.f32 %v2688, %v2801
      %2803 = vdwg.mxu0
      %2804 = vmatpush.bf16.msra.mxu0 %v2768
      %2805 = vmatpush.bf16.msra.mxu0 %v2767
      %2806 = vmatpush.bf16.msra.mxu0 %v2766
      %2807 = vmatpush.bf16.msra.mxu0 %v2765
      %2808 = vmatpush.bf16.msra.mxu0 %v2764
      %2809 = vmatpush.bf16.msra.mxu0 %v2763
      %2810 = vmatpush.bf16.msra.mxu0 %v2762
      %2811 = vmatpush.bf16.msra.mxu0 %v2761
      %2812 = vmatmul.bf16.gmra.mxu0 %v2653
      %v2813 = vpop.f32.mrf.mxu0
      %v2814 = vadd.f32 %v2795, %v2813
      %v2815 = vpop.f32.mrf.mxu0
      %v2816 = vadd.f32 %v2797, %v2815
      %2817 = vmatmul.bf16.gmra.mxu0 %v2655
      %v2818 = vpop.f32.mrf.mxu0
      %v2819 = vadd.f32 %v2800, %v2818
      %v2820 = vpop.f32.mrf.mxu0
      %v2821 = vadd.f32 %v2802, %v2820
      %2822 = vdwg.mxu0
      %v2823 = vadd.f32 %v2344, %v2814
      %v2824 = vadd.f32 %v2345, %v2816
      %v2825 = vadd.f32 %v2346, %v2819
      %v2826 = vadd.f32 %v2347, %v2821
      %2827 = vst [vmem:[#allocation2] sm:$0xff] %v2823
      %2828 = vst [vmem:[#allocation2 + $0x8] sm:$0xff] %v2824
      %2829 = vst [vmem:[#allocation2 + $0x10] sm:$0xff] %v2825
      %2830 = vst [vmem:[#allocation2 + $0x18] sm:$0xff] %v2826
      %p2831 = scmp.eq.s32.totalorder %s30, 1
      // Predicated region
      $region101: #{_lambda_.1} parent=95 // pred_check
        %p2832 = pneg %p2831
      $region102: #{_lambda_.1} parent=95 // pred_check_branch
        %2834 = sbr.rel (%p2832) target = $region104
      $region103: #{_lambda_.1} parent=95 // pred_region
        %v2835 = vld [vmem:[%s10] sm:$0x1]
        %v2836 = vld [vmem:[%s11] sm:$0x1]
        %2837 = vadd.xlane.f32.xlu0 %v2823
        %v2838 = vpop.xlane.xlu0 %2837
        %2839 = vadd.xlane.f32.xlu0 %v2824
        %v2840 = vpop.xlane.xlu0 %2839
        %2841 = vadd.xlane.f32.xlu0 %v2825
        %v2842 = vpop.xlane.xlu0 %2841
        %2843 = vadd.xlane.f32.xlu0 %v2826
        %v2844 = vpop.xlane.xlu0 %2843
        %v2845 = vmul.f32 %v2838, %v1294
        %v2846 = vmul.f32 %v2840, %v1294
        %v2847 = vmul.f32 %v2842, %v1294
        %v2848 = vmul.f32 %v2844, %v1294
        %v2849 = vsub.f32 %v2823, %v2845
        %v2850 = vsub.f32 %v2824, %v2846
        %v2851 = vsub.f32 %v2825, %v2847
        %v2852 = vsub.f32 %v2826, %v2848
        %v2853 = vmul.f32 %v2849, %v2849
        %v2854 = vmul.f32 %v2850, %v2850
        %v2855 = vmul.f32 %v2851, %v2851
        %v2856 = vmul.f32 %v2852, %v2852
        %2857 = vadd.xlane.f32.xlu0 %v2853
        %v2858 = vpop.xlane.xlu0 %2857
        %2859 = vadd.xlane.f32.xlu0 %v2854
        %v2860 = vpop.xlane.xlu0 %2859
        %2861 = vadd.xlane.f32.xlu0 %v2855
        %v2862 = vpop.xlane.xlu0 %2861
        %2863 = vadd.xlane.f32.xlu0 %v2856
        %v2864 = vpop.xlane.xlu0 %2863
        %v2865 = vmul.f32 %v2858, %v1294
        %v2866 = vmul.f32 %v2860, %v1294
        %v2867 = vmul.f32 %v2862, %v1294
        %v2868 = vmul.f32 %v2864, %v1294
        %v2869 = vadd.f32 %v2865, 1e-06
        %v2870 = vadd.f32 %v2866, 1e-06
        %v2871 = vadd.f32 %v2867, 1e-06
        %v2872 = vadd.f32 %v2868, 1e-06
        %v2873 = vrsqrt.pop %v2869
        %v2874 = vmul.f32 %v2873, %v2869
        %v2875 = vmul.f32 %v2874, %v2873
        %v2876 = vmul.f32 0.5, %v2875
        %v2877 = vsub.f32 1.5, %v2876
        %v2878 = vmul.f32 %v2873, %v2877
        %vm2879 = vweird.f32 %v2869
        %vm2880 = vweird.f32 %v2873
        %vm2881 = vmor %vm2879, %vm2880
        %v2882 = vsel %vm2881, %v2873, %v2878
        %v2883 = vrsqrt.pop %v2870
        %v2884 = vmul.f32 %v2883, %v2870
        %v2885 = vmul.f32 %v2884, %v2883
        %v2886 = vmul.f32 0.5, %v2885
        %v2887 = vsub.f32 1.5, %v2886
        %v2888 = vmul.f32 %v2883, %v2887
        %vm2889 = vweird.f32 %v2870
        %vm2890 = vweird.f32 %v2883
        %vm2891 = vmor %vm2889, %vm2890
        %v2892 = vsel %vm2891, %v2883, %v2888
        %v2893 = vrsqrt.pop %v2871
        %v2894 = vmul.f32 %v2893, %v2871
        %v2895 = vmul.f32 %v2894, %v2893
        %v2896 = vmul.f32 0.5, %v2895
        %v2897 = vsub.f32 1.5, %v2896
        %v2898 = vmul.f32 %v2893, %v2897
        %vm2899 = vweird.f32 %v2871
        %vm2900 = vweird.f32 %v2893
        %vm2901 = vmor %vm2899, %vm2900
        %v2902 = vsel %vm2901, %v2893, %v2898
        %v2903 = vrsqrt.pop %v2872
        %v2904 = vmul.f32 %v2903, %v2872
        %v2905 = vmul.f32 %v2904, %v2903
        %v2906 = vmul.f32 0.5, %v2905
        %v2907 = vsub.f32 1.5, %v2906
        %v2908 = vmul.f32 %v2903, %v2907
        %vm2909 = vweird.f32 %v2872
        %vm2910 = vweird.f32 %v2903
        %vm2911 = vmor %vm2909, %vm2910
        %v2912 = vsel %vm2911, %v2903, %v2908
        %v2913 = vmul.f32 %v2849, %v2882
        %v2914 = vmul.f32 %v2850, %v2892
        %v2915 = vmul.f32 %v2851, %v2902
        %v2916 = vmul.f32 %v2852, %v2912
        %v2918 = vperm.slane %v2835, 0
        %v2920 = vmul.f32 %v2913, %v2918
        %v2921 = vmul.f32 %v2914, %v2918
        %v2922 = vmul.f32 %v2915, %v2918
        %v2923 = vmul.f32 %v2916, %v2918
        %v2925 = vperm.slane %v2836, 0
        %v2927 = vadd.f32 %v2920, %v2925
        %v2928 = vadd.f32 %v2921, %v2925
        %v2929 = vadd.f32 %v2922, %v2925
        %v2930 = vadd.f32 %v2923, %v2925
        %v2931 = vadd.f32 %v2927, %v2928
        %v2932 = vrot.slane %v2931, 4
        %v2933 = vadd.f32 %v2931, %v2932
        %v2934 = vrot.slane %v2933, 2
        %v2935 = vadd.f32 %v2933, %v2934
        %v2936 = vrot.slane %v2935, 1
        %v2937 = vadd.f32 %v2935, %v2936
        %v2938 = vadd.f32 %v2929, %v2930
        %v2939 = vrot.slane %v2938, 4
        %v2940 = vadd.f32 %v2938, %v2939
        %v2941 = vrot.slane %v2940, 2
        %v2942 = vadd.f32 %v2940, %v2941
        %v2943 = vrot.slane %v2942, 1
        %v2944 = vadd.f32 %v2942, %v2943
        %v2945 = vrcp.pop 16.0
        %v2946 = vmul.f32 16.0, %v2945
        %v2947 = vsub.f32 1.0, %v2946
        %v2948 = vmul.f32 %v2945, %v2947
        %v2949 = vadd.f32 %v2945, %v2948
        %vm2950 = vweird.f32 %v2945
        %v2951 = vsel %vm2950, %v2945, %v2949
        %v2952 = vmul.f32 %v2937, %v2951
        %v2953 = vmul.f32 %v2944, %v2951
        %v2954 = vpack.c.bf16 %v2952, %v2952
        %v2955 = vpack.c.bf16 %v2953, %v2953
        %v2956 = vld [vmem:[%s12] sm:$0xf]
        %v2957 = vld [vmem:[%s12 + $0x4] sm:$0xf]
        %v2958 = vld [vmem:[%s12 + $0x8] sm:$0xf]
        %v2959 = vld [vmem:[%s12 + $0xc] sm:$0xf]
        %v2960 = vld [vmem:[%s12 + $0x10] sm:$0xf]
        %v2961 = vld [vmem:[%s12 + $0x14] sm:$0xf]
        %v2962 = vld [vmem:[%s12 + $0x18] sm:$0xf]
        %v2963 = vld [vmem:[%s12 + $0x1c] sm:$0xf]
        %v2964 = vld [vmem:[%s12 + $0x20] sm:$0xf]
        %v2965 = vld [vmem:[%s12 + $0x24] sm:$0xf]
        %v2966 = vld [vmem:[%s12 + $0x28] sm:$0xf]
        %v2967 = vld [vmem:[%s12 + $0x2c] sm:$0xf]
        %v2968 = vld [vmem:[%s12 + $0x30] sm:$0xf]
        %v2969 = vld [vmem:[%s12 + $0x34] sm:$0xf]
        %v2970 = vld [vmem:[%s12 + $0x38] sm:$0xf]
        %v2971 = vld [vmem:[%s12 + $0x3c] sm:$0xf]
        %v2972 = vld [vmem:[%s13] sm:$0x1]
        %v2974 = vperm.slane %v2972, 0
        %v2978 = vunpack.c.l.b16 %v2954
        %v2979 = vunpack.c.l.b16 %v2955
        %vm2980 = vcmask 1041409
        %v2981 = vsel %vm2980, %v2979, %v2978
        %v2982 = vpack.c.b16 %v2981, %v2981
        %v3000 = vunpack.c.l.b16 %v2956
        %v3001 = vunpack.c.l.b16 %v2957
        %v3002 = vunpack.c.l.b16 %v2958
        %v3003 = vunpack.c.l.b16 %v2959
        %v3004 = vunpack.c.l.b16 %v2960
        %v3005 = vunpack.c.l.b16 %v2961
        %v3006 = vunpack.c.l.b16 %v2962
        %v3007 = vunpack.c.l.b16 %v2963
        %v3008 = vunpack.c.l.b16 %v2964
        %v3009 = vunpack.c.l.b16 %v2965
        %v3010 = vunpack.c.l.b16 %v2966
        %v3011 = vunpack.c.l.b16 %v2967
        %v3012 = vunpack.c.l.b16 %v2968
        %v3013 = vunpack.c.l.b16 %v2969
        %v3014 = vunpack.c.l.b16 %v2970
        %v3015 = vunpack.c.l.b16 %v2971
        %v3016 = vpack.c.b16 %v3001, %v3000
        %v3017 = vpack.c.b16 %v3003, %v3002
        %v3018 = vpack.c.b16 %v3005, %v3004
        %v3019 = vpack.c.b16 %v3007, %v3006
        %v3020 = vpack.c.b16 %v3009, %v3008
        %v3021 = vpack.c.b16 %v3011, %v3010
        %v3022 = vpack.c.b16 %v3013, %v3012
        %v3023 = vpack.c.b16 %v3015, %v3014
        %3032 = vmatpush.bf16.msra.mxu0 %v3023
        %3033 = vmatpush.bf16.msra.mxu0 %v3022
        %3034 = vmatpush.bf16.msra.mxu0 %v3021
        %3035 = vmatpush.bf16.msra.mxu0 %v3020
        %3036 = vmatpush.bf16.msra.mxu0 %v3019
        %3037 = vmatpush.bf16.msra.mxu0 %v3018
        %3038 = vmatpush.bf16.msra.mxu0 %v3017
        %3039 = vmatpush.bf16.msra.mxu0 %v3016
        %3040 = vmatmul.bf16.gmra.mxu0 %v2982
        %v3041 = vpop.f32.mrf.mxu0
        %v3042 = vadd.f32 %v2974, %v3041
        %v3043 = vpop.f32.mrf.mxu0
        %3044 = vdwg.mxu0
        %v3045 = vmul.f32 %v3042, 0.5
        %v3046 = vmul.f32 %v3042, 0.70710677
        %v3047 = vmul.f32 %v3046, %v3046
        %v3048 = vmin.f32 16.0, %v3047
        %v3049 = vmul.f32 %v3048, 2.1237322e-06
        %v3050 = vadd.f32 %v3049, 0.00028619796
        %v3051 = vmul.f32 %v3048, %v3050
        %v3052 = vadd.f32 %v3051, 0.0036580483
        %v3053 = vmul.f32 %v3048, %v3052
        %v3054 = vadd.f32 %v3053, 0.05243302
        %v3055 = vmul.f32 %v3048, %v3054
        %v3056 = vadd.f32 %v3055, 0.18741608
        %v3057 = vmul.f32 %v3048, %v3056
        %v3058 = vadd.f32 %v3057, 1.1283791
        %v3059 = vmul.f32 %v3046, %v3058
        %v3060 = vmul.f32 %v3048, 3.8918573e-05
        %v3061 = vadd.f32 %v3060, 0.001143296
        %v3062 = vmul.f32 %v3048, %v3061
        %v3063 = vadd.f32 %v3062, 0.014752088
        %v3064 = vmul.f32 %v3048, %v3063
        %v3065 = vadd.f32 %v3064, 0.112945676
        %v3066 = vmul.f32 %v3048, %v3065
        %v3067 = vadd.f32 %v3066, 0.4994258
        %v3068 = vmul.f32 %v3048, %v3067
        %v3069 = vadd.f32 %v3068, 1.0
        %v3070 = vrcp.pop %v3069
        %v3071 = vmul.f32 %v3069, %v3070
        %v3072 = vsub.f32 1.0, %v3071
        %v3073 = vmul.f32 %v3070, %v3072
        %v3074 = vadd.f32 %v3070, %v3073
        %vm3075 = vweird.f32 %v3069
        %vm3076 = vweird.f32 %v3070
        %vm3077 = vmor %vm3075, %vm3076
        %v3078 = vsel %vm3077, %v3070, %v3074
        %v3079 = vand.u32 2147483647, %v3069
        %vm3080 = vcmp.eq.f32.partialorder %v3079, 8.507059e+37
        %v3081 = vand.u32 %v3069, 2147483648
        %v3082 = vor.u32 1.1754944e-38, %v3081
        %v3083 = vsel %vm3080, %v3082, %v3078
        %v3084 = vmul.f32 %v3059, %v3083
        %v3085 = vmin.f32 %v3084, 1.0
        %v3086 = vmax.f32 %v3085, -1.0
        %v3087 = vadd.f32 %v3086, 1.0
        %v3088 = vmul.f32 %v3045, %v3087
        %v3089 = vpack.c.bf16 %v3088, %v3088
        %v3090 = vld [vmem:[%s14] sm:$0xf]
        %v3091 = vld [vmem:[%s14 + $0x4] sm:$0xf]
        %v3092 = vld [vmem:[%s14 + $0x8] sm:$0xf]
        %v3093 = vld [vmem:[%s14 + $0xc] sm:$0xf]
        %v3094 = vld [vmem:[%s14 + $0x10] sm:$0xf]
        %v3095 = vld [vmem:[%s14 + $0x14] sm:$0xf]
        %v3096 = vld [vmem:[%s14 + $0x18] sm:$0xf]
        %v3097 = vld [vmem:[%s14 + $0x1c] sm:$0xf]
        %v3098 = vld [vmem:[%s14 + $0x20] sm:$0xf]
        %v3099 = vld [vmem:[%s14 + $0x24] sm:$0xf]
        %v3100 = vld [vmem:[%s14 + $0x28] sm:$0xf]
        %v3101 = vld [vmem:[%s14 + $0x2c] sm:$0xf]
        %v3102 = vld [vmem:[%s14 + $0x30] sm:$0xf]
        %v3103 = vld [vmem:[%s14 + $0x34] sm:$0xf]
        %v3104 = vld [vmem:[%s14 + $0x38] sm:$0xf]
        %v3105 = vld [vmem:[%s14 + $0x3c] sm:$0xf]
        %v3106 = vld [vmem:[%s15] sm:$0x1]
        %v3108 = vperm.slane %v3106, 0
        %v3126 = vunpack.c.l.b16 %v3090
        %v3127 = vunpack.c.l.b16 %v3091
        %v3128 = vunpack.c.l.b16 %v3092
        %v3129 = vunpack.c.l.b16 %v3093
        %v3130 = vunpack.c.l.b16 %v3094
        %v3131 = vunpack.c.l.b16 %v3095
        %v3132 = vunpack.c.l.b16 %v3096
        %v3133 = vunpack.c.l.b16 %v3097
        %v3134 = vunpack.c.l.b16 %v3098
        %v3135 = vunpack.c.l.b16 %v3099
        %v3136 = vunpack.c.l.b16 %v3100
        %v3137 = vunpack.c.l.b16 %v3101
        %v3138 = vunpack.c.l.b16 %v3102
        %v3139 = vunpack.c.l.b16 %v3103
        %v3140 = vunpack.c.l.b16 %v3104
        %v3141 = vunpack.c.l.b16 %v3105
        %v3142 = vpack.c.b16 %v3127, %v3126
        %v3143 = vpack.c.b16 %v3129, %v3128
        %v3144 = vpack.c.b16 %v3131, %v3130
        %v3145 = vpack.c.b16 %v3133, %v3132
        %v3146 = vpack.c.b16 %v3135, %v3134
        %v3147 = vpack.c.b16 %v3137, %v3136
        %v3148 = vpack.c.b16 %v3139, %v3138
        %v3149 = vpack.c.b16 %v3141, %v3140
        %3158 = vmatpush.bf16.msra.mxu0 %v3149
        %3159 = vmatpush.bf16.msra.mxu0 %v3148
        %3160 = vmatpush.bf16.msra.mxu0 %v3147
        %3161 = vmatpush.bf16.msra.mxu0 %v3146
        %3162 = vmatpush.bf16.msra.mxu0 %v3145
        %3163 = vmatpush.bf16.msra.mxu0 %v3144
        %3164 = vmatpush.bf16.msra.mxu0 %v3143
        %3165 = vmatpush.bf16.msra.mxu0 %v3142
        %3166 = vmatmul.bf16.gmra.mxu0 %v3089
        %v3167 = vpop.f32.mrf.mxu0
        %v3168 = vadd.f32 %v3108, %v3167
        %v3169 = vpop.f32.mrf.mxu0
        %3170 = vdwg.mxu0
        %v3171 = vld [vmem:[%s18] sm:$0x3f]
        %vm3172 = vcmask 1045504
        %v3173 = vsel %vm3172, %v3171, 0.0
        %3174 = vadd.xlane.f32.xlu0 %v3173
        %v3175 = vpop.xlane.xlu0 %3174
        %v3177 = vrot.slane %v3168, 1
        %v3178 = vperm.slane %v3168, 0
        %v3179 = vperm.slane %v3177, 0
        %v3182 = vmul.f32 %v3178, %v3171
        %v3183 = vmul.f32 %v3179, %v3171
        %v3184 = vsel %vm3172, %v3182, 0.0
        %3185 = vadd.xlane.f32.xlu0 %v3184
        %v3186 = vpop.xlane.xlu0 %3185
        %v3187 = vsel %vm3172, %v3183, 0.0
        %3188 = vadd.xlane.f32.xlu0 %v3187
        %v3189 = vpop.xlane.xlu0 %3188
        %v3190 = vrcp.pop %v3175
        %v3191 = vmul.f32 %v3175, %v3190
        %v3192 = vsub.f32 1.0, %v3191
        %v3193 = vmul.f32 %v3190, %v3192
        %v3194 = vadd.f32 %v3190, %v3193
        %vm3195 = vweird.f32 %v3175
        %vm3196 = vweird.f32 %v3190
        %vm3197 = vmor %vm3195, %vm3196
        %v3198 = vsel %vm3197, %v3190, %v3194
        %v3199 = vand.u32 2147483647, %v3175
        %vm3200 = vcmp.eq.f32.partialorder %v3199, 8.507059e+37
        %v3201 = vand.u32 %v3175, 2147483648
        %v3202 = vor.u32 1.1754944e-38, %v3201
        %v3203 = vsel %vm3200, %v3202, %v3198
        %v3204 = vmul.f32 %v3186, %v3203
        %v3205 = vmul.f32 %v3189, %v3203
        %v3206 = vsub.f32 %v3182, %v3204
        %v3207 = vsub.f32 %v3183, %v3205
        %v3208 = vmul.f32 %v3206, %v3206
        %v3209 = vmul.f32 %v3207, %v3207
        %v3210 = vmul.f32 %v3208, %v3171
        %v3211 = vmul.f32 %v3209, %v3171
        %v3212 = vsel %vm3172, %v3210, 0.0
        %3213 = vadd.xlane.f32.xlu0 %v3212
        %v3214 = vpop.xlane.xlu0 %3213
        %v3215 = vsel %vm3172, %v3211, 0.0
        %3216 = vadd.xlane.f32.xlu0 %v3215
        %v3217 = vpop.xlane.xlu0 %3216
        %v3218 = vmul.f32 %v3214, %v3203
        %v3219 = vmul.f32 %v3217, %v3203
        %v3220 = vadd.f32 %v3218, 1e-05
        %v3221 = vadd.f32 %v3219, 1e-05
        %v3222 = vrsqrt.pop %v3220
        %v3223 = vmul.f32 %v3222, %v3220
        %v3224 = vmul.f32 %v3223, %v3222
        %v3225 = vmul.f32 0.5, %v3224
        %v3226 = vsub.f32 1.5, %v3225
        %v3227 = vmul.f32 %v3222, %v3226
        %vm3228 = vweird.f32 %v3220
        %vm3229 = vweird.f32 %v3222
        %vm3230 = vmor %vm3228, %vm3229
        %v3231 = vsel %vm3230, %v3222, %v3227
        %v3232 = vrsqrt.pop %v3221
        %v3233 = vmul.f32 %v3232, %v3221
        %v3234 = vmul.f32 %v3233, %v3232
        %v3235 = vmul.f32 0.5, %v3234
        %v3236 = vsub.f32 1.5, %v3235
        %v3237 = vmul.f32 %v3232, %v3236
        %vm3238 = vweird.f32 %v3221
        %vm3239 = vweird.f32 %v3232
        %vm3240 = vmor %vm3238, %vm3239
        %v3241 = vsel %vm3240, %v3232, %v3237
        %v3242 = vmul.f32 %v3206, %v3231
        %v3243 = vmul.f32 %v3207, %v3241
        %v3244 = vld [vmem:[%s16] sm:$0x3f]
        %v3245 = vmul.f32 %v3242, %v3244
        %v3246 = vmul.f32 %v3243, %v3244
        %v3247 = vld [vmem:[%s17] sm:$0x3f]
        %v3248 = vadd.f32 %v3245, %v3247
        %v3249 = vadd.f32 %v3246, %v3247
        %v3250 = vmul.f32 %v3248, %v3171
        %v3251 = vmul.f32 %v3249, %v3171
        %v3252 = vmul.f32 %v3250, %v3250
        %v3253 = vmul.f32 %v3251, %v3251
        %v3254 = vsel %vm3172, %v3252, 0.0
        %3255 = vadd.xlane.f32.xlu0 %v3254
        %v3256 = vpop.xlane.xlu0 %3255
        %v3257 = vsel %vm3172, %v3253, 0.0
        %3258 = vadd.xlane.f32.xlu0 %v3257
        %v3259 = vpop.xlane.xlu0 %3258
        %v3260 = vmax.f32 %v3256, 1e-24
        %v3261 = vmax.f32 %v3259, 1e-24
        %v3262 = vrsqrt.pop %v3260
        %v3263 = vmul.f32 %v3262, %v3260
        %v3264 = vmul.f32 %v3263, %v3262
        %v3265 = vmul.f32 0.5, %v3264
        %v3266 = vsub.f32 1.5, %v3265
        %v3267 = vmul.f32 %v3262, %v3266
        %vm3268 = vweird.f32 %v3260
        %vm3269 = vweird.f32 %v3262
        %vm3270 = vmor %vm3268, %vm3269
        %v3271 = vsel %vm3270, %v3262, %v3267
        %v3272 = vrsqrt.pop %v3261
        %v3273 = vmul.f32 %v3272, %v3261
        %v3274 = vmul.f32 %v3273, %v3272
        %v3275 = vmul.f32 0.5, %v3274
        %v3276 = vsub.f32 1.5, %v3275
        %v3277 = vmul.f32 %v3272, %v3276
        %vm3278 = vweird.f32 %v3261
        %vm3279 = vweird.f32 %v3272
        %vm3280 = vmor %vm3278, %vm3279
        %v3281 = vsel %vm3280, %v3272, %v3277
        %v3282 = vmul.f32 %v3250, %v3271
        %v3283 = vmul.f32 %v3251, %v3281
        %3284 = vst [vmem:[%s19] sm:$0x3f] %v3282
        %3285 = vst [vmem:[%s19 + $0x8] sm:$0x3f] %v3283
      $region104: #{_lambda_.1} parent=95 // pred_fallthru
        _
      // Predicated region
      $region105: #{_lambda_.1} parent=95 // pred_check
        %p3286 = pneg %p472
      $region106: #{_lambda_.1} parent=95 // pred_check_branch
        %3288 = sbr.rel (%p3286) target = $region108
      $region107: #{_lambda_.1} parent=95 // pred_region
        _
      $region108: #{_lambda_.1} parent=95 // pred_fallthru
        _
      // Predicated region
      $region109: #{_lambda_.1} parent=95 // pred_check
        %p3289 = pneg %p472
      $region110: #{_lambda_.1} parent=95 // pred_check_branch
        %3291 = sbr.rel (%p3289) target = $region112
      $region111: #{_lambda_.1} parent=95 // pred_region
        _
      $region112: #{_lambda_.1} parent=95 // pred_fallthru
        _
    $region96: #{_lambda_.1} parent=5 // pred_fallthru
      _
    %p3292 = scmp.le.s32.totalorder 2, %s25
    // Predicated region
    $region113: #{_lambda_.1} parent=5 // pred_check
      %p3293 = pneg %p3292
    $region114: #{_lambda_.1} parent=5 // pred_check_branch
      %3295 = sbr.rel (%p3293) target = $region116
    $region115: #{_lambda_.1} parent=5 // pred_region
      %s3296 = ssub.s32 %s25, 2
    $region116: #{_lambda_.1} parent=5 // pred_fallthru
      _
  $region6: #{_lambda_.1} parent=0 // loop_footer
    %s29 = sadd.s32 1, %s25
  $region7: #{_lambda_.1} parent=0 // loop_footer_branch
    %24 = sbr.rel target = $region3
  $region8: #{_lambda_.1} parent=0 // loop_exit
    _

</llo_original>
